<compile_context>
chip_gen: v7x
topology: tpu7x:2x2x1
jax: 0.10.0
libtpu: 0.0.40
codegen_flags: <defaults>
</compile_context>

<pallas_src>
import numpy as np
import jax
import jax.numpy as jnp
from jax import lax
from jax.experimental import pallas as pl
from jax.experimental.pallas import tpu as pltpu


def _elu(v):
    # ELU(alpha=1). jnp.where is a select: exp overflow in the untaken branch cannot leak
    # and TPUs do not trap, so no extra clamp is needed (perf review).
    return jnp.where(v > 0, v, jnp.exp(v) - 1.0)


# --------------------------- BatchNorm folding (wrapper-side glue) ---------------------------

def fold_bn(w, b, bn_w, bn_b, bn_m, bn_v, out_axis, eps=1e-5):
    scale = bn_w / jnp.sqrt(bn_v + eps)
    shape = [1] * w.ndim
    shape[out_axis] = -1
    return w * scale.reshape(shape), (b - bn_m) * scale + bn_b


def _folded(params, name, out_axis):
    p = params[name]
    return fold_bn(p['w'], p['b'], p['bn_w'], p['bn_b'], p['bn_m'], p['bn_v'], out_axis)


# ----------------------------------------- kernel -----------------------------------------

def _make_kernel(B_blk, Lh, HP, C, dils):
    C2 = 2 * C
    bf16, f32 = jnp.bfloat16, jnp.float32

    def bmm(a, w):
        # Per-sample 2-D MXU matmuls (bf16 x bf16 -> f32 accumulation), statically unrolled
        # over the batch block; the weight is shared so this is free reuse.
        # TODO(synk): for very small Lh, also stack the batch block into one (B_blk*Lh, K)
        #             matmul (needs 8-aligned per-batch row segments); at production
        #             length-tiles M = Lh is already large enough to feed the MXU.
        return jnp.stack([jnp.dot(a[b], w, preferred_element_type=f32)
                          for b in range(B_blk)], axis=0)

    def kernel(x_ref, gb_ref, wm_ref, w3_ref, w1_ref, b_ref, o_ref, halo_ref):
        # Zero the halo pads; the interior is fully overwritten before every dilated conv,
        # so the pads stay zero ('same' zero padding).
        zpad = jnp.zeros((B_blk, HP, C2), bf16)
        halo_ref[:, pl.ds(0, HP), :] = zpad
        halo_ref[:, pl.ds(HP + Lh, HP), :] = zpad

        gb = gb_ref[...]                            # (B_blk, 2, 2C) f32
        gam, bet = gb[:, 0:1, :], gb[:, 1:2, :]
        b_all = b_ref[...]                          # (7, 2C) f32

        def conv3(x, j, brow):
            # Dilated 3-tap conv, de-zeroed + tap-fused: one staging store into the halo,
            # then ONE (M, 3C) x (3C, C) matmul per output phase (no masked RMW stores).
            d = dils[j]
            e = (d - 1) // 2
            halo_ref[:, pl.ds(HP, Lh), :] = x.astype(bf16)      # single aligned store
            w = w3_ref[j]                                        # (3C, C) bf16, taps stacked

            def taps(offs, halves):
                parts = [halo_ref[:, pl.ds(HP + o, Lh), pl.ds(h * C, C)]
                         for o, h in zip(offs, halves)]
                return jnp.concatenate(parts, axis=-1)           # (B_blk, Lh, 3C) bf16

            lo = bmm(taps((-(e + 1), 0, e), (1, 0, 1)), w)       # even output steps
            hi = bmm(taps((-e, 0, e + 1), (0, 1, 0)), w)         # odd output steps
            return jnp.concatenate([lo, hi], axis=-1) + b_all[brow:brow + 1, :]

        def conv1(x, j, brow):
            # k=1 conv, de-zeroed: one (M, C) x (C, C) matmul per output phase.
            w = w1_ref[j]
            xb = x.astype(bf16)
            lo = bmm(xb[..., 0:C], w)
            hi = bmm(xb[..., C:C2], w)
            return jnp.concatenate([lo, hi], axis=-1) + b_all[brow:brow + 1, :]

        # main ConvTranspose1d(K=4, stride=2) as a polyphase 2-tap conv: both output
        # phases come from one fused K=2C matmul on [x_pad[m+1] | x_pad[m]].
        xm = jnp.concatenate([x_ref[:, pl.ds(1, Lh), :],
                              x_ref[:, pl.ds(0, Lh), :]], axis=-1)     # (B_blk, Lh, 2C) bf16
        pre = bmm(xm, wm_ref[...]) + b_all[0:1, :]
        o1 = gam * _elu(pre) + bet                                     # FiLM'd main path (f32)

        o2 = _elu(conv3(o1, 0, 1))
        o3 = _elu(conv1(o2, 0, 2))
        o4 = _elu(conv3(o3 + o1, 1, 3))
        o5 = _elu(conv1(o4, 1, 4))
        s = o1 + o3 + o5                             # computed once, reused for o6 and o8
        o6 = _elu(conv3(s, 2, 5))
        o7 = _elu(conv1(o6, 2, 6))
        o_ref[...] = (gam * (s + o7) + bet).astype(o_ref.dtype)

    return kernel


# ----------------------------------------- wrapper -----------------------------------------

def downsampling_layer(params, ipt, gamma, beta, stride=2, batch_block=None):
    """ipt: (B, C, L) NCL; gamma/beta: (B, C, 1); returns (B, C, (L+1)*stride)."""
    assert stride == 2, "packed-phase kernel is specialized to stride=2 (module default)"
    B, C, L = ipt.shape
    C2, C3 = 2 * C, 3 * C
    Lh = L + 1                  # packed output rows per batch; output length = 2 * Lh
    HP = 8                      # halo rows each side (>= max packed offset 5, sublane aligned)
    f32, bf16 = jnp.float32, jnp.bfloat16

    # Batch blocking: B_blk batches per grid step (shared weight DMA, amortized step overhead).
    B_blk = int(batch_block) if batch_block else min(B, 8)
    nb = (B + B_blk - 1) // B_blk
    Bp = nb * B_blk

    # --- fold eval-mode BatchNorm into the conv weights/biases (glue) ---
    wt, bt = _folded(params, 'main', 1)                          # ConvTranspose1d (Cin, Cout, 4)
    res = {n: _folded(params, n, 0)
           for n in ('res11', 'res12', 'res21', 'res22', 'res31', 'res32')}

    # main conv, polyphase + tap-fused: rows 0:C multiply x_pad[m+1], rows C:2C multiply
    # x_pad[m]; cols 0:C -> even output steps, cols C:2C -> odd output steps.
    w_main = jnp.concatenate(
        [jnp.concatenate([wt[:, :, 0], wt[:, :, 1]], axis=1),
         jnp.concatenate([wt[:, :, 2], wt[:, :, 3]], axis=1)], axis=0).astype(bf16)   # (2C, 2C)

    # dilated 3-tap convs: taps stacked along K -> (3C, C), shared by both output phases.
    w3 = jnp.stack([jnp.concatenate([res[n][0][:, :, k].T for k in range(3)], axis=0)
                    for n in ('res11', 'res21', 'res31')]).astype(bf16)                # (3, 3C, C)
    # k=1 convs: plain (C, C).
    w1 = jnp.stack([res[n][0][:, :, 0].T
                    for n in ('res12', 'res22', 'res32')]).astype(bf16)                # (3, C, C)

    dup = lambda v: jnp.concatenate([v, v])[None, :]             # duplicate across both phases
    biases = jnp.concatenate(
        [dup(bt)] + [dup(res[n][1]) for n in
                     ('res11', 'res12', 'res21', 'res22', 'res31', 'res32')],
        axis=0).astype(f32)                                      # (7, 2C)

    # inputs: channels-last, one zero row each side (polyphase uses x[-1] = x[L] = 0),
    # batch padded to a multiple of the batch block.
    x_lc = jnp.transpose(ipt, (0, 2, 1))                                  # (B, L, C)
    xp = jnp.pad(x_lc, ((0, Bp - B), (1, 1), (0, 0))).astype(bf16)        # (Bp, L+2, C)
    g2 = jnp.concatenate([gamma[:, :, 0], gamma[:, :, 0]], axis=1)        # (B, 2C)
    b2 = jnp.concatenate([beta[:, :, 0], beta[:, :, 0]], axis=1)
    gb = jnp.pad(jnp.stack([g2, b2], axis=1),
                 ((0, Bp - B), (0, 0), (0, 0))).astype(f32)               # (Bp, 2, 2C)

    # --- advisory cost estimate for the XLA scheduler ---
    flops = 2 * B * Lh * (C2 * C2 + 3 * 2 * C3 * C + 3 * 2 * C * C)
    transcendentals = 7 * B * Lh * C2
    bytes_accessed = (xp.size * 2 + gb.size * 4 + w_main.size * 2 + w3.size * 2 +
                      w1.size * 2 + biases.size * 4 + Bp * Lh * C2 * 4)
    cost = pl.CostEstimate(flops=flops, transcendentals=transcendentals,
                           bytes_accessed=bytes_accessed)

    # --- VMEM budget for this tile (review: set vmem_limit_bytes explicitly) ---
    blk_bytes = 2 * (B_blk * (L + 2) * C * 2 + B_blk * 2 * C2 * 4 + B_blk * Lh * C2 * 4)
    const_bytes = (w_main.size + w3.size + w1.size) * 2 + biases.size * 4
    scratch_bytes = B_blk * (2 * HP + Lh) * C2 * 2
    live_bytes = 6 * B_blk * Lh * C2 * 4            # o1/o3/o5(s)/current f32 intermediates
    vmem_est = blk_bytes + 2 * const_bytes + scratch_bytes + live_bytes
    vmem_limit = int(min(96 * 2 ** 20, max(32 * 2 ** 20, 4 * vmem_est)))

    def batch_spec(r, c):
        return pl.BlockSpec((B_blk, r, c), lambda i: (i, 0, 0))

    def const_spec(shape):
        # constant-index-map operands: request single buffering (no double-buffer VMEM).
        idx = lambda i, _n=len(shape): (0,) * _n
        try:
            return pl.BlockSpec(shape, idx, pipeline_mode=pl.Buffered(1))
        except (TypeError, AttributeError):          # API without pipeline_mode
            return pl.BlockSpec(shape, idx)

    out_packed = pl.pallas_call(
        _make_kernel(B_blk, Lh, HP, C, (1, 3, 9)),
        out_shape=jax.ShapeDtypeStruct((Bp, Lh, C2), f32),
        grid=(nb,),
        in_specs=[
            batch_spec(L + 2, C),        # padded input (bf16)
            batch_spec(2, C2),           # FiLM gamma/beta (f32)
            const_spec((C2, C2)),        # main conv weight
            const_spec((3, C3, C)),      # dilated 3-tap weights (tap-stacked)
            const_spec((3, C, C)),       # k=1 weights
            const_spec((7, C2)),         # biases
        ],
        out_specs=batch_spec(Lh, C2),
        scratch_shapes=[pltpu.VMEM((B_blk, 2 * HP + Lh, C2), bf16)],    # zero-padded halo
        compiler_params=pltpu.CompilerParams(
            dimension_semantics=("parallel",),
            vmem_limit_bytes=vmem_limit),
        cost_estimate=cost,
    )(xp, gb, w_main, w3, w1, biases)

    # De-interleave the two phases (free reshape) and return the module's NCL layout.
    # TODO(synk): at production L keep the model channels-last (or fold this transpose into
    #             the kernel store) to avoid the extra HBM round trip; at small C also pack
    #             the batch block along output lanes and/or emit bf16 for a lane-dense store.
    out = out_packed[:B].reshape(B, 2 * Lh, C)
    return jnp.transpose(out, (0, 2, 1))


# ------------------------------------ pure-JAX reference ------------------------------------

def reference(params, ipt, gamma, beta, stride=2):
    """Pure-JAX (XLA conv, f32 HIGHEST) reference with identical folded params."""
    B, C, L = ipt.shape
    K0 = 2 * stride
    dn = lax.conv_dimension_numbers(ipt.shape, (C, C, 3), ('NCH', 'OIH', 'NCH'))

    wt, bt = _folded(params, 'main', 1)
    wt_oih = jnp.transpose(jnp.flip(wt, 2), (1, 0, 2))
    o1 = lax.conv_general_dilated(ipt, wt_oih, (1,), [(K0 - 1, K0 - 1)],
                                  lhs_dilation=(stride,), rhs_dilation=(1,),
                                  dimension_numbers=dn, precision=lax.Precision.HIGHEST)
    o1 = gamma * _elu(o1 + bt[None, :, None]) + beta

    def block(name, x, dil, k):
        w, b = _folded(params, name, 0)
        pad = dil * (k - 1) // 2
        y = lax.conv_general_dilated(x, w, (1,), [(pad, pad)], rhs_dilation=(dil,),
                                     dimension_numbers=dn, precision=lax.Precision.HIGHEST)
        return _elu(y + b[None, :, None])

    o2 = block('res11', o1, 1, 3)
    o3 = block('res12', o2, 1, 1)
    o4 = block('res21', o3 + o1, 3, 3)
    o5 = block('res22', o4, 1, 1)
    o6 = block('res31', o1 + o3 + o5, 9, 3)
    o7 = block('res32', o6, 1, 1)
    o8 = o1 + o3 + o5 + o7
    return gamma * o8 + beta


def init_params(key, C, stride):
    K0 = 2 * stride
    shapes = {'main': (C, C, K0),
              'res11': (C, C, 3), 'res12': (C, C, 1),
              'res21': (C, C, 3), 'res22': (C, C, 1),
              'res31': (C, C, 3), 'res32': (C, C, 1)}
    params = {}
    for i, (name, shp) in enumerate(shapes.items()):
        ks = jax.random.split(jax.random.fold_in(key, i), 6)
        params[name] = {
            'w': 0.2 * jax.random.normal(ks[0], shp, jnp.float32),
            'b': 0.1 * jax.random.normal(ks[1], (C,), jnp.float32),
            'bn_w': 1.0 + 0.1 * jax.random.normal(ks[2], (C,), jnp.float32),
            'bn_b': 0.1 * jax.random.normal(ks[3], (C,), jnp.float32),
            'bn_m': 0.05 * jax.random.normal(ks[4], (C,), jnp.float32),
            'bn_v': 1.0 + 0.1 * jax.random.uniform(ks[5], (C,), jnp.float32),
        }
    return params


if __name__ == "__main__":
    key = jax.random.PRNGKey(0)
    B, C, L, stride = 2, 8, 16, 2
    kx, kg, kb, kp = jax.random.split(key, 4)

    ipt = jax.random.normal(kx, (B, C, L), jnp.float32)
    gamma = 1.0 + 0.1 * jax.random.normal(kg, (B, C, 1), jnp.float32)
    beta = 0.1 * jax.random.normal(kb, (B, C, 1), jnp.float32)
    params = init_params(kp, C, stride)

    run = jax.jit(lambda p, x, g, b: downsampling_layer(p, x, g, b, stride=stride))
    out = jax.block_until_ready(run(params, ipt, gamma, beta))

    ref = jax.block_until_ready(reference(params, ipt, gamma, beta, stride=stride))
    assert out.shape == (B, C, (L + 1) * stride), out.shape
    # bf16 matmul inputs (per perf review) vs f32 HIGHEST reference: tolerance reflects
    # bf16 rounding propagated through the 7-conv chain; indexing bugs would be O(1) off.
    np.testing.assert_allclose(np.asarray(out), np.asarray(ref), rtol=5e-2, atol=5e-2)
    print("KERNEL_OK")
</pallas_src>

<mosaic_0001>
module attributes {stable_mosaic.version = 11 : i64} {
  func.func @kernel(%arg0: i32, %arg1: memref<2x18x8xbf16, #tpu.memory_space<vmem>>, %arg2: memref<2x2x16xf32, #tpu.memory_space<vmem>>, %arg3: memref<16x16xbf16, #tpu.memory_space<vmem>>, %arg4: memref<3x24x8xbf16, #tpu.memory_space<vmem>>, %arg5: memref<3x8x8xbf16, #tpu.memory_space<vmem>>, %arg6: memref<7x16xf32, #tpu.memory_space<vmem>>, %arg7: memref<2x17x16xf32, #tpu.memory_space<vmem>>, %arg8: memref<2x33x16xbf16, #tpu.memory_space<vmem>>) attributes {dimension_semantics = [#tpu.dimension_semantics<parallel>], iteration_bounds = array<i64: 1>, scalar_prefetch = 0 : i64, scratch_operands = 1 : i64, tpu.core_type = #tpu.core_type<tc>, window_params = [{transform_indices = @transform_0, window_bounds = array<i64: 2, 18, 8>}, {transform_indices = @transform_1, window_bounds = array<i64: 2, 2, 16>}, {pipeline_mode = #tpu.pipeline_mode<synchronous>, transform_indices = @transform_2, window_bounds = array<i64: 16, 16>}, {pipeline_mode = #tpu.pipeline_mode<synchronous>, transform_indices = @transform_3, window_bounds = array<i64: 3, 24, 8>}, {pipeline_mode = #tpu.pipeline_mode<synchronous>, transform_indices = @transform_4, window_bounds = array<i64: 3, 8, 8>}, {pipeline_mode = #tpu.pipeline_mode<synchronous>, transform_indices = @transform_5, window_bounds = array<i64: 7, 16>}, {transform_indices = @transform_6, window_bounds = array<i64: 2, 17, 16>}]} {
    %cst = arith.constant 0.000000e+00 : bf16
    %0 = vector.broadcast %cst : bf16 to vector<2x8x16xbf16>
    %c0 = arith.constant 0 : index
    %c0_0 = arith.constant 0 : index
    %c0_1 = arith.constant 0 : index
    %1 = vector.load %arg8[%c0, %c0_0, %c0_1] : memref<2x33x16xbf16, #tpu.memory_space<vmem>>, vector<2x8x16xbf16>
    tpu.vector_store %arg8[%c0, %c0_0, %c0_1], %0 {strides = array<i32>} : memref<2x33x16xbf16, #tpu.memory_space<vmem>>, vector<2x8x16xbf16>,
    %c0_2 = arith.constant 0 : index
    %c25 = arith.constant 25 : index
    %c0_3 = arith.constant 0 : index
    %2 = vector.load %arg8[%c0_2, %c25, %c0_3] : memref<2x33x16xbf16, #tpu.memory_space<vmem>>, vector<2x8x16xbf16>
    tpu.vector_store %arg8[%c0_2, %c25, %c0_3], %0 {strides = array<i32>} : memref<2x33x16xbf16, #tpu.memory_space<vmem>>, vector<2x8x16xbf16>,
    %c0_4 = arith.constant 0 : index
    %c0_5 = arith.constant 0 : index
    %c0_6 = arith.constant 0 : index
    %3 = vector.load %arg2[%c0_4, %c0_5, %c0_6] : memref<2x2x16xf32, #tpu.memory_space<vmem>>, vector<2x2x16xf32>
    %4 = vector.extract_strided_slice %3 {offsets = [0, 0, 0], sizes = [2, 1, 16], strides = [1, 1, 1]} : vector<2x2x16xf32> to vector<2x1x16xf32>
    %5 = vector.extract_strided_slice %3 {offsets = [0, 1, 0], sizes = [2, 1, 16], strides = [1, 1, 1]} : vector<2x2x16xf32> to vector<2x1x16xf32>
    %c0_7 = arith.constant 0 : index
    %c0_8 = arith.constant 0 : index
    %6 = vector.load %arg6[%c0_7, %c0_8] : memref<7x16xf32, #tpu.memory_space<vmem>>, vector<7x16xf32>
    %c0_9 = arith.constant 0 : index
    %c1 = arith.constant 1 : index
    %c0_10 = arith.constant 0 : index
    %7 = vector.load %arg1[%c0_9, %c1, %c0_10] : memref<2x18x8xbf16, #tpu.memory_space<vmem>>, vector<2x17x8xbf16>
    %c0_11 = arith.constant 0 : index
    %c0_12 = arith.constant 0 : index
    %c0_13 = arith.constant 0 : index
    %8 = vector.load %arg1[%c0_11, %c0_12, %c0_13] : memref<2x18x8xbf16, #tpu.memory_space<vmem>>, vector<2x17x8xbf16>
    %9 = tpu.concatenate %7, %8 in 2 : vector<2x17x8xbf16>, vector<2x17x8xbf16> -> vector<2x17x16xbf16>
    %c0_14 = arith.constant 0 : index
    %c0_15 = arith.constant 0 : index
    %10 = vector.load %arg3[%c0_14, %c0_15] : memref<16x16xbf16, #tpu.memory_space<vmem>>, vector<16x16xbf16>
    %11 = vector.extract_strided_slice %9 {offsets = [0, 0, 0], sizes = [1, 17, 16], strides = [1, 1, 1]} : vector<2x17x16xbf16> to vector<1x17x16xbf16>
    %12 = vector.shape_cast %11 : vector<1x17x16xbf16> to vector<17x16xbf16>
    %cst_16 = arith.constant dense<0.000000e+00> : vector<17x16xf32>
    %13 = tpu.matmul %12, %10, %cst_16 {dimension_numbers = #tpu.dot_dimension_numbers<[1], [0], [0], [1], [0, 0, 1, 1], [], []>} : vector<17x16xbf16>, vector<16x16xbf16>, vector<17x16xf32> -> vector<17x16xf32>
    %14 = vector.extract_strided_slice %9 {offsets = [1, 0, 0], sizes = [1, 17, 16], strides = [1, 1, 1]} : vector<2x17x16xbf16> to vector<1x17x16xbf16>
    %15 = vector.shape_cast %14 : vector<1x17x16xbf16> to vector<17x16xbf16>
    %cst_17 = arith.constant dense<0.000000e+00> : vector<17x16xf32>
    %16 = tpu.matmul %15, %10, %cst_17 {dimension_numbers = #tpu.dot_dimension_numbers<[1], [0], [0], [1], [0, 0, 1, 1], [], []>} : vector<17x16xbf16>, vector<16x16xbf16>, vector<17x16xf32> -> vector<17x16xf32>
    %17 = vector.shape_cast %13 : vector<17x16xf32> to vector<1x17x16xf32>
    %18 = vector.shape_cast %16 : vector<17x16xf32> to vector<1x17x16xf32>
    %19 = tpu.concatenate %17, %18 in 0 : vector<1x17x16xf32>, vector<1x17x16xf32> -> vector<2x17x16xf32>
    %20 = vector.extract_strided_slice %6 {offsets = [0, 0], sizes = [1, 16], strides = [1, 1]} : vector<7x16xf32> to vector<1x16xf32>
    %21 = vector.shape_cast %20 : vector<1x16xf32> to vector<1x1x16xf32>
    %22 = vector.broadcast %21 : vector<1x1x16xf32> to vector<2x17x16xf32>
    %23 = arith.addf %19, %22 : vector<2x17x16xf32>
    %cst_18 = arith.constant 0.000000e+00 : f32
    %24 = vector.broadcast %cst_18 : f32 to vector<2x17x16xf32>
    %25 = arith.cmpf ogt, %23, %24 : vector<2x17x16xf32>
    %26 = math.exp %23 : vector<2x17x16xf32>
    %cst_19 = arith.constant 1.000000e+00 : f32
    %27 = vector.broadcast %cst_19 : f32 to vector<2x17x16xf32>
    %28 = arith.subf %26, %27 : vector<2x17x16xf32>
    %29 = arith.select %25, %23, %28 : vector<2x17x16xi1>, vector<2x17x16xf32>
    %30 = vector.broadcast %4 : vector<2x1x16xf32> to vector<2x17x16xf32>
    %31 = arith.mulf %30, %29 : vector<2x17x16xf32>
    %32 = vector.broadcast %5 : vector<2x1x16xf32> to vector<2x17x16xf32>
    %33 = arith.addf %31, %32 : vector<2x17x16xf32>
    %34 = arith.truncf %33 : vector<2x17x16xf32> to vector<2x17x16xbf16>
    %c0_20 = arith.constant 0 : index
    %c8 = arith.constant 8 : index
    %c0_21 = arith.constant 0 : index
    %35 = vector.load %arg8[%c0_20, %c8, %c0_21] : memref<2x33x16xbf16, #tpu.memory_space<vmem>>, vector<2x17x16xbf16>
    tpu.vector_store %arg8[%c0_20, %c8, %c0_21], %34 {strides = array<i32>} : memref<2x33x16xbf16, #tpu.memory_space<vmem>>, vector<2x17x16xbf16>,
    %c0_22 = arith.constant 0 : index
    %c0_23 = arith.constant 0 : index
    %c0_24 = arith.constant 0 : index
    %36 = vector.load %arg4[%c0_22, %c0_23, %c0_24] : memref<3x24x8xbf16, #tpu.memory_space<vmem>>, vector<1x24x8xbf16>
    %37 = vector.shape_cast %36 : vector<1x24x8xbf16> to vector<24x8xbf16>
    %c0_25 = arith.constant 0 : index
    %c7 = arith.constant 7 : index
    %c8_26 = arith.constant 8 : index
    %38 = vector.load %arg8[%c0_25, %c7, %c8_26] : memref<2x33x16xbf16, #tpu.memory_space<vmem>>, vector<2x17x8xbf16>
    %c0_27 = arith.constant 0 : index
    %c8_28 = arith.constant 8 : index
    %c0_29 = arith.constant 0 : index
    %39 = vector.load %arg8[%c0_27, %c8_28, %c0_29] : memref<2x33x16xbf16, #tpu.memory_space<vmem>>, vector<2x17x8xbf16>
    %c0_30 = arith.constant 0 : index
    %c8_31 = arith.constant 8 : index
    %c8_32 = arith.constant 8 : index
    %40 = vector.load %arg8[%c0_30, %c8_31, %c8_32] : memref<2x33x16xbf16, #tpu.memory_space<vmem>>, vector<2x17x8xbf16>
    %41 = tpu.concatenate %38, %39, %40 in 2 : vector<2x17x8xbf16>, vector<2x17x8xbf16>, vector<2x17x8xbf16> -> vector<2x17x24xbf16>
    %42 = vector.extract_strided_slice %41 {offsets = [0, 0, 0], sizes = [1, 17, 24], strides = [1, 1, 1]} : vector<2x17x24xbf16> to vector<1x17x24xbf16>
    %43 = vector.shape_cast %42 : vector<1x17x24xbf16> to vector<17x24xbf16>
    %cst_33 = arith.constant dense<0.000000e+00> : vector<17x8xf32>
    %44 = tpu.matmul %43, %37, %cst_33 {dimension_numbers = #tpu.dot_dimension_numbers<[1], [0], [0], [1], [0, 0, 1, 1], [], []>} : vector<17x24xbf16>, vector<24x8xbf16>, vector<17x8xf32> -> vector<17x8xf32>
    %45 = vector.extract_strided_slice %41 {offsets = [1, 0, 0], sizes = [1, 17, 24], strides = [1, 1, 1]} : vector<2x17x24xbf16> to vector<1x17x24xbf16>
    %46 = vector.shape_cast %45 : vector<1x17x24xbf16> to vector<17x24xbf16>
    %cst_34 = arith.constant dense<0.000000e+00> : vector<17x8xf32>
    %47 = tpu.matmul %46, %37, %cst_34 {dimension_numbers = #tpu.dot_dimension_numbers<[1], [0], [0], [1], [0, 0, 1, 1], [], []>} : vector<17x24xbf16>, vector<24x8xbf16>, vector<17x8xf32> -> vector<17x8xf32>
    %48 = vector.shape_cast %44 : vector<17x8xf32> to vector<1x17x8xf32>
    %49 = vector.shape_cast %47 : vector<17x8xf32> to vector<1x17x8xf32>
    %50 = tpu.concatenate %48, %49 in 0 : vector<1x17x8xf32>, vector<1x17x8xf32> -> vector<2x17x8xf32>
    %c0_35 = arith.constant 0 : index
    %c8_36 = arith.constant 8 : index
    %c0_37 = arith.constant 0 : index
    %51 = vector.load %arg8[%c0_35, %c8_36, %c0_37] : memref<2x33x16xbf16, #tpu.memory_space<vmem>>, vector<2x17x8xbf16>
    %c0_38 = arith.constant 0 : index
    %c8_39 = arith.constant 8 : index
    %c8_40 = arith.constant 8 : index
    %52 = vector.load %arg8[%c0_38, %c8_39, %c8_40] : memref<2x33x16xbf16, #tpu.memory_space<vmem>>, vector<2x17x8xbf16>
    %c0_41 = arith.constant 0 : index
    %c9 = arith.constant 9 : index
    %c0_42 = arith.constant 0 : index
    %53 = vector.load %arg8[%c0_41, %c9, %c0_42] : memref<2x33x16xbf16, #tpu.memory_space<vmem>>, vector<2x17x8xbf16>
    %54 = tpu.concatenate %51, %52, %53 in 2 : vector<2x17x8xbf16>, vector<2x17x8xbf16>, vector<2x17x8xbf16> -> vector<2x17x24xbf16>
    %55 = vector.extract_strided_slice %54 {offsets = [0, 0, 0], sizes = [1, 17, 24], strides = [1, 1, 1]} : vector<2x17x24xbf16> to vector<1x17x24xbf16>
    %56 = vector.shape_cast %55 : vector<1x17x24xbf16> to vector<17x24xbf16>
    %cst_43 = arith.constant dense<0.000000e+00> : vector<17x8xf32>
    %57 = tpu.matmul %56, %37, %cst_43 {dimension_numbers = #tpu.dot_dimension_numbers<[1], [0], [0], [1], [0, 0, 1, 1], [], []>} : vector<17x24xbf16>, vector<24x8xbf16>, vector<17x8xf32> -> vector<17x8xf32>
    %58 = vector.extract_strided_slice %54 {offsets = [1, 0, 0], sizes = [1, 17, 24], strides = [1, 1, 1]} : vector<2x17x24xbf16> to vector<1x17x24xbf16>
    %59 = vector.shape_cast %58 : vector<1x17x24xbf16> to vector<17x24xbf16>
    %cst_44 = arith.constant dense<0.000000e+00> : vector<17x8xf32>
    %60 = tpu.matmul %59, %37, %cst_44 {dimension_numbers = #tpu.dot_dimension_numbers<[1], [0], [0], [1], [0, 0, 1, 1], [], []>} : vector<17x24xbf16>, vector<24x8xbf16>, vector<17x8xf32> -> vector<17x8xf32>
    %61 = vector.shape_cast %57 : vector<17x8xf32> to vector<1x17x8xf32>
    %62 = vector.shape_cast %60 : vector<17x8xf32> to vector<1x17x8xf32>
    %63 = tpu.concatenate %61, %62 in 0 : vector<1x17x8xf32>, vector<1x17x8xf32> -> vector<2x17x8xf32>
    %64 = tpu.concatenate %50, %63 in 2 : vector<2x17x8xf32>, vector<2x17x8xf32> -> vector<2x17x16xf32>
    %65 = vector.extract_strided_slice %6 {offsets = [1, 0], sizes = [1, 16], strides = [1, 1]} : vector<7x16xf32> to vector<1x16xf32>
    %66 = vector.shape_cast %65 : vector<1x16xf32> to vector<1x1x16xf32>
    %67 = vector.broadcast %66 : vector<1x1x16xf32> to vector<2x17x16xf32>
    %68 = arith.addf %64, %67 : vector<2x17x16xf32>
    %cst_45 = arith.constant 0.000000e+00 : f32
    %69 = vector.broadcast %cst_45 : f32 to vector<2x17x16xf32>
    %70 = arith.cmpf ogt, %68, %69 : vector<2x17x16xf32>
    %71 = math.exp %68 : vector<2x17x16xf32>
    %cst_46 = arith.constant 1.000000e+00 : f32
    %72 = vector.broadcast %cst_46 : f32 to vector<2x17x16xf32>
    %73 = arith.subf %71, %72 : vector<2x17x16xf32>
    %74 = arith.select %70, %68, %73 : vector<2x17x16xi1>, vector<2x17x16xf32>
    %c0_47 = arith.constant 0 : index
    %c0_48 = arith.constant 0 : index
    %c0_49 = arith.constant 0 : index
    %75 = vector.load %arg5[%c0_47, %c0_48, %c0_49] : memref<3x8x8xbf16, #tpu.memory_space<vmem>>, vector<1x8x8xbf16>
    %76 = vector.shape_cast %75 : vector<1x8x8xbf16> to vector<8x8xbf16>
    %77 = arith.truncf %74 : vector<2x17x16xf32> to vector<2x17x16xbf16>
    %78 = vector.extract_strided_slice %77 {offsets = [0, 0, 0], sizes = [2, 17, 8], strides = [1, 1, 1]} : vector<2x17x16xbf16> to vector<2x17x8xbf16>
    %79 = vector.extract_strided_slice %78 {offsets = [0, 0, 0], sizes = [1, 17, 8], strides = [1, 1, 1]} : vector<2x17x8xbf16> to vector<1x17x8xbf16>
    %80 = vector.shape_cast %79 : vector<1x17x8xbf16> to vector<17x8xbf16>
    %cst_50 = arith.constant dense<0.000000e+00> : vector<17x8xf32>
    %81 = tpu.matmul %80, %76, %cst_50 {dimension_numbers = #tpu.dot_dimension_numbers<[1], [0], [0], [1], [0, 0, 1, 1], [], []>} : vector<17x8xbf16>, vector<8x8xbf16>, vector<17x8xf32> -> vector<17x8xf32>
    %82 = vector.extract_strided_slice %78 {offsets = [1, 0, 0], sizes = [1, 17, 8], strides = [1, 1, 1]} : vector<2x17x8xbf16> to vector<1x17x8xbf16>
    %83 = vector.shape_cast %82 : vector<1x17x8xbf16> to vector<17x8xbf16>
    %cst_51 = arith.constant dense<0.000000e+00> : vector<17x8xf32>
    %84 = tpu.matmul %83, %76, %cst_51 {dimension_numbers = #tpu.dot_dimension_numbers<[1], [0], [0], [1], [0, 0, 1, 1], [], []>} : vector<17x8xbf16>, vector<8x8xbf16>, vector<17x8xf32> -> vector<17x8xf32>
    %85 = vector.shape_cast %81 : vector<17x8xf32> to vector<1x17x8xf32>
    %86 = vector.shape_cast %84 : vector<17x8xf32> to vector<1x17x8xf32>
    %87 = tpu.concatenate %85, %86 in 0 : vector<1x17x8xf32>, vector<1x17x8xf32> -> vector<2x17x8xf32>
    %88 = vector.extract_strided_slice %77 {offsets = [0, 0, 8], sizes = [2, 17, 8], strides = [1, 1, 1]} : vector<2x17x16xbf16> to vector<2x17x8xbf16>
    %89 = vector.extract_strided_slice %88 {offsets = [0, 0, 0], sizes = [1, 17, 8], strides = [1, 1, 1]} : vector<2x17x8xbf16> to vector<1x17x8xbf16>
    %90 = vector.shape_cast %89 : vector<1x17x8xbf16> to vector<17x8xbf16>
    %cst_52 = arith.constant dense<0.000000e+00> : vector<17x8xf32>
    %91 = tpu.matmul %90, %76, %cst_52 {dimension_numbers = #tpu.dot_dimension_numbers<[1], [0], [0], [1], [0, 0, 1, 1], [], []>} : vector<17x8xbf16>, vector<8x8xbf16>, vector<17x8xf32> -> vector<17x8xf32>
    %92 = vector.extract_strided_slice %88 {offsets = [1, 0, 0], sizes = [1, 17, 8], strides = [1, 1, 1]} : vector<2x17x8xbf16> to vector<1x17x8xbf16>
    %93 = vector.shape_cast %92 : vector<1x17x8xbf16> to vector<17x8xbf16>
    %cst_53 = arith.constant dense<0.000000e+00> : vector<17x8xf32>
    %94 = tpu.matmul %93, %76, %cst_53 {dimension_numbers = #tpu.dot_dimension_numbers<[1], [0], [0], [1], [0, 0, 1, 1], [], []>} : vector<17x8xbf16>, vector<8x8xbf16>, vector<17x8xf32> -> vector<17x8xf32>
    %95 = vector.shape_cast %91 : vector<17x8xf32> to vector<1x17x8xf32>
    %96 = vector.shape_cast %94 : vector<17x8xf32> to vector<1x17x8xf32>
    %97 = tpu.concatenate %95, %96 in 0 : vector<1x17x8xf32>, vector<1x17x8xf32> -> vector<2x17x8xf32>
    %98 = tpu.concatenate %87, %97 in 2 : vector<2x17x8xf32>, vector<2x17x8xf32> -> vector<2x17x16xf32>
    %99 = vector.extract_strided_slice %6 {offsets = [2, 0], sizes = [1, 16], strides = [1, 1]} : vector<7x16xf32> to vector<1x16xf32>
    %100 = vector.shape_cast %99 : vector<1x16xf32> to vector<1x1x16xf32>
    %101 = vector.broadcast %100 : vector<1x1x16xf32> to vector<2x17x16xf32>
    %102 = arith.addf %98, %101 : vector<2x17x16xf32>
    %cst_54 = arith.constant 0.000000e+00 : f32
    %103 = vector.broadcast %cst_54 : f32 to vector<2x17x16xf32>
    %104 = arith.cmpf ogt, %102, %103 : vector<2x17x16xf32>
    %105 = math.exp %102 : vector<2x17x16xf32>
    %cst_55 = arith.constant 1.000000e+00 : f32
    %106 = vector.broadcast %cst_55 : f32 to vector<2x17x16xf32>
    %107 = arith.subf %105, %106 : vector<2x17x16xf32>
    %108 = arith.select %104, %102, %107 : vector<2x17x16xi1>, vector<2x17x16xf32>
    %109 = arith.addf %108, %33 : vector<2x17x16xf32>
    %110 = arith.truncf %109 : vector<2x17x16xf32> to vector<2x17x16xbf16>
    %c0_56 = arith.constant 0 : index
    %c8_57 = arith.constant 8 : index
    %c0_58 = arith.constant 0 : index
    %111 = vector.load %arg8[%c0_56, %c8_57, %c0_58] : memref<2x33x16xbf16, #tpu.memory_space<vmem>>, vector<2x17x16xbf16>
    tpu.vector_store %arg8[%c0_56, %c8_57, %c0_58], %110 {strides = array<i32>} : memref<2x33x16xbf16, #tpu.memory_space<vmem>>, vector<2x17x16xbf16>,
    %c1_59 = arith.constant 1 : index
    %c0_60 = arith.constant 0 : index
    %c0_61 = arith.constant 0 : index
    %112 = vector.load %arg4[%c1_59, %c0_60, %c0_61] : memref<3x24x8xbf16, #tpu.memory_space<vmem>>, vector<1x24x8xbf16>
    %113 = vector.shape_cast %112 : vector<1x24x8xbf16> to vector<24x8xbf16>
    %c0_62 = arith.constant 0 : index
    %c6 = arith.constant 6 : index
    %c8_63 = arith.constant 8 : index
    %114 = vector.load %arg8[%c0_62, %c6, %c8_63] : memref<2x33x16xbf16, #tpu.memory_space<vmem>>, vector<2x17x8xbf16>
    %c0_64 = arith.constant 0 : index
    %c8_65 = arith.constant 8 : index
    %c0_66 = arith.constant 0 : index
    %115 = vector.load %arg8[%c0_64, %c8_65, %c0_66] : memref<2x33x16xbf16, #tpu.memory_space<vmem>>, vector<2x17x8xbf16>
    %c0_67 = arith.constant 0 : index
    %c9_68 = arith.constant 9 : index
    %c8_69 = arith.constant 8 : index
    %116 = vector.load %arg8[%c0_67, %c9_68, %c8_69] : memref<2x33x16xbf16, #tpu.memory_space<vmem>>, vector<2x17x8xbf16>
    %117 = tpu.concatenate %114, %115, %116 in 2 : vector<2x17x8xbf16>, vector<2x17x8xbf16>, vector<2x17x8xbf16> -> vector<2x17x24xbf16>
    %118 = vector.extract_strided_slice %117 {offsets = [0, 0, 0], sizes = [1, 17, 24], strides = [1, 1, 1]} : vector<2x17x24xbf16> to vector<1x17x24xbf16>
    %119 = vector.shape_cast %118 : vector<1x17x24xbf16> to vector<17x24xbf16>
    %cst_70 = arith.constant dense<0.000000e+00> : vector<17x8xf32>
    %120 = tpu.matmul %119, %113, %cst_70 {dimension_numbers = #tpu.dot_dimension_numbers<[1], [0], [0], [1], [0, 0, 1, 1], [], []>} : vector<17x24xbf16>, vector<24x8xbf16>, vector<17x8xf32> -> vector<17x8xf32>
    %121 = vector.extract_strided_slice %117 {offsets = [1, 0, 0], sizes = [1, 17, 24], strides = [1, 1, 1]} : vector<2x17x24xbf16> to vector<1x17x24xbf16>
    %122 = vector.shape_cast %121 : vector<1x17x24xbf16> to vector<17x24xbf16>
    %cst_71 = arith.constant dense<0.000000e+00> : vector<17x8xf32>
    %123 = tpu.matmul %122, %113, %cst_71 {dimension_numbers = #tpu.dot_dimension_numbers<[1], [0], [0], [1], [0, 0, 1, 1], [], []>} : vector<17x24xbf16>, vector<24x8xbf16>, vector<17x8xf32> -> vector<17x8xf32>
    %124 = vector.shape_cast %120 : vector<17x8xf32> to vector<1x17x8xf32>
    %125 = vector.shape_cast %123 : vector<17x8xf32> to vector<1x17x8xf32>
    %126 = tpu.concatenate %124, %125 in 0 : vector<1x17x8xf32>, vector<1x17x8xf32> -> vector<2x17x8xf32>
    %c0_72 = arith.constant 0 : index
    %c7_73 = arith.constant 7 : index
    %c0_74 = arith.constant 0 : index
    %127 = vector.load %arg8[%c0_72, %c7_73, %c0_74] : memref<2x33x16xbf16, #tpu.memory_space<vmem>>, vector<2x17x8xbf16>
    %c0_75 = arith.constant 0 : index
    %c8_76 = arith.constant 8 : index
    %c8_77 = arith.constant 8 : index
    %128 = vector.load %arg8[%c0_75, %c8_76, %c8_77] : memref<2x33x16xbf16, #tpu.memory_space<vmem>>, vector<2x17x8xbf16>
    %c0_78 = arith.constant 0 : index
    %c10 = arith.constant 10 : index
    %c0_79 = arith.constant 0 : index
    %129 = vector.load %arg8[%c0_78, %c10, %c0_79] : memref<2x33x16xbf16, #tpu.memory_space<vmem>>, vector<2x17x8xbf16>
    %130 = tpu.concatenate %127, %128, %129 in 2 : vector<2x17x8xbf16>, vector<2x17x8xbf16>, vector<2x17x8xbf16> -> vector<2x17x24xbf16>
    %131 = vector.extract_strided_slice %130 {offsets = [0, 0, 0], sizes = [1, 17, 24], strides = [1, 1, 1]} : vector<2x17x24xbf16> to vector<1x17x24xbf16>
    %132 = vector.shape_cast %131 : vector<1x17x24xbf16> to vector<17x24xbf16>
    %cst_80 = arith.constant dense<0.000000e+00> : vector<17x8xf32>
    %133 = tpu.matmul %132, %113, %cst_80 {dimension_numbers = #tpu.dot_dimension_numbers<[1], [0], [0], [1], [0, 0, 1, 1], [], []>} : vector<17x24xbf16>, vector<24x8xbf16>, vector<17x8xf32> -> vector<17x8xf32>
    %134 = vector.extract_strided_slice %130 {offsets = [1, 0, 0], sizes = [1, 17, 24], strides = [1, 1, 1]} : vector<2x17x24xbf16> to vector<1x17x24xbf16>
    %135 = vector.shape_cast %134 : vector<1x17x24xbf16> to vector<17x24xbf16>
    %cst_81 = arith.constant dense<0.000000e+00> : vector<17x8xf32>
    %136 = tpu.matmul %135, %113, %cst_81 {dimension_numbers = #tpu.dot_dimension_numbers<[1], [0], [0], [1], [0, 0, 1, 1], [], []>} : vector<17x24xbf16>, vector<24x8xbf16>, vector<17x8xf32> -> vector<17x8xf32>
    %137 = vector.shape_cast %133 : vector<17x8xf32> to vector<1x17x8xf32>
    %138 = vector.shape_cast %136 : vector<17x8xf32> to vector<1x17x8xf32>
    %139 = tpu.concatenate %137, %138 in 0 : vector<1x17x8xf32>, vector<1x17x8xf32> -> vector<2x17x8xf32>
    %140 = tpu.concatenate %126, %139 in 2 : vector<2x17x8xf32>, vector<2x17x8xf32> -> vector<2x17x16xf32>
    %141 = vector.extract_strided_slice %6 {offsets = [3, 0], sizes = [1, 16], strides = [1, 1]} : vector<7x16xf32> to vector<1x16xf32>
    %142 = vector.shape_cast %141 : vector<1x16xf32> to vector<1x1x16xf32>
    %143 = vector.broadcast %142 : vector<1x1x16xf32> to vector<2x17x16xf32>
    %144 = arith.addf %140, %143 : vector<2x17x16xf32>
    %cst_82 = arith.constant 0.000000e+00 : f32
    %145 = vector.broadcast %cst_82 : f32 to vector<2x17x16xf32>
    %146 = arith.cmpf ogt, %144, %145 : vector<2x17x16xf32>
    %147 = math.exp %144 : vector<2x17x16xf32>
    %cst_83 = arith.constant 1.000000e+00 : f32
    %148 = vector.broadcast %cst_83 : f32 to vector<2x17x16xf32>
    %149 = arith.subf %147, %148 : vector<2x17x16xf32>
    %150 = arith.select %146, %144, %149 : vector<2x17x16xi1>, vector<2x17x16xf32>
    %c1_84 = arith.constant 1 : index
    %c0_85 = arith.constant 0 : index
    %c0_86 = arith.constant 0 : index
    %151 = vector.load %arg5[%c1_84, %c0_85, %c0_86] : memref<3x8x8xbf16, #tpu.memory_space<vmem>>, vector<1x8x8xbf16>
    %152 = vector.shape_cast %151 : vector<1x8x8xbf16> to vector<8x8xbf16>
    %153 = arith.truncf %150 : vector<2x17x16xf32> to vector<2x17x16xbf16>
    %154 = vector.extract_strided_slice %153 {offsets = [0, 0, 0], sizes = [2, 17, 8], strides = [1, 1, 1]} : vector<2x17x16xbf16> to vector<2x17x8xbf16>
    %155 = vector.extract_strided_slice %154 {offsets = [0, 0, 0], sizes = [1, 17, 8], strides = [1, 1, 1]} : vector<2x17x8xbf16> to vector<1x17x8xbf16>
    %156 = vector.shape_cast %155 : vector<1x17x8xbf16> to vector<17x8xbf16>
    %cst_87 = arith.constant dense<0.000000e+00> : vector<17x8xf32>
    %157 = tpu.matmul %156, %152, %cst_87 {dimension_numbers = #tpu.dot_dimension_numbers<[1], [0], [0], [1], [0, 0, 1, 1], [], []>} : vector<17x8xbf16>, vector<8x8xbf16>, vector<17x8xf32> -> vector<17x8xf32>
    %158 = vector.extract_strided_slice %154 {offsets = [1, 0, 0], sizes = [1, 17, 8], strides = [1, 1, 1]} : vector<2x17x8xbf16> to vector<1x17x8xbf16>
    %159 = vector.shape_cast %158 : vector<1x17x8xbf16> to vector<17x8xbf16>
    %cst_88 = arith.constant dense<0.000000e+00> : vector<17x8xf32>
    %160 = tpu.matmul %159, %152, %cst_88 {dimension_numbers = #tpu.dot_dimension_numbers<[1], [0], [0], [1], [0, 0, 1, 1], [], []>} : vector<17x8xbf16>, vector<8x8xbf16>, vector<17x8xf32> -> vector<17x8xf32>
    %161 = vector.shape_cast %157 : vector<17x8xf32> to vector<1x17x8xf32>
    %162 = vector.shape_cast %160 : vector<17x8xf32> to vector<1x17x8xf32>
    %163 = tpu.concatenate %161, %162 in 0 : vector<1x17x8xf32>, vector<1x17x8xf32> -> vector<2x17x8xf32>
    %164 = vector.extract_strided_slice %153 {offsets = [0, 0, 8], sizes = [2, 17, 8], strides = [1, 1, 1]} : vector<2x17x16xbf16> to vector<2x17x8xbf16>
    %165 = vector.extract_strided_slice %164 {offsets = [0, 0, 0], sizes = [1, 17, 8], strides = [1, 1, 1]} : vector<2x17x8xbf16> to vector<1x17x8xbf16>
    %166 = vector.shape_cast %165 : vector<1x17x8xbf16> to vector<17x8xbf16>
    %cst_89 = arith.constant dense<0.000000e+00> : vector<17x8xf32>
    %167 = tpu.matmul %166, %152, %cst_89 {dimension_numbers = #tpu.dot_dimension_numbers<[1], [0], [0], [1], [0, 0, 1, 1], [], []>} : vector<17x8xbf16>, vector<8x8xbf16>, vector<17x8xf32> -> vector<17x8xf32>
    %168 = vector.extract_strided_slice %164 {offsets = [1, 0, 0], sizes = [1, 17, 8], strides = [1, 1, 1]} : vector<2x17x8xbf16> to vector<1x17x8xbf16>
    %169 = vector.shape_cast %168 : vector<1x17x8xbf16> to vector<17x8xbf16>
    %cst_90 = arith.constant dense<0.000000e+00> : vector<17x8xf32>
    %170 = tpu.matmul %169, %152, %cst_90 {dimension_numbers = #tpu.dot_dimension_numbers<[1], [0], [0], [1], [0, 0, 1, 1], [], []>} : vector<17x8xbf16>, vector<8x8xbf16>, vector<17x8xf32> -> vector<17x8xf32>
    %171 = vector.shape_cast %167 : vector<17x8xf32> to vector<1x17x8xf32>
    %172 = vector.shape_cast %170 : vector<17x8xf32> to vector<1x17x8xf32>
    %173 = tpu.concatenate %171, %172 in 0 : vector<1x17x8xf32>, vector<1x17x8xf32> -> vector<2x17x8xf32>
    %174 = tpu.concatenate %163, %173 in 2 : vector<2x17x8xf32>, vector<2x17x8xf32> -> vector<2x17x16xf32>
    %175 = vector.extract_strided_slice %6 {offsets = [4, 0], sizes = [1, 16], strides = [1, 1]} : vector<7x16xf32> to vector<1x16xf32>
    %176 = vector.shape_cast %175 : vector<1x16xf32> to vector<1x1x16xf32>
    %177 = vector.broadcast %176 : vector<1x1x16xf32> to vector<2x17x16xf32>
    %178 = arith.addf %174, %177 : vector<2x17x16xf32>
    %cst_91 = arith.constant 0.000000e+00 : f32
    %179 = vector.broadcast %cst_91 : f32 to vector<2x17x16xf32>
    %180 = arith.cmpf ogt, %178, %179 : vector<2x17x16xf32>
    %181 = math.exp %178 : vector<2x17x16xf32>
    %cst_92 = arith.constant 1.000000e+00 : f32
    %182 = vector.broadcast %cst_92 : f32 to vector<2x17x16xf32>
    %183 = arith.subf %181, %182 : vector<2x17x16xf32>
    %184 = arith.select %180, %178, %183 : vector<2x17x16xi1>, vector<2x17x16xf32>
    %185 = arith.addf %33, %108 : vector<2x17x16xf32>
    %186 = arith.addf %185, %184 : vector<2x17x16xf32>
    %187 = arith.truncf %186 : vector<2x17x16xf32> to vector<2x17x16xbf16>
    %c0_93 = arith.constant 0 : index
    %c8_94 = arith.constant 8 : index
    %c0_95 = arith.constant 0 : index
    %188 = vector.load %arg8[%c0_93, %c8_94, %c0_95] : memref<2x33x16xbf16, #tpu.memory_space<vmem>>, vector<2x17x16xbf16>
    tpu.vector_store %arg8[%c0_93, %c8_94, %c0_95], %187 {strides = array<i32>} : memref<2x33x16xbf16, #tpu.memory_space<vmem>>, vector<2x17x16xbf16>,
    %c2 = arith.constant 2 : index
    %c0_96 = arith.constant 0 : index
    %c0_97 = arith.constant 0 : index
    %189 = vector.load %arg4[%c2, %c0_96, %c0_97] : memref<3x24x8xbf16, #tpu.memory_space<vmem>>, vector<1x24x8xbf16>
    %190 = vector.shape_cast %189 : vector<1x24x8xbf16> to vector<24x8xbf16>
    %c0_98 = arith.constant 0 : index
    %c3 = arith.constant 3 : index
    %c8_99 = arith.constant 8 : index
    %191 = vector.load %arg8[%c0_98, %c3, %c8_99] : memref<2x33x16xbf16, #tpu.memory_space<vmem>>, vector<2x17x8xbf16>
    %c0_100 = arith.constant 0 : index
    %c8_101 = arith.constant 8 : index
    %c0_102 = arith.constant 0 : index
    %192 = vector.load %arg8[%c0_100, %c8_101, %c0_102] : memref<2x33x16xbf16, #tpu.memory_space<vmem>>, vector<2x17x8xbf16>
    %c0_103 = arith.constant 0 : index
    %c12 = arith.constant 12 : index
    %c8_104 = arith.constant 8 : index
    %193 = vector.load %arg8[%c0_103, %c12, %c8_104] : memref<2x33x16xbf16, #tpu.memory_space<vmem>>, vector<2x17x8xbf16>
    %194 = tpu.concatenate %191, %192, %193 in 2 : vector<2x17x8xbf16>, vector<2x17x8xbf16>, vector<2x17x8xbf16> -> vector<2x17x24xbf16>
    %195 = vector.extract_strided_slice %194 {offsets = [0, 0, 0], sizes = [1, 17, 24], strides = [1, 1, 1]} : vector<2x17x24xbf16> to vector<1x17x24xbf16>
    %196 = vector.shape_cast %195 : vector<1x17x24xbf16> to vector<17x24xbf16>
    %cst_105 = arith.constant dense<0.000000e+00> : vector<17x8xf32>
    %197 = tpu.matmul %196, %190, %cst_105 {dimension_numbers = #tpu.dot_dimension_numbers<[1], [0], [0], [1], [0, 0, 1, 1], [], []>} : vector<17x24xbf16>, vector<24x8xbf16>, vector<17x8xf32> -> vector<17x8xf32>
    %198 = vector.extract_strided_slice %194 {offsets = [1, 0, 0], sizes = [1, 17, 24], strides = [1, 1, 1]} : vector<2x17x24xbf16> to vector<1x17x24xbf16>
    %199 = vector.shape_cast %198 : vector<1x17x24xbf16> to vector<17x24xbf16>
    %cst_106 = arith.constant dense<0.000000e+00> : vector<17x8xf32>
    %200 = tpu.matmul %199, %190, %cst_106 {dimension_numbers = #tpu.dot_dimension_numbers<[1], [0], [0], [1], [0, 0, 1, 1], [], []>} : vector<17x24xbf16>, vector<24x8xbf16>, vector<17x8xf32> -> vector<17x8xf32>
    %201 = vector.shape_cast %197 : vector<17x8xf32> to vector<1x17x8xf32>
    %202 = vector.shape_cast %200 : vector<17x8xf32> to vector<1x17x8xf32>
    %203 = tpu.concatenate %201, %202 in 0 : vector<1x17x8xf32>, vector<1x17x8xf32> -> vector<2x17x8xf32>
    %c0_107 = arith.constant 0 : index
    %c4 = arith.constant 4 : index
    %c0_108 = arith.constant 0 : index
    %204 = vector.load %arg8[%c0_107, %c4, %c0_108] : memref<2x33x16xbf16, #tpu.memory_space<vmem>>, vector<2x17x8xbf16>
    %c0_109 = arith.constant 0 : index
    %c8_110 = arith.constant 8 : index
    %c8_111 = arith.constant 8 : index
    %205 = vector.load %arg8[%c0_109, %c8_110, %c8_111] : memref<2x33x16xbf16, #tpu.memory_space<vmem>>, vector<2x17x8xbf16>
    %c0_112 = arith.constant 0 : index
    %c13 = arith.constant 13 : index
    %c0_113 = arith.constant 0 : index
    %206 = vector.load %arg8[%c0_112, %c13, %c0_113] : memref<2x33x16xbf16, #tpu.memory_space<vmem>>, vector<2x17x8xbf16>
    %207 = tpu.concatenate %204, %205, %206 in 2 : vector<2x17x8xbf16>, vector<2x17x8xbf16>, vector<2x17x8xbf16> -> vector<2x17x24xbf16>
    %208 = vector.extract_strided_slice %207 {offsets = [0, 0, 0], sizes = [1, 17, 24], strides = [1, 1, 1]} : vector<2x17x24xbf16> to vector<1x17x24xbf16>
    %209 = vector.shape_cast %208 : vector<1x17x24xbf16> to vector<17x24xbf16>
    %cst_114 = arith.constant dense<0.000000e+00> : vector<17x8xf32>
    %210 = tpu.matmul %209, %190, %cst_114 {dimension_numbers = #tpu.dot_dimension_numbers<[1], [0], [0], [1], [0, 0, 1, 1], [], []>} : vector<17x24xbf16>, vector<24x8xbf16>, vector<17x8xf32> -> vector<17x8xf32>
    %211 = vector.extract_strided_slice %207 {offsets = [1, 0, 0], sizes = [1, 17, 24], strides = [1, 1, 1]} : vector<2x17x24xbf16> to vector<1x17x24xbf16>
    %212 = vector.shape_cast %211 : vector<1x17x24xbf16> to vector<17x24xbf16>
    %cst_115 = arith.constant dense<0.000000e+00> : vector<17x8xf32>
    %213 = tpu.matmul %212, %190, %cst_115 {dimension_numbers = #tpu.dot_dimension_numbers<[1], [0], [0], [1], [0, 0, 1, 1], [], []>} : vector<17x24xbf16>, vector<24x8xbf16>, vector<17x8xf32> -> vector<17x8xf32>
    %214 = vector.shape_cast %210 : vector<17x8xf32> to vector<1x17x8xf32>
    %215 = vector.shape_cast %213 : vector<17x8xf32> to vector<1x17x8xf32>
    %216 = tpu.concatenate %214, %215 in 0 : vector<1x17x8xf32>, vector<1x17x8xf32> -> vector<2x17x8xf32>
    %217 = tpu.concatenate %203, %216 in 2 : vector<2x17x8xf32>, vector<2x17x8xf32> -> vector<2x17x16xf32>
    %218 = vector.extract_strided_slice %6 {offsets = [5, 0], sizes = [1, 16], strides = [1, 1]} : vector<7x16xf32> to vector<1x16xf32>
    %219 = vector.shape_cast %218 : vector<1x16xf32> to vector<1x1x16xf32>
    %220 = vector.broadcast %219 : vector<1x1x16xf32> to vector<2x17x16xf32>
    %221 = arith.addf %217, %220 : vector<2x17x16xf32>
    %cst_116 = arith.constant 0.000000e+00 : f32
    %222 = vector.broadcast %cst_116 : f32 to vector<2x17x16xf32>
    %223 = arith.cmpf ogt, %221, %222 : vector<2x17x16xf32>
    %224 = math.exp %221 : vector<2x17x16xf32>
    %cst_117 = arith.constant 1.000000e+00 : f32
    %225 = vector.broadcast %cst_117 : f32 to vector<2x17x16xf32>
    %226 = arith.subf %224, %225 : vector<2x17x16xf32>
    %227 = arith.select %223, %221, %226 : vector<2x17x16xi1>, vector<2x17x16xf32>
    %c2_118 = arith.constant 2 : index
    %c0_119 = arith.constant 0 : index
    %c0_120 = arith.constant 0 : index
    %228 = vector.load %arg5[%c2_118, %c0_119, %c0_120] : memref<3x8x8xbf16, #tpu.memory_space<vmem>>, vector<1x8x8xbf16>
    %229 = vector.shape_cast %228 : vector<1x8x8xbf16> to vector<8x8xbf16>
    %230 = arith.truncf %227 : vector<2x17x16xf32> to vector<2x17x16xbf16>
    %231 = vector.extract_strided_slice %230 {offsets = [0, 0, 0], sizes = [2, 17, 8], strides = [1, 1, 1]} : vector<2x17x16xbf16> to vector<2x17x8xbf16>
    %232 = vector.extract_strided_slice %231 {offsets = [0, 0, 0], sizes = [1, 17, 8], strides = [1, 1, 1]} : vector<2x17x8xbf16> to vector<1x17x8xbf16>
    %233 = vector.shape_cast %232 : vector<1x17x8xbf16> to vector<17x8xbf16>
    %cst_121 = arith.constant dense<0.000000e+00> : vector<17x8xf32>
    %234 = tpu.matmul %233, %229, %cst_121 {dimension_numbers = #tpu.dot_dimension_numbers<[1], [0], [0], [1], [0, 0, 1, 1], [], []>} : vector<17x8xbf16>, vector<8x8xbf16>, vector<17x8xf32> -> vector<17x8xf32>
    %235 = vector.extract_strided_slice %231 {offsets = [1, 0, 0], sizes = [1, 17, 8], strides = [1, 1, 1]} : vector<2x17x8xbf16> to vector<1x17x8xbf16>
    %236 = vector.shape_cast %235 : vector<1x17x8xbf16> to vector<17x8xbf16>
    %cst_122 = arith.constant dense<0.000000e+00> : vector<17x8xf32>
    %237 = tpu.matmul %236, %229, %cst_122 {dimension_numbers = #tpu.dot_dimension_numbers<[1], [0], [0], [1], [0, 0, 1, 1], [], []>} : vector<17x8xbf16>, vector<8x8xbf16>, vector<17x8xf32> -> vector<17x8xf32>
    %238 = vector.shape_cast %234 : vector<17x8xf32> to vector<1x17x8xf32>
    %239 = vector.shape_cast %237 : vector<17x8xf32> to vector<1x17x8xf32>
    %240 = tpu.concatenate %238, %239 in 0 : vector<1x17x8xf32>, vector<1x17x8xf32> -> vector<2x17x8xf32>
    %241 = vector.extract_strided_slice %230 {offsets = [0, 0, 8], sizes = [2, 17, 8], strides = [1, 1, 1]} : vector<2x17x16xbf16> to vector<2x17x8xbf16>
    %242 = vector.extract_strided_slice %241 {offsets = [0, 0, 0], sizes = [1, 17, 8], strides = [1, 1, 1]} : vector<2x17x8xbf16> to vector<1x17x8xbf16>
    %243 = vector.shape_cast %242 : vector<1x17x8xbf16> to vector<17x8xbf16>
    %cst_123 = arith.constant dense<0.000000e+00> : vector<17x8xf32>
    %244 = tpu.matmul %243, %229, %cst_123 {dimension_numbers = #tpu.dot_dimension_numbers<[1], [0], [0], [1], [0, 0, 1, 1], [], []>} : vector<17x8xbf16>, vector<8x8xbf16>, vector<17x8xf32> -> vector<17x8xf32>
    %245 = vector.extract_strided_slice %241 {offsets = [1, 0, 0], sizes = [1, 17, 8], strides = [1, 1, 1]} : vector<2x17x8xbf16> to vector<1x17x8xbf16>
    %246 = vector.shape_cast %245 : vector<1x17x8xbf16> to vector<17x8xbf16>
    %cst_124 = arith.constant dense<0.000000e+00> : vector<17x8xf32>
    %247 = tpu.matmul %246, %229, %cst_124 {dimension_numbers = #tpu.dot_dimension_numbers<[1], [0], [0], [1], [0, 0, 1, 1], [], []>} : vector<17x8xbf16>, vector<8x8xbf16>, vector<17x8xf32> -> vector<17x8xf32>
    %248 = vector.shape_cast %244 : vector<17x8xf32> to vector<1x17x8xf32>
    %249 = vector.shape_cast %247 : vector<17x8xf32> to vector<1x17x8xf32>
    %250 = tpu.concatenate %248, %249 in 0 : vector<1x17x8xf32>, vector<1x17x8xf32> -> vector<2x17x8xf32>
    %251 = tpu.concatenate %240, %250 in 2 : vector<2x17x8xf32>, vector<2x17x8xf32> -> vector<2x17x16xf32>
    %252 = vector.extract_strided_slice %6 {offsets = [6, 0], sizes = [1, 16], strides = [1, 1]} : vector<7x16xf32> to vector<1x16xf32>
    %253 = vector.shape_cast %252 : vector<1x16xf32> to vector<1x1x16xf32>
    %254 = vector.broadcast %253 : vector<1x1x16xf32> to vector<2x17x16xf32>
    %255 = arith.addf %251, %254 : vector<2x17x16xf32>
    %cst_125 = arith.constant 0.000000e+00 : f32
    %256 = vector.broadcast %cst_125 : f32 to vector<2x17x16xf32>
    %257 = arith.cmpf ogt, %255, %256 : vector<2x17x16xf32>
    %258 = math.exp %255 : vector<2x17x16xf32>
    %cst_126 = arith.constant 1.000000e+00 : f32
    %259 = vector.broadcast %cst_126 : f32 to vector<2x17x16xf32>
    %260 = arith.subf %258, %259 : vector<2x17x16xf32>
    %261 = arith.select %257, %255, %260 : vector<2x17x16xi1>, vector<2x17x16xf32>
    %262 = arith.addf %186, %261 : vector<2x17x16xf32>
    %263 = vector.broadcast %4 : vector<2x1x16xf32> to vector<2x17x16xf32>
    %264 = arith.mulf %263, %262 : vector<2x17x16xf32>
    %265 = vector.broadcast %5 : vector<2x1x16xf32> to vector<2x17x16xf32>
    %266 = arith.addf %264, %265 : vector<2x17x16xf32>
    %c0_127 = arith.constant 0 : index
    %c0_128 = arith.constant 0 : index
    %c0_129 = arith.constant 0 : index
    %267 = vector.load %arg7[%c0_127, %c0_128, %c0_129] : memref<2x17x16xf32, #tpu.memory_space<vmem>>, vector<2x17x16xf32>
    tpu.vector_store %arg7[%c0_127, %c0_128, %c0_129], %266 {strides = array<i32>} : memref<2x17x16xf32, #tpu.memory_space<vmem>>, vector<2x17x16xf32>,
    return
  }
  func.func @transform_0(%arg0: i32) -> (i32, i32, i32) {
    %c0_i32 = arith.constant 0 : i32
    %c0_i32_0 = arith.constant 0 : i32
    %c0_i32_1 = arith.constant 0 : i32
    return %arg0, %c0_i32, %c0_i32_0 : i32, i32, i32
  }
  func.func @transform_1(%arg0: i32) -> (i32, i32, i32) {
    %c0_i32 = arith.constant 0 : i32
    %c0_i32_0 = arith.constant 0 : i32
    %c0_i32_1 = arith.constant 0 : i32
    return %arg0, %c0_i32, %c0_i32_0 : i32, i32, i32
  }
  func.func @transform_2(%arg0: i32) -> (i32, i32) {
    %c0_i32 = arith.constant 0 : i32
    %c0_i32_0 = arith.constant 0 : i32
    %c0_i32_1 = arith.constant 0 : i32
    return %c0_i32, %c0_i32_0 : i32, i32
  }
  func.func @transform_3(%arg0: i32) -> (i32, i32, i32) {
    %c0_i32 = arith.constant 0 : i32
    %c0_i32_0 = arith.constant 0 : i32
    %c0_i32_1 = arith.constant 0 : i32
    %c0_i32_2 = arith.constant 0 : i32
    return %c0_i32, %c0_i32_0, %c0_i32_1 : i32, i32, i32
  }
  func.func @transform_4(%arg0: i32) -> (i32, i32, i32) {
    %c0_i32 = arith.constant 0 : i32
    %c0_i32_0 = arith.constant 0 : i32
    %c0_i32_1 = arith.constant 0 : i32
    %c0_i32_2 = arith.constant 0 : i32
    return %c0_i32, %c0_i32_0, %c0_i32_1 : i32, i32, i32
  }
  func.func @transform_5(%arg0: i32) -> (i32, i32) {
    %c0_i32 = arith.constant 0 : i32
    %c0_i32_0 = arith.constant 0 : i32
    %c0_i32_1 = arith.constant 0 : i32
    return %c0_i32, %c0_i32_0 : i32, i32
  }
  func.func @transform_6(%arg0: i32) -> (i32, i32, i32) {
    %c0_i32 = arith.constant 0 : i32
    %c0_i32_0 = arith.constant 0 : i32
    %c0_i32_1 = arith.constant 0 : i32
    return %arg0, %c0_i32, %c0_i32_0 : i32, i32, i32
  }
}

</mosaic_0001>

<llo_original>
// kernel: _lambda_.1
$region0: #{_lambda_.1}
  #allocation0 [shape = 'u32[]', space=smem, size = 0x4, offset = 0x4, fixed_abs, tag = 'smem constant byte address 0x4 - core index']
  #allocation1 [shape = 'u32[144,128]{1,0:T(1,128)}', space=vmem, size = 0x12000, scoped, tag = 'internal scratch']
  #allocation2 [shape = 'bf16[2,33,16]{2,1,0:T(8,128)(2,1)}', space=vmem, size = 0x5000, scoped, tag = 'scratch operand']
  %s0 = inlined_call_operand.vmem [shape: bf16[2,18,8], index: 0, kind: input, shape index: {}]
  %s1 = inlined_call_operand.vmem [shape: f32[2,2,16], index: 1, kind: input, shape index: {}]
  %s2 = inlined_call_operand.vmem [shape: bf16[16,16], index: 2, kind: input, shape index: {}]
  %s3 = inlined_call_operand.vmem [shape: bf16[3,24,8], index: 3, kind: input, shape index: {}]
  %s4 = inlined_call_operand.vmem [shape: bf16[3,8,8], index: 4, kind: input, shape index: {}]
  %s5 = inlined_call_operand.vmem [shape: f32[7,16], index: 5, kind: input, shape index: {}]
  %s6 = inlined_call_operand.vmem [shape: f32[2,17,16], index: 6, kind: output, shape index: {}]
  %s7 = sld [smem:[#allocation0]]
  $region34: #{_lambda_.1} parent=0
    _
  %s9 = ssub.s32 1, %s7
  %s10 = scalar_select 0, %s9, %s7
  // Predicated region
  $region2: #{_lambda_.1} parent=0 // pred_check
    _
  $region3: #{_lambda_.1} parent=0 // pred_check_branch
    %12 = sbr.rel (0) target = $region5
  $region4: #{_lambda_.1} parent=0 // pred_region
    _
  $region5: #{_lambda_.1} parent=0 // pred_fallthru
    _
  // Predicated region
  $region6: #{_lambda_.1} parent=0 // pred_check
    _
  $region7: #{_lambda_.1} parent=0 // pred_check_branch
    %14 = sbr.rel (0) target = $region9
  $region8: #{_lambda_.1} parent=0 // pred_region
    _
  $region9: #{_lambda_.1} parent=0 // pred_fallthru
    _
  // Predicated region
  $region10: #{_lambda_.1} parent=0 // pred_check
    _
  $region11: #{_lambda_.1} parent=0 // pred_check_branch
    %16 = sbr.rel (0) target = $region13
  $region12: #{_lambda_.1} parent=0 // pred_region
    _
  $region13: #{_lambda_.1} parent=0 // pred_fallthru
    _
  // Predicated region
  $region14: #{_lambda_.1} parent=0 // pred_check
    _
  $region15: #{_lambda_.1} parent=0 // pred_check_branch
    %18 = sbr.rel (0) target = $region17
  $region16: #{_lambda_.1} parent=0 // pred_region
    _
  $region17: #{_lambda_.1} parent=0 // pred_fallthru
    _
  // Predicated region
  $region18: #{_lambda_.1} parent=0 // pred_check
    _
  $region19: #{_lambda_.1} parent=0 // pred_check_branch
    %20 = sbr.rel (0) target = $region21
  $region20: #{_lambda_.1} parent=0 // pred_region
    _
  $region21: #{_lambda_.1} parent=0 // pred_fallthru
    _
  // Predicated region
  $region22: #{_lambda_.1} parent=0 // pred_check
    _
  $region23: #{_lambda_.1} parent=0 // pred_check_branch
    %22 = sbr.rel (0) target = $region25
  $region24: #{_lambda_.1} parent=0 // pred_region
    _
  $region25: #{_lambda_.1} parent=0 // pred_fallthru
    _
  %vm24 = vcmask 125952
  %25 = vst.msk [vmem:[#allocation2] sm:$0xf] %vm24, 0
  %26 = vst.msk [vmem:[#allocation2 + $0x14] sm:$0xf] %vm24, 0
  %vm27 = vcmask 125952
  %vm28 = vsmask.f32 7938
  %vm29 = vmand %vm27, %vm28
  %v30 = vld [vmem:[#allocation2 + $0xc] sm:$0xf]
  %v31 = vsel %vm29, 0, %v30
  %32 = vst [vmem:[#allocation2 + $0xc] sm:$0xf] %v31
  %vm33 = vcmask 122880
  %vm34 = vsmask.f32 256
  %vm35 = vmand %vm33, %vm34
  %v36 = vld [vmem:[#allocation2 + $0x10] sm:$0x1]
  %v37 = vsel %vm35, 0, %v36
  %38 = vst [vmem:[#allocation2 + $0x10] sm:$0x1] %v37
  %v39 = vld [vmem:[#allocation2 + $0x20] sm:$0xf]
  %v40 = vsel %vm29, 0, %v39
  %41 = vst [vmem:[#allocation2 + $0x20] sm:$0xf] %v40
  %v42 = vld [vmem:[#allocation2 + $0x24] sm:$0x1]
  %v43 = vsel %vm35, 0, %v42
  %44 = vst [vmem:[#allocation2 + $0x24] sm:$0x1] %v43
  %v45 = vld [vmem:[%s1] sm:$0x3]
  %v46 = vld [vmem:[%s1 + $0x2] sm:$0x3]
  %v47 = vld [vmem:[%s5] sm:$0x7f]
  %v48 = vld [vmem:[%s0] sm:$0xf]
  %v49 = vld [vmem:[%s0 + $0x4] sm:$0xf]
  %v50 = vld [vmem:[%s0 + $0x8] sm:$0x1]
  %v51 = vld [vmem:[%s0 + $0xc] sm:$0xf]
  %v52 = vld [vmem:[%s0 + $0x10] sm:$0xf]
  %v53 = vld [vmem:[%s0 + $0x14] sm:$0x1]
  %v60 = vunpack.c.l.b16 %v48
  %v61 = vunpack.c.l.b16 %v49
  %v62 = vunpack.c.l.b16 %v50
  %v63 = vunpack.c.l.b16 %v51
  %v64 = vunpack.c.l.b16 %v52
  %v65 = vunpack.c.l.b16 %v53
  %v66 = vpack.c.b16 %v61, %v60
  %v67 = vpack.c.b16 %v62, %v62
  %v68 = vpack.c.b16 %v64, %v63
  %v69 = vpack.c.b16 %v65, %v65
  %v71 = vshrl.u32 %v66, 16
  %v73 = vrot.slane %v71, 7
  %v74 = vshll.u32 %v66, 16
  %v76 = vor.u32 %v73, %v74
  %v78 = vshll.u32 %v67, 16
  %v80 = vsel %vm34, %v73, %v78
  %v82 = vshrl.u32 %v68, 16
  %v84 = vrot.slane %v82, 7
  %v85 = vshll.u32 %v68, 16
  %v87 = vor.u32 %v84, %v85
  %v89 = vshll.u32 %v69, 16
  %v91 = vsel %vm34, %v84, %v89
  %92 = vrot.lane.b32.xlu0 %v76, 8
  %v93 = vpop.permute.xlu0 %92
  %94 = vrot.lane.b32.xlu0 %v80, 8
  %v95 = vpop.permute.xlu0 %94
  %96 = vrot.lane.b32.xlu0 %v87, 8
  %v97 = vpop.permute.xlu0 %96
  %98 = vrot.lane.b32.xlu0 %v91, 8
  %v99 = vpop.permute.xlu0 %98
  %vm100 = vcmask 64512
  %v102 = vsel %vm100, %v66, %v93
  %v104 = vsel %vm100, %v67, %v95
  %v106 = vsel %vm100, %v68, %v97
  %v108 = vsel %vm100, %v69, %v99
  %v109 = vld [vmem:[%s2] sm:$0xf]
  %v110 = vld [vmem:[%s2 + $0x4] sm:$0xf]
  %vm111 = vsmask.f32 7424
  %v112 = vshrl.u32 %v102, 16
  %v114 = vshll.u32 %v102, 16
  %v116 = vrot.slane %v114, 1
  %v117 = vor.u32 %v112, %v116
  %v118 = vshll.u32 %v104, 16
  %v120 = vrot.slane %v118, 1
  %v121 = vsel %vm111, %v117, %v120
  %v122 = vshrl.u32 %v104, 16
  %v126 = vunpack.c.l.b16 %v109
  %v127 = vunpack.c.l.b16 %v110
  %v128 = vpack.c.b16 %v127, %v126
  %vm130 = vcmask 130048
  %v132 = vsel %vm130, %v121, 0
  %v135 = vsel %vm130, %v122, 0
  %137 = vmatprep.subr.bf16.mxu0 0
  %138 = vmatpush1.bf16.msra.mxu0 %v128
  %139 = vmatprep.subr.bf16.mxu0 0
  %140 = vmatpush1.bf16.msra.mxu0 0
  %141 = vmatprep.subr.bf16.mxu0 0
  %142 = vmatpush1.bf16.msra.mxu0 0
  %143 = vmatprep.subr.bf16.mxu0 0
  %144 = vmatpush1.bf16.msra.mxu0 0
  %145 = vmatprep.subr.bf16.mxu0 0
  %146 = vmatpush1.bf16.msra.mxu0 0
  %147 = vmatprep.subr.bf16.mxu0 0
  %148 = vmatpush1.bf16.msra.mxu0 0
  %149 = vmatprep.subr.bf16.mxu0 0
  %150 = vmatpush1.bf16.msra.mxu0 0
  %151 = vmatprep.subr.bf16.mxu0 0
  %152 = vmatpush1.bf16.msra.mxu0 0
  %153 = vmatprep.subr.bf16.mxu0 0
  %154 = vmatpush1.bf16.msra.mxu0 0
  %155 = vmatprep.subr.bf16.mxu0 0
  %156 = vmatpush1.bf16.msra.mxu0 0
  %157 = vmatprep.subr.bf16.mxu0 0
  %158 = vmatpush1.bf16.msra.mxu0 0
  %159 = vmatprep.subr.bf16.mxu0 0
  %160 = vmatpush1.bf16.msra.mxu0 0
  %161 = vmatprep.subr.bf16.mxu0 0
  %162 = vmatpush1.bf16.msra.mxu0 0
  %163 = vmatprep.subr.bf16.mxu0 0
  %164 = vmatpush1.bf16.msra.mxu0 0
  %165 = vmatprep.subr.bf16.mxu0 0
  %166 = vmatpush1.bf16.msra.mxu0 0
  %167 = vmatprep.subr.bf16.mxu0 0
  %168 = vmatpush1.bf16.msra.mxu0 0
  %169 = vmatprep.mubr.bf16.mxu0 0
  %170 = vmatmul.mubr.bf16.gmra.mrb[0].mxu0 %v132
  %v171 = vpop.f32.mrb[0].mxu0
  %v172 = vadd.f32 0.0, %v171
  %v173 = vpop.f32.mrb[0].mxu0
  %v174 = vpop.f32.mrb[0].mxu0
  %v175 = vadd.f32 0.0, %v174
  %v176 = vpop.f32.mrb[0].mxu0
  %177 = vmatprep.mubr.bf16.mxu0 0
  %178 = vmatmul.mubr.bf16.gmra.mrb[0].mxu0 %v135
  %v179 = vpop.f32.mrb[0].mxu0
  %v180 = vadd.f32 0.0, %v179
  %v181 = vpop.f32.mrb[0].mxu0
  %v182 = vpop.f32.mrb[0].mxu0
  %v183 = vpop.f32.mrb[0].mxu0
  %184 = vdwg.mxu0
  %v185 = vshrl.u32 %v106, 16
  %v187 = vshll.u32 %v106, 16
  %v189 = vrot.slane %v187, 1
  %v190 = vor.u32 %v185, %v189
  %v191 = vshll.u32 %v108, 16
  %v193 = vrot.slane %v191, 1
  %v194 = vsel %vm111, %v190, %v193
  %v195 = vshrl.u32 %v108, 16
  %v198 = vsel %vm130, %v194, 0
  %v201 = vsel %vm130, %v195, 0
  %203 = vmatprep.subr.bf16.mxu0 0
  %204 = vmatpush1.bf16.msra.mxu0 %v128
  %205 = vmatprep.subr.bf16.mxu0 0
  %206 = vmatpush1.bf16.msra.mxu0 0
  %207 = vmatprep.subr.bf16.mxu0 0
  %208 = vmatpush1.bf16.msra.mxu0 0
  %209 = vmatprep.subr.bf16.mxu0 0
  %210 = vmatpush1.bf16.msra.mxu0 0
  %211 = vmatprep.subr.bf16.mxu0 0
  %212 = vmatpush1.bf16.msra.mxu0 0
  %213 = vmatprep.subr.bf16.mxu0 0
  %214 = vmatpush1.bf16.msra.mxu0 0
  %215 = vmatprep.subr.bf16.mxu0 0
  %216 = vmatpush1.bf16.msra.mxu0 0
  %217 = vmatprep.subr.bf16.mxu0 0
  %218 = vmatpush1.bf16.msra.mxu0 0
  %219 = vmatprep.subr.bf16.mxu0 0
  %220 = vmatpush1.bf16.msra.mxu0 0
  %221 = vmatprep.subr.bf16.mxu0 0
  %222 = vmatpush1.bf16.msra.mxu0 0
  %223 = vmatprep.subr.bf16.mxu0 0
  %224 = vmatpush1.bf16.msra.mxu0 0
  %225 = vmatprep.subr.bf16.mxu0 0
  %226 = vmatpush1.bf16.msra.mxu0 0
  %227 = vmatprep.subr.bf16.mxu0 0
  %228 = vmatpush1.bf16.msra.mxu0 0
  %229 = vmatprep.subr.bf16.mxu0 0
  %230 = vmatpush1.bf16.msra.mxu0 0
  %231 = vmatprep.subr.bf16.mxu0 0
  %232 = vmatpush1.bf16.msra.mxu0 0
  %233 = vmatprep.subr.bf16.mxu0 0
  %234 = vmatpush1.bf16.msra.mxu0 0
  %235 = vmatprep.mubr.bf16.mxu0 0
  %236 = vmatmul.mubr.bf16.gmra.mrb[0].mxu0 %v198
  %v237 = vpop.f32.mrb[0].mxu0
  %v238 = vadd.f32 0.0, %v237
  %v239 = vpop.f32.mrb[0].mxu0
  %v240 = vpop.f32.mrb[0].mxu0
  %v241 = vadd.f32 0.0, %v240
  %v242 = vpop.f32.mrb[0].mxu0
  %243 = vmatprep.mubr.bf16.mxu0 0
  %244 = vmatmul.mubr.bf16.gmra.mrb[0].mxu0 %v201
  %v245 = vpop.f32.mrb[0].mxu0
  %v246 = vadd.f32 0.0, %v245
  %v247 = vpop.f32.mrb[0].mxu0
  %v248 = vpop.f32.mrb[0].mxu0
  %v249 = vpop.f32.mrb[0].mxu0
  %250 = vdwg.mxu0
  %v251 = vlaneseq
  %v252 = vshrl.u32 %v251, 7
  %v253 = vsub.s32 0, %v252
  %v254 = vrot.slane %v47, %v253
  %v255 = vadd.f32 %v172, %v254
  %v256 = vadd.f32 %v175, %v254
  %v257 = vadd.f32 %v180, %v254
  %v258 = vadd.f32 %v238, %v254
  %v259 = vadd.f32 %v241, %v254
  %v260 = vadd.f32 %v246, %v254
  %vm261 = vcmp.gt.f32.partialorder %v255, 0.0
  %vm262 = vcmp.gt.f32.partialorder %v256, 0.0
  %vm263 = vcmp.gt.f32.partialorder %v257, 0.0
  %vm264 = vcmp.gt.f32.partialorder %v258, 0.0
  %vm265 = vcmp.gt.f32.partialorder %v259, 0.0
  %vm266 = vcmp.gt.f32.partialorder %v260, 0.0
  %v267 = vmul.f32 %v255, 1.442695
  %v268 = vpow.pop %v267
  %v269 = vmul.f32 %v256, 1.442695
  %v270 = vpow.pop %v269
  %v271 = vmul.f32 %v257, 1.442695
  %v272 = vpow.pop %v271
  %v273 = vmul.f32 %v258, 1.442695
  %v274 = vpow.pop %v273
  %v275 = vmul.f32 %v259, 1.442695
  %v276 = vpow.pop %v275
  %v277 = vmul.f32 %v260, 1.442695
  %v278 = vpow.pop %v277
  %v279 = vsub.f32 %v268, 1.0
  %v280 = vsub.f32 %v270, 1.0
  %v281 = vsub.f32 %v272, 1.0
  %v282 = vsub.f32 %v274, 1.0
  %v283 = vsub.f32 %v276, 1.0
  %v284 = vsub.f32 %v278, 1.0
  %v285 = vsel %vm261, %v255, %v279
  %v286 = vsel %vm262, %v256, %v280
  %v287 = vsel %vm263, %v257, %v281
  %v288 = vsel %vm264, %v258, %v282
  %v289 = vsel %vm265, %v259, %v283
  %v290 = vsel %vm266, %v260, %v284
  %v291 = vlaneseq
  %v292 = vshrl.u32 %v291, 7
  %v293 = vsub.s32 0, %v292
  %v294 = vrot.slane %v45, %v293
  %v295 = vlaneseq
  %v296 = vshrl.u32 %v295, 7
  %v297 = vsub.s32 0, %v296
  %v298 = vrot.slane %v46, %v297
  %v299 = vmul.f32 %v294, %v285
  %v300 = vmul.f32 %v294, %v286
  %v301 = vmul.f32 %v294, %v287
  %v302 = vmul.f32 %v298, %v288
  %v303 = vmul.f32 %v298, %v289
  %v304 = vmul.f32 %v298, %v290
  %v305 = vlaneseq
  %v306 = vshrl.u32 %v305, 7
  %v307 = vsub.s32 1, %v306
  %v308 = vrot.slane %v45, %v307
  %v309 = vlaneseq
  %v310 = vshrl.u32 %v309, 7
  %v311 = vsub.s32 1, %v310
  %v312 = vrot.slane %v46, %v311
  %v313 = vadd.f32 %v299, %v308
  %v314 = vadd.f32 %v300, %v308
  %v315 = vadd.f32 %v301, %v308
  %v316 = vadd.f32 %v302, %v312
  %v317 = vadd.f32 %v303, %v312
  %v318 = vadd.f32 %v304, %v312
  %v319 = vpack.c.bf16 %v314, %v313
  %v320 = vpack.c.bf16 %v315, %v315
  %v321 = vpack.c.bf16 %v317, %v316
  %v322 = vpack.c.bf16 %v318, %v318
  %v327 = vunpack.c.l.b16 %v319
  %v328 = vunpack.c.h.b16 %v319
  %v329 = vunpack.c.l.b16 %v320
  %v330 = vunpack.c.l.b16 %v321
  %v331 = vunpack.c.h.b16 %v321
  %v332 = vunpack.c.l.b16 %v322
  %v333 = vpack.c.b16 %v327, %v327
  %v334 = vpack.c.b16 %v328, %v328
  %v335 = vpack.c.b16 %v329, %v329
  %v336 = vpack.c.b16 %v330, %v330
  %v337 = vpack.c.b16 %v331, %v331
  %v338 = vpack.c.b16 %v332, %v332
  %345 = vst.msk [vmem:[#allocation2 + $0x4] sm:$0xf] %vm24, %v333
  %346 = vst.msk [vmem:[#allocation2 + $0x8] sm:$0xf] %vm24, %v334
  %v347 = vld [vmem:[#allocation2 + $0xc] sm:$0x1]
  %v348 = vsel %vm35, %v335, %v347
  %349 = vst [vmem:[#allocation2 + $0xc] sm:$0x1] %v348
  %350 = vst.msk [vmem:[#allocation2 + $0x18] sm:$0xf] %vm24, %v336
  %351 = vst.msk [vmem:[#allocation2 + $0x1c] sm:$0xf] %vm24, %v337
  %v352 = vld [vmem:[#allocation2 + $0x20] sm:$0x1]
  %v353 = vsel %vm35, %v338, %v352
  %354 = vst [vmem:[#allocation2 + $0x20] sm:$0x1] %v353
  %v355 = vld [vmem:[%s3] sm:$0xf]
  %v356 = vld [vmem:[%s3 + $0x4] sm:$0xf]
  %v357 = vld [vmem:[%s3 + $0x8] sm:$0xf]
  %v358 = vld [vmem:[#allocation2] sm:$0x8]
  %v359 = vld [vmem:[#allocation2 + $0x4] sm:$0xf]
  %v360 = vld [vmem:[#allocation2 + $0x8] sm:$0xf]
  %v361 = vld [vmem:[#allocation2 + $0x14] sm:$0x8]
  %v362 = vld [vmem:[#allocation2 + $0x18] sm:$0xf]
  %v363 = vld [vmem:[#allocation2 + $0x1c] sm:$0xf]
  %v364 = vld [vmem:[#allocation2 + $0xc] sm:$0x1]
  %v365 = vld [vmem:[#allocation2 + $0x20] sm:$0x1]
  %v372 = vunpack.c.l.b16 %v358
  %v373 = vunpack.c.l.b16 %v359
  %v374 = vunpack.c.l.b16 %v360
  %v375 = vunpack.c.l.b16 %v361
  %v376 = vunpack.c.l.b16 %v362
  %v377 = vunpack.c.l.b16 %v363
  %v378 = vpack.c.b16 %v373, %v372
  %v379 = vpack.c.b16 %v374, %v374
  %v380 = vpack.c.b16 %v376, %v375
  %v381 = vpack.c.b16 %v377, %v377
  %382 = vrot.lane.b32.xlu0 %v378, 120
  %v383 = vpop.permute.xlu0 %382
  %384 = vrot.lane.b32.xlu0 %v379, 120
  %v385 = vpop.permute.xlu0 %384
  %386 = vrot.lane.b32.xlu0 %v380, 120
  %v387 = vpop.permute.xlu0 %386
  %388 = vrot.lane.b32.xlu0 %v381, 120
  %v389 = vpop.permute.xlu0 %388
  %v392 = vunpack.c.l.b16 %v364
  %v393 = vunpack.c.l.b16 %v365
  %v394 = vpack.c.b16 %v374, %v373
  %v395 = vpack.c.b16 %v392, %v392
  %v396 = vpack.c.b16 %v377, %v376
  %v397 = vpack.c.b16 %v393, %v393
  %vm398 = vsmask.f32 3328
  %v400 = vshrl.u32 %v394, 16
  %v402 = vrot.slane %v400, 4
  %v403 = vshll.u32 %v394, 16
  %v405 = vrot.slane %v403, 5
  %v406 = vor.u32 %v402, %v405
  %v408 = vshll.u32 %v395, 16
  %v410 = vrot.slane %v408, 5
  %v411 = vsel %vm398, %v406, %v410
  %v413 = vshrl.u32 %v396, 16
  %v415 = vrot.slane %v413, 4
  %v416 = vshll.u32 %v396, 16
  %v418 = vrot.slane %v416, 5
  %v419 = vor.u32 %v415, %v418
  %v421 = vshll.u32 %v397, 16
  %v423 = vrot.slane %v421, 5
  %v424 = vsel %vm398, %v419, %v423
  %425 = vrot.lane.b32.xlu0 %v406, 8
  %v426 = vpop.permute.xlu0 %425
  %427 = vrot.lane.b32.xlu0 %v411, 8
  %v428 = vpop.permute.xlu0 %427
  %429 = vrot.lane.b32.xlu0 %v419, 8
  %v430 = vpop.permute.xlu0 %429
  %431 = vrot.lane.b32.xlu0 %v424, 8
  %v432 = vpop.permute.xlu0 %431
  %v435 = vsel %vm100, %v383, %v426
  %v438 = vsel %vm100, %v385, %v428
  %v441 = vsel %vm100, %v387, %v430
  %v444 = vsel %vm100, %v389, %v432
  %v445 = vsel %vm130, %v435, %v426
  %v446 = vsel %vm130, %v438, %v428
  %v447 = vsel %vm130, %v441, %v430
  %v448 = vsel %vm130, %v444, %v432
  %vm449 = vsmask.f32 4352
  %v450 = vshrl.u32 %v445, 16
  %v452 = vrot.slane %v450, 3
  %v453 = vshll.u32 %v445, 16
  %v455 = vrot.slane %v453, 4
  %v456 = vor.u32 %v452, %v455
  %v457 = vshrl.u32 %v446, 16
  %v459 = vrot.slane %v457, 3
  %v460 = vshll.u32 %v446, 16
  %v462 = vrot.slane %v460, 4
  %v463 = vor.u32 %v459, %v462
  %v464 = vsel %vm449, %v456, %v463
  %v468 = vunpack.c.l.b16 %v355
  %v469 = vunpack.c.l.b16 %v356
  %v470 = vunpack.c.l.b16 %v357
  %v471 = vpack.c.b16 %v469, %v468
  %v472 = vpack.c.b16 %v470, %v470
  %vm474 = vcmask 195584
  %v476 = vsel %vm474, %v464, 0
  %v479 = vsel %vm474, %v459, 0
  %vm481 = vcmask 1043456
  %v483 = vsel %vm481, %v472, 0
  %485 = vmatprep.subr.bf16.mxu0 0
  %486 = vmatpush1.bf16.msra.mxu0 %v471
  %487 = vmatprep.subr.bf16.mxu0 0
  %488 = vmatpush1.bf16.msra.mxu0 %v483
  %489 = vmatprep.subr.bf16.mxu0 0
  %490 = vmatpush1.bf16.msra.mxu0 0
  %491 = vmatprep.subr.bf16.mxu0 0
  %492 = vmatpush1.bf16.msra.mxu0 0
  %493 = vmatprep.subr.bf16.mxu0 0
  %494 = vmatpush1.bf16.msra.mxu0 0
  %495 = vmatprep.subr.bf16.mxu0 0
  %496 = vmatpush1.bf16.msra.mxu0 0
  %497 = vmatprep.subr.bf16.mxu0 0
  %498 = vmatpush1.bf16.msra.mxu0 0
  %499 = vmatprep.subr.bf16.mxu0 0
  %500 = vmatpush1.bf16.msra.mxu0 0
  %501 = vmatprep.subr.bf16.mxu0 0
  %502 = vmatpush1.bf16.msra.mxu0 0
  %503 = vmatprep.subr.bf16.mxu0 0
  %504 = vmatpush1.bf16.msra.mxu0 0
  %505 = vmatprep.subr.bf16.mxu0 0
  %506 = vmatpush1.bf16.msra.mxu0 0
  %507 = vmatprep.subr.bf16.mxu0 0
  %508 = vmatpush1.bf16.msra.mxu0 0
  %509 = vmatprep.subr.bf16.mxu0 0
  %510 = vmatpush1.bf16.msra.mxu0 0
  %511 = vmatprep.subr.bf16.mxu0 0
  %512 = vmatpush1.bf16.msra.mxu0 0
  %513 = vmatprep.subr.bf16.mxu0 0
  %514 = vmatpush1.bf16.msra.mxu0 0
  %515 = vmatprep.subr.bf16.mxu0 0
  %516 = vmatpush1.bf16.msra.mxu0 0
  %517 = vmatprep.mubr.bf16.mxu0 0
  %518 = vmatmul.mubr.bf16.gmra.mrb[0].mxu0 %v476
  %v519 = vpop.f32.mrb[0].mxu0
  %v520 = vadd.f32 0.0, %v519
  %v521 = vpop.f32.mrb[0].mxu0
  %v522 = vpop.f32.mrb[0].mxu0
  %v523 = vadd.f32 0.0, %v522
  %v524 = vpop.f32.mrb[0].mxu0
  %525 = vmatprep.mubr.bf16.mxu0 0
  %526 = vmatmul.mubr.bf16.gmra.mrb[0].mxu0 %v479
  %v527 = vpop.f32.mrb[0].mxu0
  %v528 = vadd.f32 0.0, %v527
  %v529 = vpop.f32.mrb[0].mxu0
  %v530 = vpop.f32.mrb[0].mxu0
  %v531 = vpop.f32.mrb[0].mxu0
  %532 = vdwg.mxu0
  %v533 = vshrl.u32 %v447, 16
  %v535 = vrot.slane %v533, 3
  %v536 = vshll.u32 %v447, 16
  %v538 = vrot.slane %v536, 4
  %v539 = vor.u32 %v535, %v538
  %v540 = vshrl.u32 %v448, 16
  %v542 = vrot.slane %v540, 3
  %v543 = vshll.u32 %v448, 16
  %v545 = vrot.slane %v543, 4
  %v546 = vor.u32 %v542, %v545
  %v547 = vsel %vm449, %v539, %v546
  %v549 = vsel %vm474, %v547, 0
  %v552 = vsel %vm474, %v542, 0
  %554 = vmatprep.subr.bf16.mxu0 0
  %555 = vmatpush1.bf16.msra.mxu0 %v471
  %556 = vmatprep.subr.bf16.mxu0 0
  %557 = vmatpush1.bf16.msra.mxu0 %v483
  %558 = vmatprep.subr.bf16.mxu0 0
  %559 = vmatpush1.bf16.msra.mxu0 0
  %560 = vmatprep.subr.bf16.mxu0 0
  %561 = vmatpush1.bf16.msra.mxu0 0
  %562 = vmatprep.subr.bf16.mxu0 0
  %563 = vmatpush1.bf16.msra.mxu0 0
  %564 = vmatprep.subr.bf16.mxu0 0
  %565 = vmatpush1.bf16.msra.mxu0 0
  %566 = vmatprep.subr.bf16.mxu0 0
  %567 = vmatpush1.bf16.msra.mxu0 0
  %568 = vmatprep.subr.bf16.mxu0 0
  %569 = vmatpush1.bf16.msra.mxu0 0
  %570 = vmatprep.subr.bf16.mxu0 0
  %571 = vmatpush1.bf16.msra.mxu0 0
  %572 = vmatprep.subr.bf16.mxu0 0
  %573 = vmatpush1.bf16.msra.mxu0 0
  %574 = vmatprep.subr.bf16.mxu0 0
  %575 = vmatpush1.bf16.msra.mxu0 0
  %576 = vmatprep.subr.bf16.mxu0 0
  %577 = vmatpush1.bf16.msra.mxu0 0
  %578 = vmatprep.subr.bf16.mxu0 0
  %579 = vmatpush1.bf16.msra.mxu0 0
  %580 = vmatprep.subr.bf16.mxu0 0
  %581 = vmatpush1.bf16.msra.mxu0 0
  %582 = vmatprep.subr.bf16.mxu0 0
  %583 = vmatpush1.bf16.msra.mxu0 0
  %584 = vmatprep.subr.bf16.mxu0 0
  %585 = vmatpush1.bf16.msra.mxu0 0
  %586 = vmatprep.mubr.bf16.mxu0 0
  %587 = vmatmul.mubr.bf16.gmra.mrb[0].mxu0 %v549
  %v588 = vpop.f32.mrb[0].mxu0
  %v589 = vadd.f32 0.0, %v588
  %v590 = vpop.f32.mrb[0].mxu0
  %v591 = vpop.f32.mrb[0].mxu0
  %v592 = vadd.f32 0.0, %v591
  %v593 = vpop.f32.mrb[0].mxu0
  %594 = vmatprep.mubr.bf16.mxu0 0
  %595 = vmatmul.mubr.bf16.gmra.mrb[0].mxu0 %v552
  %v596 = vpop.f32.mrb[0].mxu0
  %v597 = vadd.f32 0.0, %v596
  %v598 = vpop.f32.mrb[0].mxu0
  %v599 = vpop.f32.mrb[0].mxu0
  %v600 = vpop.f32.mrb[0].mxu0
  %601 = vdwg.mxu0
  %v602 = vrot.slane %v403, 1
  %v603 = vor.u32 %v400, %v602
  %v604 = vrot.slane %v408, 1
  %v605 = vsel %vm111, %v603, %v604
  %v606 = vshrl.u32 %v395, 16
  %v608 = vrot.slane %v416, 1
  %v609 = vor.u32 %v413, %v608
  %v610 = vrot.slane %v421, 1
  %v611 = vsel %vm111, %v609, %v610
  %v612 = vshrl.u32 %v397, 16
  %614 = vrot.lane.b32.xlu0 %v605, 16
  %v615 = vpop.permute.xlu0 %614
  %616 = vrot.lane.b32.xlu0 %v606, 16
  %v617 = vpop.permute.xlu0 %616
  %618 = vrot.lane.b32.xlu0 %v611, 16
  %v619 = vpop.permute.xlu0 %618
  %620 = vrot.lane.b32.xlu0 %v612, 16
  %v621 = vpop.permute.xlu0 %620
  %v623 = vsel %vm130, %v394, %v615
  %v625 = vsel %vm130, %v395, %v617
  %v627 = vsel %vm130, %v396, %v619
  %v629 = vsel %vm130, %v397, %v621
  %v630 = vsel %vm474, %v623, 0
  %v632 = vsel %vm474, %v625, 0
  %634 = vmatprep.subr.bf16.mxu0 0
  %635 = vmatpush1.bf16.msra.mxu0 %v471
  %636 = vmatprep.subr.bf16.mxu0 0
  %637 = vmatpush1.bf16.msra.mxu0 %v483
  %638 = vmatprep.subr.bf16.mxu0 0
  %639 = vmatpush1.bf16.msra.mxu0 0
  %640 = vmatprep.subr.bf16.mxu0 0
  %641 = vmatpush1.bf16.msra.mxu0 0
  %642 = vmatprep.subr.bf16.mxu0 0
  %643 = vmatpush1.bf16.msra.mxu0 0
  %644 = vmatprep.subr.bf16.mxu0 0
  %645 = vmatpush1.bf16.msra.mxu0 0
  %646 = vmatprep.subr.bf16.mxu0 0
  %647 = vmatpush1.bf16.msra.mxu0 0
  %648 = vmatprep.subr.bf16.mxu0 0
  %649 = vmatpush1.bf16.msra.mxu0 0
  %650 = vmatprep.subr.bf16.mxu0 0
  %651 = vmatpush1.bf16.msra.mxu0 0
  %652 = vmatprep.subr.bf16.mxu0 0
  %653 = vmatpush1.bf16.msra.mxu0 0
  %654 = vmatprep.subr.bf16.mxu0 0
  %655 = vmatpush1.bf16.msra.mxu0 0
  %656 = vmatprep.subr.bf16.mxu0 0
  %657 = vmatpush1.bf16.msra.mxu0 0
  %658 = vmatprep.subr.bf16.mxu0 0
  %659 = vmatpush1.bf16.msra.mxu0 0
  %660 = vmatprep.subr.bf16.mxu0 0
  %661 = vmatpush1.bf16.msra.mxu0 0
  %662 = vmatprep.subr.bf16.mxu0 0
  %663 = vmatpush1.bf16.msra.mxu0 0
  %664 = vmatprep.subr.bf16.mxu0 0
  %665 = vmatpush1.bf16.msra.mxu0 0
  %666 = vmatprep.mubr.bf16.mxu0 0
  %667 = vmatmul.mubr.bf16.gmra.mrb[0].mxu0 %v630
  %v668 = vpop.f32.mrb[0].mxu0
  %v669 = vadd.f32 0.0, %v668
  %v670 = vpop.f32.mrb[0].mxu0
  %v671 = vpop.f32.mrb[0].mxu0
  %v672 = vadd.f32 0.0, %v671
  %v673 = vpop.f32.mrb[0].mxu0
  %674 = vmatprep.mubr.bf16.mxu0 0
  %675 = vmatmul.mubr.bf16.gmra.mrb[0].mxu0 %v632
  %v676 = vpop.f32.mrb[0].mxu0
  %v677 = vadd.f32 0.0, %v676
  %v678 = vpop.f32.mrb[0].mxu0
  %v679 = vpop.f32.mrb[0].mxu0
  %v680 = vpop.f32.mrb[0].mxu0
  %681 = vdwg.mxu0
  %v682 = vsel %vm474, %v627, 0
  %v684 = vsel %vm474, %v629, 0
  %686 = vmatprep.subr.bf16.mxu0 0
  %687 = vmatpush1.bf16.msra.mxu0 %v471
  %688 = vmatprep.subr.bf16.mxu0 0
  %689 = vmatpush1.bf16.msra.mxu0 %v483
  %690 = vmatprep.subr.bf16.mxu0 0
  %691 = vmatpush1.bf16.msra.mxu0 0
  %692 = vmatprep.subr.bf16.mxu0 0
  %693 = vmatpush1.bf16.msra.mxu0 0
  %694 = vmatprep.subr.bf16.mxu0 0
  %695 = vmatpush1.bf16.msra.mxu0 0
  %696 = vmatprep.subr.bf16.mxu0 0
  %697 = vmatpush1.bf16.msra.mxu0 0
  %698 = vmatprep.subr.bf16.mxu0 0
  %699 = vmatpush1.bf16.msra.mxu0 0
  %700 = vmatprep.subr.bf16.mxu0 0
  %701 = vmatpush1.bf16.msra.mxu0 0
  %702 = vmatprep.subr.bf16.mxu0 0
  %703 = vmatpush1.bf16.msra.mxu0 0
  %704 = vmatprep.subr.bf16.mxu0 0
  %705 = vmatpush1.bf16.msra.mxu0 0
  %706 = vmatprep.subr.bf16.mxu0 0
  %707 = vmatpush1.bf16.msra.mxu0 0
  %708 = vmatprep.subr.bf16.mxu0 0
  %709 = vmatpush1.bf16.msra.mxu0 0
  %710 = vmatprep.subr.bf16.mxu0 0
  %711 = vmatpush1.bf16.msra.mxu0 0
  %712 = vmatprep.subr.bf16.mxu0 0
  %713 = vmatpush1.bf16.msra.mxu0 0
  %714 = vmatprep.subr.bf16.mxu0 0
  %715 = vmatpush1.bf16.msra.mxu0 0
  %716 = vmatprep.subr.bf16.mxu0 0
  %717 = vmatpush1.bf16.msra.mxu0 0
  %718 = vmatprep.mubr.bf16.mxu0 0
  %719 = vmatmul.mubr.bf16.gmra.mrb[0].mxu0 %v682
  %v720 = vpop.f32.mrb[0].mxu0
  %v721 = vadd.f32 0.0, %v720
  %v722 = vpop.f32.mrb[0].mxu0
  %v723 = vpop.f32.mrb[0].mxu0
  %v724 = vadd.f32 0.0, %v723
  %v725 = vpop.f32.mrb[0].mxu0
  %726 = vmatprep.mubr.bf16.mxu0 0
  %727 = vmatmul.mubr.bf16.gmra.mrb[0].mxu0 %v684
  %v728 = vpop.f32.mrb[0].mxu0
  %v729 = vadd.f32 0.0, %v728
  %v730 = vpop.f32.mrb[0].mxu0
  %v731 = vpop.f32.mrb[0].mxu0
  %v732 = vpop.f32.mrb[0].mxu0
  %733 = vdwg.mxu0
  %740 = vrot.lane.b32.xlu0 %v669, 8
  %v741 = vpop.permute.xlu0 %740
  %742 = vrot.lane.b32.xlu0 %v672, 8
  %v743 = vpop.permute.xlu0 %742
  %744 = vrot.lane.b32.xlu0 %v677, 8
  %v745 = vpop.permute.xlu0 %744
  %746 = vrot.lane.b32.xlu0 %v721, 8
  %v747 = vpop.permute.xlu0 %746
  %748 = vrot.lane.b32.xlu0 %v724, 8
  %v749 = vpop.permute.xlu0 %748
  %750 = vrot.lane.b32.xlu0 %v729, 8
  %v751 = vpop.permute.xlu0 %750
  %v758 = vsel %vm100, %v520, %v741
  %v759 = vsel %vm100, %v523, %v743
  %v760 = vsel %vm100, %v528, %v745
  %v761 = vsel %vm100, %v589, %v747
  %v762 = vsel %vm100, %v592, %v749
  %v763 = vsel %vm100, %v597, %v751
  %v764 = vlaneseq
  %v765 = vshrl.u32 %v764, 7
  %v766 = vsub.s32 1, %v765
  %v767 = vrot.slane %v47, %v766
  %v768 = vadd.f32 %v758, %v767
  %v769 = vadd.f32 %v759, %v767
  %v770 = vadd.f32 %v760, %v767
  %v771 = vadd.f32 %v761, %v767
  %v772 = vadd.f32 %v762, %v767
  %v773 = vadd.f32 %v763, %v767
  %vm774 = vcmp.gt.f32.partialorder %v768, 0.0
  %vm775 = vcmp.gt.f32.partialorder %v769, 0.0
  %vm776 = vcmp.gt.f32.partialorder %v770, 0.0
  %vm777 = vcmp.gt.f32.partialorder %v771, 0.0
  %vm778 = vcmp.gt.f32.partialorder %v772, 0.0
  %vm779 = vcmp.gt.f32.partialorder %v773, 0.0
  %v780 = vmul.f32 %v768, 1.442695
  %v781 = vpow.pop %v780
  %v782 = vmul.f32 %v769, 1.442695
  %v783 = vpow.pop %v782
  %v784 = vmul.f32 %v770, 1.442695
  %v785 = vpow.pop %v784
  %v786 = vmul.f32 %v771, 1.442695
  %v787 = vpow.pop %v786
  %v788 = vmul.f32 %v772, 1.442695
  %v789 = vpow.pop %v788
  %v790 = vmul.f32 %v773, 1.442695
  %v791 = vpow.pop %v790
  %v792 = vsub.f32 %v781, 1.0
  %v793 = vsub.f32 %v783, 1.0
  %v794 = vsub.f32 %v785, 1.0
  %v795 = vsub.f32 %v787, 1.0
  %v796 = vsub.f32 %v789, 1.0
  %v797 = vsub.f32 %v791, 1.0
  %v798 = vsel %vm774, %v768, %v792
  %v799 = vsel %vm775, %v769, %v793
  %v800 = vsel %vm776, %v770, %v794
  %v801 = vsel %vm777, %v771, %v795
  %v802 = vsel %vm778, %v772, %v796
  %v803 = vsel %vm779, %v773, %v797
  %v804 = vld [vmem:[%s4] sm:$0xf]
  %v805 = vpack.c.bf16 %v799, %v798
  %v806 = vpack.c.bf16 %v800, %v800
  %v807 = vpack.c.bf16 %v802, %v801
  %v808 = vpack.c.bf16 %v803, %v803
  %v810 = vsel %vm100, %v805, 0
  %v813 = vsel %vm100, %v806, 0
  %v816 = vsel %vm481, %v804, 0
  %818 = vmatprep.subr.bf16.mxu0 0
  %819 = vmatpush1.bf16.msra.mxu0 %v816
  %820 = vmatprep.subr.bf16.mxu0 0
  %821 = vmatpush1.bf16.msra.mxu0 0
  %822 = vmatprep.subr.bf16.mxu0 0
  %823 = vmatpush1.bf16.msra.mxu0 0
  %824 = vmatprep.subr.bf16.mxu0 0
  %825 = vmatpush1.bf16.msra.mxu0 0
  %826 = vmatprep.subr.bf16.mxu0 0
  %827 = vmatpush1.bf16.msra.mxu0 0
  %828 = vmatprep.subr.bf16.mxu0 0
  %829 = vmatpush1.bf16.msra.mxu0 0
  %830 = vmatprep.subr.bf16.mxu0 0
  %831 = vmatpush1.bf16.msra.mxu0 0
  %832 = vmatprep.subr.bf16.mxu0 0
  %833 = vmatpush1.bf16.msra.mxu0 0
  %834 = vmatprep.subr.bf16.mxu0 0
  %835 = vmatpush1.bf16.msra.mxu0 0
  %836 = vmatprep.subr.bf16.mxu0 0
  %837 = vmatpush1.bf16.msra.mxu0 0
  %838 = vmatprep.subr.bf16.mxu0 0
  %839 = vmatpush1.bf16.msra.mxu0 0
  %840 = vmatprep.subr.bf16.mxu0 0
  %841 = vmatpush1.bf16.msra.mxu0 0
  %842 = vmatprep.subr.bf16.mxu0 0
  %843 = vmatpush1.bf16.msra.mxu0 0
  %844 = vmatprep.subr.bf16.mxu0 0
  %845 = vmatpush1.bf16.msra.mxu0 0
  %846 = vmatprep.subr.bf16.mxu0 0
  %847 = vmatpush1.bf16.msra.mxu0 0
  %848 = vmatprep.subr.bf16.mxu0 0
  %849 = vmatpush1.bf16.msra.mxu0 0
  %850 = vmatprep.mubr.bf16.mxu0 0
  %851 = vmatmul.mubr.bf16.gmra.mrb[0].mxu0 %v810
  %v852 = vpop.f32.mrb[0].mxu0
  %v853 = vadd.f32 0.0, %v852
  %v854 = vpop.f32.mrb[0].mxu0
  %v855 = vpop.f32.mrb[0].mxu0
  %v856 = vadd.f32 0.0, %v855
  %v857 = vpop.f32.mrb[0].mxu0
  %858 = vmatprep.mubr.bf16.mxu0 0
  %859 = vmatmul.mubr.bf16.gmra.mrb[0].mxu0 %v813
  %v860 = vpop.f32.mrb[0].mxu0
  %v861 = vadd.f32 0.0, %v860
  %v862 = vpop.f32.mrb[0].mxu0
  %v863 = vpop.f32.mrb[0].mxu0
  %v864 = vpop.f32.mrb[0].mxu0
  %865 = vdwg.mxu0
  %v867 = vsel %vm100, %v807, 0
  %v870 = vsel %vm100, %v808, 0
  %872 = vmatprep.subr.bf16.mxu0 0
  %873 = vmatpush1.bf16.msra.mxu0 %v816
  %874 = vmatprep.subr.bf16.mxu0 0
  %875 = vmatpush1.bf16.msra.mxu0 0
  %876 = vmatprep.subr.bf16.mxu0 0
  %877 = vmatpush1.bf16.msra.mxu0 0
  %878 = vmatprep.subr.bf16.mxu0 0
  %879 = vmatpush1.bf16.msra.mxu0 0
  %880 = vmatprep.subr.bf16.mxu0 0
  %881 = vmatpush1.bf16.msra.mxu0 0
  %882 = vmatprep.subr.bf16.mxu0 0
  %883 = vmatpush1.bf16.msra.mxu0 0
  %884 = vmatprep.subr.bf16.mxu0 0
  %885 = vmatpush1.bf16.msra.mxu0 0
  %886 = vmatprep.subr.bf16.mxu0 0
  %887 = vmatpush1.bf16.msra.mxu0 0
  %888 = vmatprep.subr.bf16.mxu0 0
  %889 = vmatpush1.bf16.msra.mxu0 0
  %890 = vmatprep.subr.bf16.mxu0 0
  %891 = vmatpush1.bf16.msra.mxu0 0
  %892 = vmatprep.subr.bf16.mxu0 0
  %893 = vmatpush1.bf16.msra.mxu0 0
  %894 = vmatprep.subr.bf16.mxu0 0
  %895 = vmatpush1.bf16.msra.mxu0 0
  %896 = vmatprep.subr.bf16.mxu0 0
  %897 = vmatpush1.bf16.msra.mxu0 0
  %898 = vmatprep.subr.bf16.mxu0 0
  %899 = vmatpush1.bf16.msra.mxu0 0
  %900 = vmatprep.subr.bf16.mxu0 0
  %901 = vmatpush1.bf16.msra.mxu0 0
  %902 = vmatprep.subr.bf16.mxu0 0
  %903 = vmatpush1.bf16.msra.mxu0 0
  %904 = vmatprep.mubr.bf16.mxu0 0
  %905 = vmatmul.mubr.bf16.gmra.mrb[0].mxu0 %v867
  %v906 = vpop.f32.mrb[0].mxu0
  %v907 = vadd.f32 0.0, %v906
  %v908 = vpop.f32.mrb[0].mxu0
  %v909 = vpop.f32.mrb[0].mxu0
  %v910 = vadd.f32 0.0, %v909
  %v911 = vpop.f32.mrb[0].mxu0
  %912 = vmatprep.mubr.bf16.mxu0 0
  %913 = vmatmul.mubr.bf16.gmra.mrb[0].mxu0 %v870
  %v914 = vpop.f32.mrb[0].mxu0
  %v915 = vadd.f32 0.0, %v914
  %v916 = vpop.f32.mrb[0].mxu0
  %v917 = vpop.f32.mrb[0].mxu0
  %v918 = vpop.f32.mrb[0].mxu0
  %919 = vdwg.mxu0
  %922 = vrot.lane.b32.xlu0 %v805, 120
  %v923 = vpop.permute.xlu0 %922
  %924 = vrot.lane.b32.xlu0 %v806, 120
  %v925 = vpop.permute.xlu0 %924
  %v927 = vsel %vm100, %v923, 0
  %v930 = vsel %vm100, %v925, 0
  %932 = vmatprep.subr.bf16.mxu0 0
  %933 = vmatpush1.bf16.msra.mxu0 %v816
  %934 = vmatprep.subr.bf16.mxu0 0
  %935 = vmatpush1.bf16.msra.mxu0 0
  %936 = vmatprep.subr.bf16.mxu0 0
  %937 = vmatpush1.bf16.msra.mxu0 0
  %938 = vmatprep.subr.bf16.mxu0 0
  %939 = vmatpush1.bf16.msra.mxu0 0
  %940 = vmatprep.subr.bf16.mxu0 0
  %941 = vmatpush1.bf16.msra.mxu0 0
  %942 = vmatprep.subr.bf16.mxu0 0
  %943 = vmatpush1.bf16.msra.mxu0 0
  %944 = vmatprep.subr.bf16.mxu0 0
  %945 = vmatpush1.bf16.msra.mxu0 0
  %946 = vmatprep.subr.bf16.mxu0 0
  %947 = vmatpush1.bf16.msra.mxu0 0
  %948 = vmatprep.subr.bf16.mxu0 0
  %949 = vmatpush1.bf16.msra.mxu0 0
  %950 = vmatprep.subr.bf16.mxu0 0
  %951 = vmatpush1.bf16.msra.mxu0 0
  %952 = vmatprep.subr.bf16.mxu0 0
  %953 = vmatpush1.bf16.msra.mxu0 0
  %954 = vmatprep.subr.bf16.mxu0 0
  %955 = vmatpush1.bf16.msra.mxu0 0
  %956 = vmatprep.subr.bf16.mxu0 0
  %957 = vmatpush1.bf16.msra.mxu0 0
  %958 = vmatprep.subr.bf16.mxu0 0
  %959 = vmatpush1.bf16.msra.mxu0 0
  %960 = vmatprep.subr.bf16.mxu0 0
  %961 = vmatpush1.bf16.msra.mxu0 0
  %962 = vmatprep.subr.bf16.mxu0 0
  %963 = vmatpush1.bf16.msra.mxu0 0
  %964 = vmatprep.mubr.bf16.mxu0 0
  %965 = vmatmul.mubr.bf16.gmra.mrb[0].mxu0 %v927
  %v966 = vpop.f32.mrb[0].mxu0
  %v967 = vadd.f32 0.0, %v966
  %v968 = vpop.f32.mrb[0].mxu0
  %v969 = vpop.f32.mrb[0].mxu0
  %v970 = vadd.f32 0.0, %v969
  %v971 = vpop.f32.mrb[0].mxu0
  %972 = vmatprep.mubr.bf16.mxu0 0
  %973 = vmatmul.mubr.bf16.gmra.mrb[0].mxu0 %v930
  %v974 = vpop.f32.mrb[0].mxu0
  %v975 = vadd.f32 0.0, %v974
  %v976 = vpop.f32.mrb[0].mxu0
  %v977 = vpop.f32.mrb[0].mxu0
  %v978 = vpop.f32.mrb[0].mxu0
  %979 = vdwg.mxu0
  %982 = vrot.lane.b32.xlu0 %v807, 120
  %v983 = vpop.permute.xlu0 %982
  %984 = vrot.lane.b32.xlu0 %v808, 120
  %v985 = vpop.permute.xlu0 %984
  %v987 = vsel %vm100, %v983, 0
  %v990 = vsel %vm100, %v985, 0
  %992 = vmatprep.subr.bf16.mxu0 0
  %993 = vmatpush1.bf16.msra.mxu0 %v816
  %994 = vmatprep.subr.bf16.mxu0 0
  %995 = vmatpush1.bf16.msra.mxu0 0
  %996 = vmatprep.subr.bf16.mxu0 0
  %997 = vmatpush1.bf16.msra.mxu0 0
  %998 = vmatprep.subr.bf16.mxu0 0
  %999 = vmatpush1.bf16.msra.mxu0 0
  %1000 = vmatprep.subr.bf16.mxu0 0
  %1001 = vmatpush1.bf16.msra.mxu0 0
  %1002 = vmatprep.subr.bf16.mxu0 0
  %1003 = vmatpush1.bf16.msra.mxu0 0
  %1004 = vmatprep.subr.bf16.mxu0 0
  %1005 = vmatpush1.bf16.msra.mxu0 0
  %1006 = vmatprep.subr.bf16.mxu0 0
  %1007 = vmatpush1.bf16.msra.mxu0 0
  %1008 = vmatprep.subr.bf16.mxu0 0
  %1009 = vmatpush1.bf16.msra.mxu0 0
  %1010 = vmatprep.subr.bf16.mxu0 0
  %1011 = vmatpush1.bf16.msra.mxu0 0
  %1012 = vmatprep.subr.bf16.mxu0 0
  %1013 = vmatpush1.bf16.msra.mxu0 0
  %1014 = vmatprep.subr.bf16.mxu0 0
  %1015 = vmatpush1.bf16.msra.mxu0 0
  %1016 = vmatprep.subr.bf16.mxu0 0
  %1017 = vmatpush1.bf16.msra.mxu0 0
  %1018 = vmatprep.subr.bf16.mxu0 0
  %1019 = vmatpush1.bf16.msra.mxu0 0
  %1020 = vmatprep.subr.bf16.mxu0 0
  %1021 = vmatpush1.bf16.msra.mxu0 0
  %1022 = vmatprep.subr.bf16.mxu0 0
  %1023 = vmatpush1.bf16.msra.mxu0 0
  %1024 = vmatprep.mubr.bf16.mxu0 0
  %1025 = vmatmul.mubr.bf16.gmra.mrb[0].mxu0 %v987
  %v1026 = vpop.f32.mrb[0].mxu0
  %v1027 = vadd.f32 0.0, %v1026
  %v1028 = vpop.f32.mrb[0].mxu0
  %v1029 = vpop.f32.mrb[0].mxu0
  %v1030 = vadd.f32 0.0, %v1029
  %v1031 = vpop.f32.mrb[0].mxu0
  %1032 = vmatprep.mubr.bf16.mxu0 0
  %1033 = vmatmul.mubr.bf16.gmra.mrb[0].mxu0 %v990
  %v1034 = vpop.f32.mrb[0].mxu0
  %v1035 = vadd.f32 0.0, %v1034
  %v1036 = vpop.f32.mrb[0].mxu0
  %v1037 = vpop.f32.mrb[0].mxu0
  %v1038 = vpop.f32.mrb[0].mxu0
  %1039 = vdwg.mxu0
  %1046 = vrot.lane.b32.xlu0 %v967, 8
  %v1047 = vpop.permute.xlu0 %1046
  %1048 = vrot.lane.b32.xlu0 %v970, 8
  %v1049 = vpop.permute.xlu0 %1048
  %1050 = vrot.lane.b32.xlu0 %v975, 8
  %v1051 = vpop.permute.xlu0 %1050
  %1052 = vrot.lane.b32.xlu0 %v1027, 8
  %v1053 = vpop.permute.xlu0 %1052
  %1054 = vrot.lane.b32.xlu0 %v1030, 8
  %v1055 = vpop.permute.xlu0 %1054
  %1056 = vrot.lane.b32.xlu0 %v1035, 8
  %v1057 = vpop.permute.xlu0 %1056
  %v1064 = vsel %vm100, %v853, %v1047
  %v1065 = vsel %vm100, %v856, %v1049
  %v1066 = vsel %vm100, %v861, %v1051
  %v1067 = vsel %vm100, %v907, %v1053
  %v1068 = vsel %vm100, %v910, %v1055
  %v1069 = vsel %vm100, %v915, %v1057
  %v1070 = vlaneseq
  %v1071 = vshrl.u32 %v1070, 7
  %v1072 = vsub.s32 2, %v1071
  %v1073 = vrot.slane %v47, %v1072
  %v1074 = vadd.f32 %v1064, %v1073
  %v1075 = vadd.f32 %v1065, %v1073
  %v1076 = vadd.f32 %v1066, %v1073
  %v1077 = vadd.f32 %v1067, %v1073
  %v1078 = vadd.f32 %v1068, %v1073
  %v1079 = vadd.f32 %v1069, %v1073
  %vm1080 = vcmp.gt.f32.partialorder %v1074, 0.0
  %vm1081 = vcmp.gt.f32.partialorder %v1075, 0.0
  %vm1082 = vcmp.gt.f32.partialorder %v1076, 0.0
  %vm1083 = vcmp.gt.f32.partialorder %v1077, 0.0
  %vm1084 = vcmp.gt.f32.partialorder %v1078, 0.0
  %vm1085 = vcmp.gt.f32.partialorder %v1079, 0.0
  %v1086 = vmul.f32 %v1074, 1.442695
  %v1087 = vpow.pop %v1086
  %v1088 = vmul.f32 %v1075, 1.442695
  %v1089 = vpow.pop %v1088
  %v1090 = vmul.f32 %v1076, 1.442695
  %v1091 = vpow.pop %v1090
  %v1092 = vmul.f32 %v1077, 1.442695
  %v1093 = vpow.pop %v1092
  %v1094 = vmul.f32 %v1078, 1.442695
  %v1095 = vpow.pop %v1094
  %v1096 = vmul.f32 %v1079, 1.442695
  %v1097 = vpow.pop %v1096
  %v1098 = vsub.f32 %v1087, 1.0
  %v1099 = vsub.f32 %v1089, 1.0
  %v1100 = vsub.f32 %v1091, 1.0
  %v1101 = vsub.f32 %v1093, 1.0
  %v1102 = vsub.f32 %v1095, 1.0
  %v1103 = vsub.f32 %v1097, 1.0
  %v1104 = vsel %vm1080, %v1074, %v1098
  %v1105 = vsel %vm1081, %v1075, %v1099
  %v1106 = vsel %vm1082, %v1076, %v1100
  %v1107 = vsel %vm1083, %v1077, %v1101
  %v1108 = vsel %vm1084, %v1078, %v1102
  %v1109 = vsel %vm1085, %v1079, %v1103
  %v1110 = vadd.f32 %v1104, %v313
  %v1111 = vadd.f32 %v1105, %v314
  %v1112 = vadd.f32 %v1106, %v315
  %v1113 = vadd.f32 %v1107, %v316
  %v1114 = vadd.f32 %v1108, %v317
  %v1115 = vadd.f32 %v1109, %v318
  %v1116 = vpack.c.bf16 %v1111, %v1110
  %v1117 = vpack.c.bf16 %v1112, %v1112
  %v1118 = vpack.c.bf16 %v1114, %v1113
  %v1119 = vpack.c.bf16 %v1115, %v1115
  %v1124 = vunpack.c.l.b16 %v1116
  %v1125 = vunpack.c.h.b16 %v1116
  %v1126 = vunpack.c.l.b16 %v1117
  %v1127 = vunpack.c.l.b16 %v1118
  %v1128 = vunpack.c.h.b16 %v1118
  %v1129 = vunpack.c.l.b16 %v1119
  %v1130 = vpack.c.b16 %v1124, %v1124
  %v1131 = vpack.c.b16 %v1125, %v1125
  %v1132 = vpack.c.b16 %v1126, %v1126
  %v1133 = vpack.c.b16 %v1127, %v1127
  %v1134 = vpack.c.b16 %v1128, %v1128
  %v1135 = vpack.c.b16 %v1129, %v1129
  %1142 = vst.msk [vmem:[#allocation2 + $0x4] sm:$0xf] %vm24, %v1130
  %1143 = vst.msk [vmem:[#allocation2 + $0x8] sm:$0xf] %vm24, %v1131
  %v1144 = vld [vmem:[#allocation2 + $0xc] sm:$0x1]
  %v1145 = vsel %vm35, %v1132, %v1144
  %1146 = vst [vmem:[#allocation2 + $0xc] sm:$0x1] %v1145
  %1147 = vst.msk [vmem:[#allocation2 + $0x18] sm:$0xf] %vm24, %v1133
  %1148 = vst.msk [vmem:[#allocation2 + $0x1c] sm:$0xf] %vm24, %v1134
  %v1149 = vld [vmem:[#allocation2 + $0x20] sm:$0x1]
  %v1150 = vsel %vm35, %v1135, %v1149
  %1151 = vst [vmem:[#allocation2 + $0x20] sm:$0x1] %v1150
  %s1152 = scalar_lea.vmem %s3, 12
  %v1153 = vld [vmem:[%s1152] sm:$0xf]
  %v1154 = vld [vmem:[%s1152 + $0x4] sm:$0xf]
  %v1155 = vld [vmem:[%s1152 + $0x8] sm:$0xf]
  %v1156 = vld [vmem:[#allocation2] sm:$0x8]
  %v1157 = vld [vmem:[#allocation2 + $0x4] sm:$0xf]
  %v1158 = vld [vmem:[#allocation2 + $0x8] sm:$0xf]
  %v1159 = vld [vmem:[#allocation2 + $0x14] sm:$0x8]
  %v1160 = vld [vmem:[#allocation2 + $0x18] sm:$0xf]
  %v1161 = vld [vmem:[#allocation2 + $0x1c] sm:$0xf]
  %v1162 = vld [vmem:[#allocation2 + $0xc] sm:$0x1]
  %v1163 = vld [vmem:[#allocation2 + $0x20] sm:$0x1]
  %v1170 = vunpack.c.l.b16 %v1156
  %v1171 = vunpack.c.l.b16 %v1157
  %v1172 = vunpack.c.l.b16 %v1158
  %v1173 = vunpack.c.l.b16 %v1159
  %v1174 = vunpack.c.l.b16 %v1160
  %v1175 = vunpack.c.l.b16 %v1161
  %v1176 = vpack.c.b16 %v1171, %v1170
  %v1177 = vpack.c.b16 %v1172, %v1172
  %v1178 = vpack.c.b16 %v1174, %v1173
  %v1179 = vpack.c.b16 %v1175, %v1175
  %1180 = vrot.lane.b32.xlu0 %v1176, 120
  %v1181 = vpop.permute.xlu0 %1180
  %1182 = vrot.lane.b32.xlu0 %v1177, 120
  %v1183 = vpop.permute.xlu0 %1182
  %1184 = vrot.lane.b32.xlu0 %v1178, 120
  %v1185 = vpop.permute.xlu0 %1184
  %1186 = vrot.lane.b32.xlu0 %v1179, 120
  %v1187 = vpop.permute.xlu0 %1186
  %v1190 = vunpack.c.l.b16 %v1162
  %v1191 = vunpack.c.l.b16 %v1163
  %v1192 = vpack.c.b16 %v1172, %v1171
  %v1193 = vpack.c.b16 %v1190, %v1190
  %v1194 = vpack.c.b16 %v1175, %v1174
  %v1195 = vpack.c.b16 %v1191, %v1191
  %vm1196 = vcmask 1042432
  %v1197 = vrot.slane %v1192, 5
  %v1198 = vrot.slane %v1193, 5
  %v1199 = vsel %vm1196, %v1197, %v1198
  %v1200 = vrot.slane %v1194, 5
  %v1201 = vrot.slane %v1195, 5
  %v1202 = vsel %vm1196, %v1200, %v1201
  %1203 = vrot.lane.b32.xlu0 %v1197, 8
  %v1204 = vpop.permute.xlu0 %1203
  %1205 = vrot.lane.b32.xlu0 %v1199, 8
  %v1206 = vpop.permute.xlu0 %1205
  %1207 = vrot.lane.b32.xlu0 %v1200, 8
  %v1208 = vpop.permute.xlu0 %1207
  %1209 = vrot.lane.b32.xlu0 %v1202, 8
  %v1210 = vpop.permute.xlu0 %1209
  %vm1211 = vsmask.f32 2304
  %v1213 = vshrl.u32 %v1192, 16
  %v1215 = vrot.slane %v1213, 5
  %v1216 = vshll.u32 %v1192, 16
  %v1218 = vrot.slane %v1216, 6
  %v1219 = vor.u32 %v1215, %v1218
  %v1221 = vshrl.u32 %v1193, 16
  %v1223 = vrot.slane %v1221, 5
  %v1224 = vshll.u32 %v1193, 16
  %v1226 = vrot.slane %v1224, 6
  %v1227 = vor.u32 %v1223, %v1226
  %v1228 = vsel %vm1211, %v1219, %v1227
  %v1230 = vshrl.u32 %v1194, 16
  %v1232 = vrot.slane %v1230, 5
  %v1233 = vshll.u32 %v1194, 16
  %v1235 = vrot.slane %v1233, 6
  %v1236 = vor.u32 %v1232, %v1235
  %v1238 = vshrl.u32 %v1195, 16
  %v1240 = vrot.slane %v1238, 5
  %v1241 = vshll.u32 %v1195, 16
  %v1243 = vrot.slane %v1241, 6
  %v1244 = vor.u32 %v1240, %v1243
  %v1245 = vsel %vm1211, %v1236, %v1244
  %1246 = vrot.lane.b32.xlu0 %v1219, 8
  %v1247 = vpop.permute.xlu0 %1246
  %1248 = vrot.lane.b32.xlu0 %v1228, 8
  %v1249 = vpop.permute.xlu0 %1248
  %1250 = vrot.lane.b32.xlu0 %v1236, 8
  %v1251 = vpop.permute.xlu0 %1250
  %1252 = vrot.lane.b32.xlu0 %v1245, 8
  %v1253 = vpop.permute.xlu0 %1252
  %v1256 = vsel %vm100, %v1181, %v1204
  %v1259 = vsel %vm100, %v1183, %v1206
  %v1262 = vsel %vm100, %v1185, %v1208
  %v1265 = vsel %vm100, %v1187, %v1210
  %v1267 = vsel %vm130, %v1256, %v1247
  %v1269 = vsel %vm130, %v1259, %v1249
  %v1271 = vsel %vm130, %v1262, %v1251
  %v1273 = vsel %vm130, %v1265, %v1253
  %vm1276 = vcmask 1044480
  %v1277 = vrot.slane %v1267, 3
  %v1278 = vrot.slane %v1269, 3
  %v1279 = vsel %vm1276, %v1277, %v1278
  %v1283 = vunpack.c.l.b16 %v1153
  %v1284 = vunpack.c.l.b16 %v1154
  %v1285 = vunpack.c.l.b16 %v1155
  %v1286 = vpack.c.b16 %v1284, %v1283
  %v1287 = vpack.c.b16 %v1285, %v1285
  %v1290 = vsel %vm474, %v1279, 0
  %v1293 = vsel %vm474, %v1278, 0
  %v1296 = vsel %vm481, %v1287, 0
  %1298 = vmatprep.subr.bf16.mxu0 0
  %1299 = vmatpush1.bf16.msra.mxu0 %v1286
  %1300 = vmatprep.subr.bf16.mxu0 0
  %1301 = vmatpush1.bf16.msra.mxu0 %v1296
  %1302 = vmatprep.subr.bf16.mxu0 0
  %1303 = vmatpush1.bf16.msra.mxu0 0
  %1304 = vmatprep.subr.bf16.mxu0 0
  %1305 = vmatpush1.bf16.msra.mxu0 0
  %1306 = vmatprep.subr.bf16.mxu0 0
  %1307 = vmatpush1.bf16.msra.mxu0 0
  %1308 = vmatprep.subr.bf16.mxu0 0
  %1309 = vmatpush1.bf16.msra.mxu0 0
  %1310 = vmatprep.subr.bf16.mxu0 0
  %1311 = vmatpush1.bf16.msra.mxu0 0
  %1312 = vmatprep.subr.bf16.mxu0 0
  %1313 = vmatpush1.bf16.msra.mxu0 0
  %1314 = vmatprep.subr.bf16.mxu0 0
  %1315 = vmatpush1.bf16.msra.mxu0 0
  %1316 = vmatprep.subr.bf16.mxu0 0
  %1317 = vmatpush1.bf16.msra.mxu0 0
  %1318 = vmatprep.subr.bf16.mxu0 0
  %1319 = vmatpush1.bf16.msra.mxu0 0
  %1320 = vmatprep.subr.bf16.mxu0 0
  %1321 = vmatpush1.bf16.msra.mxu0 0
  %1322 = vmatprep.subr.bf16.mxu0 0
  %1323 = vmatpush1.bf16.msra.mxu0 0
  %1324 = vmatprep.subr.bf16.mxu0 0
  %1325 = vmatpush1.bf16.msra.mxu0 0
  %1326 = vmatprep.subr.bf16.mxu0 0
  %1327 = vmatpush1.bf16.msra.mxu0 0
  %1328 = vmatprep.subr.bf16.mxu0 0
  %1329 = vmatpush1.bf16.msra.mxu0 0
  %1330 = vmatprep.mubr.bf16.mxu0 0
  %1331 = vmatmul.mubr.bf16.gmra.mrb[0].mxu0 %v1290
  %v1332 = vpop.f32.mrb[0].mxu0
  %v1333 = vadd.f32 0.0, %v1332
  %v1334 = vpop.f32.mrb[0].mxu0
  %v1335 = vpop.f32.mrb[0].mxu0
  %v1336 = vadd.f32 0.0, %v1335
  %v1337 = vpop.f32.mrb[0].mxu0
  %1338 = vmatprep.mubr.bf16.mxu0 0
  %1339 = vmatmul.mubr.bf16.gmra.mrb[0].mxu0 %v1293
  %v1340 = vpop.f32.mrb[0].mxu0
  %v1341 = vadd.f32 0.0, %v1340
  %v1342 = vpop.f32.mrb[0].mxu0
  %v1343 = vpop.f32.mrb[0].mxu0
  %v1344 = vpop.f32.mrb[0].mxu0
  %1345 = vdwg.mxu0
  %v1348 = vrot.slane %v1271, 3
  %v1349 = vrot.slane %v1273, 3
  %v1350 = vsel %vm1276, %v1348, %v1349
  %v1352 = vsel %vm474, %v1350, 0
  %v1355 = vsel %vm474, %v1349, 0
  %1357 = vmatprep.subr.bf16.mxu0 0
  %1358 = vmatpush1.bf16.msra.mxu0 %v1286
  %1359 = vmatprep.subr.bf16.mxu0 0
  %1360 = vmatpush1.bf16.msra.mxu0 %v1296
  %1361 = vmatprep.subr.bf16.mxu0 0
  %1362 = vmatpush1.bf16.msra.mxu0 0
  %1363 = vmatprep.subr.bf16.mxu0 0
  %1364 = vmatpush1.bf16.msra.mxu0 0
  %1365 = vmatprep.subr.bf16.mxu0 0
  %1366 = vmatpush1.bf16.msra.mxu0 0
  %1367 = vmatprep.subr.bf16.mxu0 0
  %1368 = vmatpush1.bf16.msra.mxu0 0
  %1369 = vmatprep.subr.bf16.mxu0 0
  %1370 = vmatpush1.bf16.msra.mxu0 0
  %1371 = vmatprep.subr.bf16.mxu0 0
  %1372 = vmatpush1.bf16.msra.mxu0 0
  %1373 = vmatprep.subr.bf16.mxu0 0
  %1374 = vmatpush1.bf16.msra.mxu0 0
  %1375 = vmatprep.subr.bf16.mxu0 0
  %1376 = vmatpush1.bf16.msra.mxu0 0
  %1377 = vmatprep.subr.bf16.mxu0 0
  %1378 = vmatpush1.bf16.msra.mxu0 0
  %1379 = vmatprep.subr.bf16.mxu0 0
  %1380 = vmatpush1.bf16.msra.mxu0 0
  %1381 = vmatprep.subr.bf16.mxu0 0
  %1382 = vmatpush1.bf16.msra.mxu0 0
  %1383 = vmatprep.subr.bf16.mxu0 0
  %1384 = vmatpush1.bf16.msra.mxu0 0
  %1385 = vmatprep.subr.bf16.mxu0 0
  %1386 = vmatpush1.bf16.msra.mxu0 0
  %1387 = vmatprep.subr.bf16.mxu0 0
  %1388 = vmatpush1.bf16.msra.mxu0 0
  %1389 = vmatprep.mubr.bf16.mxu0 0
  %1390 = vmatmul.mubr.bf16.gmra.mrb[0].mxu0 %v1352
  %v1391 = vpop.f32.mrb[0].mxu0
  %v1392 = vadd.f32 0.0, %v1391
  %v1393 = vpop.f32.mrb[0].mxu0
  %v1394 = vpop.f32.mrb[0].mxu0
  %v1395 = vadd.f32 0.0, %v1394
  %v1396 = vpop.f32.mrb[0].mxu0
  %1397 = vmatprep.mubr.bf16.mxu0 0
  %1398 = vmatmul.mubr.bf16.gmra.mrb[0].mxu0 %v1355
  %v1399 = vpop.f32.mrb[0].mxu0
  %v1400 = vadd.f32 0.0, %v1399
  %v1401 = vpop.f32.mrb[0].mxu0
  %v1402 = vpop.f32.mrb[0].mxu0
  %v1403 = vpop.f32.mrb[0].mxu0
  %1404 = vdwg.mxu0
  %v1405 = vld [vmem:[#allocation2 + $0x4] sm:$0xe]
  %v1406 = vld [vmem:[#allocation2 + $0xc] sm:$0x3]
  %v1407 = vld [vmem:[#allocation2 + $0x18] sm:$0xe]
  %v1408 = vld [vmem:[#allocation2 + $0x20] sm:$0x3]
  %v1409 = vrot.slane %v1213, 4
  %v1410 = vrot.slane %v1216, 5
  %v1411 = vor.u32 %v1409, %v1410
  %v1412 = vrot.slane %v1224, 5
  %v1413 = vsel %vm398, %v1411, %v1412
  %v1414 = vrot.slane %v1230, 4
  %v1415 = vrot.slane %v1233, 5
  %v1416 = vor.u32 %v1414, %v1415
  %v1417 = vrot.slane %v1241, 5
  %v1418 = vsel %vm398, %v1416, %v1417
  %v1423 = vunpack.c.l.b16 %v1405
  %v1424 = vunpack.c.l.b16 %v1406
  %v1425 = vunpack.c.l.b16 %v1407
  %v1426 = vunpack.c.l.b16 %v1408
  %v1427 = vpack.c.b16 %v1172, %v1423
  %v1428 = vpack.c.b16 %v1424, %v1424
  %v1429 = vpack.c.b16 %v1175, %v1425
  %v1430 = vpack.c.b16 %v1426, %v1426
  %v1432 = vshrl.u32 %v1427, 16
  %v1434 = vrot.slane %v1432, 5
  %v1435 = vshll.u32 %v1427, 16
  %v1437 = vrot.slane %v1435, 6
  %v1438 = vor.u32 %v1434, %v1437
  %v1440 = vshrl.u32 %v1428, 16
  %v1442 = vrot.slane %v1440, 5
  %v1443 = vshll.u32 %v1428, 16
  %v1445 = vrot.slane %v1443, 6
  %v1446 = vor.u32 %v1442, %v1445
  %v1447 = vsel %vm1211, %v1438, %v1446
  %v1449 = vshrl.u32 %v1429, 16
  %v1451 = vrot.slane %v1449, 5
  %v1452 = vshll.u32 %v1429, 16
  %v1454 = vrot.slane %v1452, 6
  %v1455 = vor.u32 %v1451, %v1454
  %v1457 = vshrl.u32 %v1430, 16
  %v1459 = vrot.slane %v1457, 5
  %v1460 = vshll.u32 %v1430, 16
  %v1462 = vrot.slane %v1460, 6
  %v1463 = vor.u32 %v1459, %v1462
  %v1464 = vsel %vm1211, %v1455, %v1463
  %1465 = vrot.lane.b32.xlu0 %v1438, 16
  %v1466 = vpop.permute.xlu0 %1465
  %1467 = vrot.lane.b32.xlu0 %v1447, 16
  %v1468 = vpop.permute.xlu0 %1467
  %1469 = vrot.lane.b32.xlu0 %v1455, 16
  %v1470 = vpop.permute.xlu0 %1469
  %1471 = vrot.lane.b32.xlu0 %v1464, 16
  %v1472 = vpop.permute.xlu0 %1471
  %v1475 = vsel %vm100, %v1176, %v1411
  %v1478 = vsel %vm100, %v1177, %v1413
  %v1481 = vsel %vm100, %v1178, %v1416
  %v1484 = vsel %vm100, %v1179, %v1418
  %v1486 = vsel %vm130, %v1475, %v1466
  %v1488 = vsel %vm130, %v1478, %v1468
  %v1490 = vsel %vm130, %v1481, %v1470
  %v1492 = vsel %vm130, %v1484, %v1472
  %v1493 = vshrl.u32 %v1486, 16
  %v1495 = vrot.slane %v1493, 3
  %v1496 = vshll.u32 %v1486, 16
  %v1498 = vrot.slane %v1496, 4
  %v1499 = vor.u32 %v1495, %v1498
  %v1500 = vshrl.u32 %v1488, 16
  %v1502 = vrot.slane %v1500, 3
  %v1503 = vshll.u32 %v1488, 16
  %v1505 = vrot.slane %v1503, 4
  %v1506 = vor.u32 %v1502, %v1505
  %v1507 = vsel %vm449, %v1499, %v1506
  %v1509 = vsel %vm474, %v1507, 0
  %v1512 = vsel %vm474, %v1502, 0
  %1514 = vmatprep.subr.bf16.mxu0 0
  %1515 = vmatpush1.bf16.msra.mxu0 %v1286
  %1516 = vmatprep.subr.bf16.mxu0 0
  %1517 = vmatpush1.bf16.msra.mxu0 %v1296
  %1518 = vmatprep.subr.bf16.mxu0 0
  %1519 = vmatpush1.bf16.msra.mxu0 0
  %1520 = vmatprep.subr.bf16.mxu0 0
  %1521 = vmatpush1.bf16.msra.mxu0 0
  %1522 = vmatprep.subr.bf16.mxu0 0
  %1523 = vmatpush1.bf16.msra.mxu0 0
  %1524 = vmatprep.subr.bf16.mxu0 0
  %1525 = vmatpush1.bf16.msra.mxu0 0
  %1526 = vmatprep.subr.bf16.mxu0 0
  %1527 = vmatpush1.bf16.msra.mxu0 0
  %1528 = vmatprep.subr.bf16.mxu0 0
  %1529 = vmatpush1.bf16.msra.mxu0 0
  %1530 = vmatprep.subr.bf16.mxu0 0
  %1531 = vmatpush1.bf16.msra.mxu0 0
  %1532 = vmatprep.subr.bf16.mxu0 0
  %1533 = vmatpush1.bf16.msra.mxu0 0
  %1534 = vmatprep.subr.bf16.mxu0 0
  %1535 = vmatpush1.bf16.msra.mxu0 0
  %1536 = vmatprep.subr.bf16.mxu0 0
  %1537 = vmatpush1.bf16.msra.mxu0 0
  %1538 = vmatprep.subr.bf16.mxu0 0
  %1539 = vmatpush1.bf16.msra.mxu0 0
  %1540 = vmatprep.subr.bf16.mxu0 0
  %1541 = vmatpush1.bf16.msra.mxu0 0
  %1542 = vmatprep.subr.bf16.mxu0 0
  %1543 = vmatpush1.bf16.msra.mxu0 0
  %1544 = vmatprep.subr.bf16.mxu0 0
  %1545 = vmatpush1.bf16.msra.mxu0 0
  %1546 = vmatprep.mubr.bf16.mxu0 0
  %1547 = vmatmul.mubr.bf16.gmra.mrb[0].mxu0 %v1509
  %v1548 = vpop.f32.mrb[0].mxu0
  %v1549 = vadd.f32 0.0, %v1548
  %v1550 = vpop.f32.mrb[0].mxu0
  %v1551 = vpop.f32.mrb[0].mxu0
  %v1552 = vadd.f32 0.0, %v1551
  %v1553 = vpop.f32.mrb[0].mxu0
  %1554 = vmatprep.mubr.bf16.mxu0 0
  %1555 = vmatmul.mubr.bf16.gmra.mrb[0].mxu0 %v1512
  %v1556 = vpop.f32.mrb[0].mxu0
  %v1557 = vadd.f32 0.0, %v1556
  %v1558 = vpop.f32.mrb[0].mxu0
  %v1559 = vpop.f32.mrb[0].mxu0
  %v1560 = vpop.f32.mrb[0].mxu0
  %1561 = vdwg.mxu0
  %v1562 = vshrl.u32 %v1490, 16
  %v1564 = vrot.slane %v1562, 3
  %v1565 = vshll.u32 %v1490, 16
  %v1567 = vrot.slane %v1565, 4
  %v1568 = vor.u32 %v1564, %v1567
  %v1569 = vshrl.u32 %v1492, 16
  %v1571 = vrot.slane %v1569, 3
  %v1572 = vshll.u32 %v1492, 16
  %v1574 = vrot.slane %v1572, 4
  %v1575 = vor.u32 %v1571, %v1574
  %v1576 = vsel %vm449, %v1568, %v1575
  %v1578 = vsel %vm474, %v1576, 0
  %v1581 = vsel %vm474, %v1571, 0
  %1583 = vmatprep.subr.bf16.mxu0 0
  %1584 = vmatpush1.bf16.msra.mxu0 %v1286
  %1585 = vmatprep.subr.bf16.mxu0 0
  %1586 = vmatpush1.bf16.msra.mxu0 %v1296
  %1587 = vmatprep.subr.bf16.mxu0 0
  %1588 = vmatpush1.bf16.msra.mxu0 0
  %1589 = vmatprep.subr.bf16.mxu0 0
  %1590 = vmatpush1.bf16.msra.mxu0 0
  %1591 = vmatprep.subr.bf16.mxu0 0
  %1592 = vmatpush1.bf16.msra.mxu0 0
  %1593 = vmatprep.subr.bf16.mxu0 0
  %1594 = vmatpush1.bf16.msra.mxu0 0
  %1595 = vmatprep.subr.bf16.mxu0 0
  %1596 = vmatpush1.bf16.msra.mxu0 0
  %1597 = vmatprep.subr.bf16.mxu0 0
  %1598 = vmatpush1.bf16.msra.mxu0 0
  %1599 = vmatprep.subr.bf16.mxu0 0
  %1600 = vmatpush1.bf16.msra.mxu0 0
  %1601 = vmatprep.subr.bf16.mxu0 0
  %1602 = vmatpush1.bf16.msra.mxu0 0
  %1603 = vmatprep.subr.bf16.mxu0 0
  %1604 = vmatpush1.bf16.msra.mxu0 0
  %1605 = vmatprep.subr.bf16.mxu0 0
  %1606 = vmatpush1.bf16.msra.mxu0 0
  %1607 = vmatprep.subr.bf16.mxu0 0
  %1608 = vmatpush1.bf16.msra.mxu0 0
  %1609 = vmatprep.subr.bf16.mxu0 0
  %1610 = vmatpush1.bf16.msra.mxu0 0
  %1611 = vmatprep.subr.bf16.mxu0 0
  %1612 = vmatpush1.bf16.msra.mxu0 0
  %1613 = vmatprep.subr.bf16.mxu0 0
  %1614 = vmatpush1.bf16.msra.mxu0 0
  %1615 = vmatprep.mubr.bf16.mxu0 0
  %1616 = vmatmul.mubr.bf16.gmra.mrb[0].mxu0 %v1578
  %v1617 = vpop.f32.mrb[0].mxu0
  %v1618 = vadd.f32 0.0, %v1617
  %v1619 = vpop.f32.mrb[0].mxu0
  %v1620 = vpop.f32.mrb[0].mxu0
  %v1621 = vadd.f32 0.0, %v1620
  %v1622 = vpop.f32.mrb[0].mxu0
  %1623 = vmatprep.mubr.bf16.mxu0 0
  %1624 = vmatmul.mubr.bf16.gmra.mrb[0].mxu0 %v1581
  %v1625 = vpop.f32.mrb[0].mxu0
  %v1626 = vadd.f32 0.0, %v1625
  %v1627 = vpop.f32.mrb[0].mxu0
  %v1628 = vpop.f32.mrb[0].mxu0
  %v1629 = vpop.f32.mrb[0].mxu0
  %1630 = vdwg.mxu0
  %1637 = vrot.lane.b32.xlu0 %v1549, 8
  %v1638 = vpop.permute.xlu0 %1637
  %1639 = vrot.lane.b32.xlu0 %v1552, 8
  %v1640 = vpop.permute.xlu0 %1639
  %1641 = vrot.lane.b32.xlu0 %v1557, 8
  %v1642 = vpop.permute.xlu0 %1641
  %1643 = vrot.lane.b32.xlu0 %v1618, 8
  %v1644 = vpop.permute.xlu0 %1643
  %1645 = vrot.lane.b32.xlu0 %v1621, 8
  %v1646 = vpop.permute.xlu0 %1645
  %1647 = vrot.lane.b32.xlu0 %v1626, 8
  %v1648 = vpop.permute.xlu0 %1647
  %v1655 = vsel %vm100, %v1333, %v1638
  %v1656 = vsel %vm100, %v1336, %v1640
  %v1657 = vsel %vm100, %v1341, %v1642
  %v1658 = vsel %vm100, %v1392, %v1644
  %v1659 = vsel %vm100, %v1395, %v1646
  %v1660 = vsel %vm100, %v1400, %v1648
  %v1661 = vlaneseq
  %v1662 = vshrl.u32 %v1661, 7
  %v1663 = vsub.s32 3, %v1662
  %v1664 = vrot.slane %v47, %v1663
  %v1665 = vadd.f32 %v1655, %v1664
  %v1666 = vadd.f32 %v1656, %v1664
  %v1667 = vadd.f32 %v1657, %v1664
  %v1668 = vadd.f32 %v1658, %v1664
  %v1669 = vadd.f32 %v1659, %v1664
  %v1670 = vadd.f32 %v1660, %v1664
  %vm1671 = vcmp.gt.f32.partialorder %v1665, 0.0
  %vm1672 = vcmp.gt.f32.partialorder %v1666, 0.0
  %vm1673 = vcmp.gt.f32.partialorder %v1667, 0.0
  %vm1674 = vcmp.gt.f32.partialorder %v1668, 0.0
  %vm1675 = vcmp.gt.f32.partialorder %v1669, 0.0
  %vm1676 = vcmp.gt.f32.partialorder %v1670, 0.0
  %v1677 = vmul.f32 %v1665, 1.442695
  %v1678 = vpow.pop %v1677
  %v1679 = vmul.f32 %v1666, 1.442695
  %v1680 = vpow.pop %v1679
  %v1681 = vmul.f32 %v1667, 1.442695
  %v1682 = vpow.pop %v1681
  %v1683 = vmul.f32 %v1668, 1.442695
  %v1684 = vpow.pop %v1683
  %v1685 = vmul.f32 %v1669, 1.442695
  %v1686 = vpow.pop %v1685
  %v1687 = vmul.f32 %v1670, 1.442695
  %v1688 = vpow.pop %v1687
  %v1689 = vsub.f32 %v1678, 1.0
  %v1690 = vsub.f32 %v1680, 1.0
  %v1691 = vsub.f32 %v1682, 1.0
  %v1692 = vsub.f32 %v1684, 1.0
  %v1693 = vsub.f32 %v1686, 1.0
  %v1694 = vsub.f32 %v1688, 1.0
  %v1695 = vsel %vm1671, %v1665, %v1689
  %v1696 = vsel %vm1672, %v1666, %v1690
  %v1697 = vsel %vm1673, %v1667, %v1691
  %v1698 = vsel %vm1674, %v1668, %v1692
  %v1699 = vsel %vm1675, %v1669, %v1693
  %v1700 = vsel %vm1676, %v1670, %v1694
  %s1701 = scalar_lea.vmem %s4, 4
  %v1702 = vld [vmem:[%s1701] sm:$0xf]
  %v1703 = vpack.c.bf16 %v1696, %v1695
  %v1704 = vpack.c.bf16 %v1697, %v1697
  %v1705 = vpack.c.bf16 %v1699, %v1698
  %v1706 = vpack.c.bf16 %v1700, %v1700
  %v1708 = vsel %vm100, %v1703, 0
  %v1711 = vsel %vm100, %v1704, 0
  %v1714 = vsel %vm481, %v1702, 0
  %1716 = vmatprep.subr.bf16.mxu0 0
  %1717 = vmatpush1.bf16.msra.mxu0 %v1714
  %1718 = vmatprep.subr.bf16.mxu0 0
  %1719 = vmatpush1.bf16.msra.mxu0 0
  %1720 = vmatprep.subr.bf16.mxu0 0
  %1721 = vmatpush1.bf16.msra.mxu0 0
  %1722 = vmatprep.subr.bf16.mxu0 0
  %1723 = vmatpush1.bf16.msra.mxu0 0
  %1724 = vmatprep.subr.bf16.mxu0 0
  %1725 = vmatpush1.bf16.msra.mxu0 0
  %1726 = vmatprep.subr.bf16.mxu0 0
  %1727 = vmatpush1.bf16.msra.mxu0 0
  %1728 = vmatprep.subr.bf16.mxu0 0
  %1729 = vmatpush1.bf16.msra.mxu0 0
  %1730 = vmatprep.subr.bf16.mxu0 0
  %1731 = vmatpush1.bf16.msra.mxu0 0
  %1732 = vmatprep.subr.bf16.mxu0 0
  %1733 = vmatpush1.bf16.msra.mxu0 0
  %1734 = vmatprep.subr.bf16.mxu0 0
  %1735 = vmatpush1.bf16.msra.mxu0 0
  %1736 = vmatprep.subr.bf16.mxu0 0
  %1737 = vmatpush1.bf16.msra.mxu0 0
  %1738 = vmatprep.subr.bf16.mxu0 0
  %1739 = vmatpush1.bf16.msra.mxu0 0
  %1740 = vmatprep.subr.bf16.mxu0 0
  %1741 = vmatpush1.bf16.msra.mxu0 0
  %1742 = vmatprep.subr.bf16.mxu0 0
  %1743 = vmatpush1.bf16.msra.mxu0 0
  %1744 = vmatprep.subr.bf16.mxu0 0
  %1745 = vmatpush1.bf16.msra.mxu0 0
  %1746 = vmatprep.subr.bf16.mxu0 0
  %1747 = vmatpush1.bf16.msra.mxu0 0
  %1748 = vmatprep.mubr.bf16.mxu0 0
  %1749 = vmatmul.mubr.bf16.gmra.mrb[0].mxu0 %v1708
  %v1750 = vpop.f32.mrb[0].mxu0
  %v1751 = vadd.f32 0.0, %v1750
  %v1752 = vpop.f32.mrb[0].mxu0
  %v1753 = vpop.f32.mrb[0].mxu0
  %v1754 = vadd.f32 0.0, %v1753
  %v1755 = vpop.f32.mrb[0].mxu0
  %1756 = vmatprep.mubr.bf16.mxu0 0
  %1757 = vmatmul.mubr.bf16.gmra.mrb[0].mxu0 %v1711
  %v1758 = vpop.f32.mrb[0].mxu0
  %v1759 = vadd.f32 0.0, %v1758
  %v1760 = vpop.f32.mrb[0].mxu0
  %v1761 = vpop.f32.mrb[0].mxu0
  %v1762 = vpop.f32.mrb[0].mxu0
  %1763 = vdwg.mxu0
  %v1765 = vsel %vm100, %v1705, 0
  %v1768 = vsel %vm100, %v1706, 0
  %1770 = vmatprep.subr.bf16.mxu0 0
  %1771 = vmatpush1.bf16.msra.mxu0 %v1714
  %1772 = vmatprep.subr.bf16.mxu0 0
  %1773 = vmatpush1.bf16.msra.mxu0 0
  %1774 = vmatprep.subr.bf16.mxu0 0
  %1775 = vmatpush1.bf16.msra.mxu0 0
  %1776 = vmatprep.subr.bf16.mxu0 0
  %1777 = vmatpush1.bf16.msra.mxu0 0
  %1778 = vmatprep.subr.bf16.mxu0 0
  %1779 = vmatpush1.bf16.msra.mxu0 0
  %1780 = vmatprep.subr.bf16.mxu0 0
  %1781 = vmatpush1.bf16.msra.mxu0 0
  %1782 = vmatprep.subr.bf16.mxu0 0
  %1783 = vmatpush1.bf16.msra.mxu0 0
  %1784 = vmatprep.subr.bf16.mxu0 0
  %1785 = vmatpush1.bf16.msra.mxu0 0
  %1786 = vmatprep.subr.bf16.mxu0 0
  %1787 = vmatpush1.bf16.msra.mxu0 0
  %1788 = vmatprep.subr.bf16.mxu0 0
  %1789 = vmatpush1.bf16.msra.mxu0 0
  %1790 = vmatprep.subr.bf16.mxu0 0
  %1791 = vmatpush1.bf16.msra.mxu0 0
  %1792 = vmatprep.subr.bf16.mxu0 0
  %1793 = vmatpush1.bf16.msra.mxu0 0
  %1794 = vmatprep.subr.bf16.mxu0 0
  %1795 = vmatpush1.bf16.msra.mxu0 0
  %1796 = vmatprep.subr.bf16.mxu0 0
  %1797 = vmatpush1.bf16.msra.mxu0 0
  %1798 = vmatprep.subr.bf16.mxu0 0
  %1799 = vmatpush1.bf16.msra.mxu0 0
  %1800 = vmatprep.subr.bf16.mxu0 0
  %1801 = vmatpush1.bf16.msra.mxu0 0
  %1802 = vmatprep.mubr.bf16.mxu0 0
  %1803 = vmatmul.mubr.bf16.gmra.mrb[0].mxu0 %v1765
  %v1804 = vpop.f32.mrb[0].mxu0
  %v1805 = vadd.f32 0.0, %v1804
  %v1806 = vpop.f32.mrb[0].mxu0
  %v1807 = vpop.f32.mrb[0].mxu0
  %v1808 = vadd.f32 0.0, %v1807
  %v1809 = vpop.f32.mrb[0].mxu0
  %1810 = vmatprep.mubr.bf16.mxu0 0
  %1811 = vmatmul.mubr.bf16.gmra.mrb[0].mxu0 %v1768
  %v1812 = vpop.f32.mrb[0].mxu0
  %v1813 = vadd.f32 0.0, %v1812
  %v1814 = vpop.f32.mrb[0].mxu0
  %v1815 = vpop.f32.mrb[0].mxu0
  %v1816 = vpop.f32.mrb[0].mxu0
  %1817 = vdwg.mxu0
  %1820 = vrot.lane.b32.xlu0 %v1703, 120
  %v1821 = vpop.permute.xlu0 %1820
  %1822 = vrot.lane.b32.xlu0 %v1704, 120
  %v1823 = vpop.permute.xlu0 %1822
  %v1825 = vsel %vm100, %v1821, 0
  %v1828 = vsel %vm100, %v1823, 0
  %1830 = vmatprep.subr.bf16.mxu0 0
  %1831 = vmatpush1.bf16.msra.mxu0 %v1714
  %1832 = vmatprep.subr.bf16.mxu0 0
  %1833 = vmatpush1.bf16.msra.mxu0 0
  %1834 = vmatprep.subr.bf16.mxu0 0
  %1835 = vmatpush1.bf16.msra.mxu0 0
  %1836 = vmatprep.subr.bf16.mxu0 0
  %1837 = vmatpush1.bf16.msra.mxu0 0
  %1838 = vmatprep.subr.bf16.mxu0 0
  %1839 = vmatpush1.bf16.msra.mxu0 0
  %1840 = vmatprep.subr.bf16.mxu0 0
  %1841 = vmatpush1.bf16.msra.mxu0 0
  %1842 = vmatprep.subr.bf16.mxu0 0
  %1843 = vmatpush1.bf16.msra.mxu0 0
  %1844 = vmatprep.subr.bf16.mxu0 0
  %1845 = vmatpush1.bf16.msra.mxu0 0
  %1846 = vmatprep.subr.bf16.mxu0 0
  %1847 = vmatpush1.bf16.msra.mxu0 0
  %1848 = vmatprep.subr.bf16.mxu0 0
  %1849 = vmatpush1.bf16.msra.mxu0 0
  %1850 = vmatprep.subr.bf16.mxu0 0
  %1851 = vmatpush1.bf16.msra.mxu0 0
  %1852 = vmatprep.subr.bf16.mxu0 0
  %1853 = vmatpush1.bf16.msra.mxu0 0
  %1854 = vmatprep.subr.bf16.mxu0 0
  %1855 = vmatpush1.bf16.msra.mxu0 0
  %1856 = vmatprep.subr.bf16.mxu0 0
  %1857 = vmatpush1.bf16.msra.mxu0 0
  %1858 = vmatprep.subr.bf16.mxu0 0
  %1859 = vmatpush1.bf16.msra.mxu0 0
  %1860 = vmatprep.subr.bf16.mxu0 0
  %1861 = vmatpush1.bf16.msra.mxu0 0
  %1862 = vmatprep.mubr.bf16.mxu0 0
  %1863 = vmatmul.mubr.bf16.gmra.mrb[0].mxu0 %v1825
  %v1864 = vpop.f32.mrb[0].mxu0
  %v1865 = vadd.f32 0.0, %v1864
  %v1866 = vpop.f32.mrb[0].mxu0
  %v1867 = vpop.f32.mrb[0].mxu0
  %v1868 = vadd.f32 0.0, %v1867
  %v1869 = vpop.f32.mrb[0].mxu0
  %1870 = vmatprep.mubr.bf16.mxu0 0
  %1871 = vmatmul.mubr.bf16.gmra.mrb[0].mxu0 %v1828
  %v1872 = vpop.f32.mrb[0].mxu0
  %v1873 = vadd.f32 0.0, %v1872
  %v1874 = vpop.f32.mrb[0].mxu0
  %v1875 = vpop.f32.mrb[0].mxu0
  %v1876 = vpop.f32.mrb[0].mxu0
  %1877 = vdwg.mxu0
  %1880 = vrot.lane.b32.xlu0 %v1705, 120
  %v1881 = vpop.permute.xlu0 %1880
  %1882 = vrot.lane.b32.xlu0 %v1706, 120
  %v1883 = vpop.permute.xlu0 %1882
  %v1885 = vsel %vm100, %v1881, 0
  %v1888 = vsel %vm100, %v1883, 0
  %1890 = vmatprep.subr.bf16.mxu0 0
  %1891 = vmatpush1.bf16.msra.mxu0 %v1714
  %1892 = vmatprep.subr.bf16.mxu0 0
  %1893 = vmatpush1.bf16.msra.mxu0 0
  %1894 = vmatprep.subr.bf16.mxu0 0
  %1895 = vmatpush1.bf16.msra.mxu0 0
  %1896 = vmatprep.subr.bf16.mxu0 0
  %1897 = vmatpush1.bf16.msra.mxu0 0
  %1898 = vmatprep.subr.bf16.mxu0 0
  %1899 = vmatpush1.bf16.msra.mxu0 0
  %1900 = vmatprep.subr.bf16.mxu0 0
  %1901 = vmatpush1.bf16.msra.mxu0 0
  %1902 = vmatprep.subr.bf16.mxu0 0
  %1903 = vmatpush1.bf16.msra.mxu0 0
  %1904 = vmatprep.subr.bf16.mxu0 0
  %1905 = vmatpush1.bf16.msra.mxu0 0
  %1906 = vmatprep.subr.bf16.mxu0 0
  %1907 = vmatpush1.bf16.msra.mxu0 0
  %1908 = vmatprep.subr.bf16.mxu0 0
  %1909 = vmatpush1.bf16.msra.mxu0 0
  %1910 = vmatprep.subr.bf16.mxu0 0
  %1911 = vmatpush1.bf16.msra.mxu0 0
  %1912 = vmatprep.subr.bf16.mxu0 0
  %1913 = vmatpush1.bf16.msra.mxu0 0
  %1914 = vmatprep.subr.bf16.mxu0 0
  %1915 = vmatpush1.bf16.msra.mxu0 0
  %1916 = vmatprep.subr.bf16.mxu0 0
  %1917 = vmatpush1.bf16.msra.mxu0 0
  %1918 = vmatprep.subr.bf16.mxu0 0
  %1919 = vmatpush1.bf16.msra.mxu0 0
  %1920 = vmatprep.subr.bf16.mxu0 0
  %1921 = vmatpush1.bf16.msra.mxu0 0
  %1922 = vmatprep.mubr.bf16.mxu0 0
  %1923 = vmatmul.mubr.bf16.gmra.mrb[0].mxu0 %v1885
  %v1924 = vpop.f32.mrb[0].mxu0
  %v1925 = vadd.f32 0.0, %v1924
  %v1926 = vpop.f32.mrb[0].mxu0
  %v1927 = vpop.f32.mrb[0].mxu0
  %v1928 = vadd.f32 0.0, %v1927
  %v1929 = vpop.f32.mrb[0].mxu0
  %1930 = vmatprep.mubr.bf16.mxu0 0
  %1931 = vmatmul.mubr.bf16.gmra.mrb[0].mxu0 %v1888
  %v1932 = vpop.f32.mrb[0].mxu0
  %v1933 = vadd.f32 0.0, %v1932
  %v1934 = vpop.f32.mrb[0].mxu0
  %v1935 = vpop.f32.mrb[0].mxu0
  %v1936 = vpop.f32.mrb[0].mxu0
  %1937 = vdwg.mxu0
  %1944 = vrot.lane.b32.xlu0 %v1865, 8
  %v1945 = vpop.permute.xlu0 %1944
  %1946 = vrot.lane.b32.xlu0 %v1868, 8
  %v1947 = vpop.permute.xlu0 %1946
  %1948 = vrot.lane.b32.xlu0 %v1873, 8
  %v1949 = vpop.permute.xlu0 %1948
  %1950 = vrot.lane.b32.xlu0 %v1925, 8
  %v1951 = vpop.permute.xlu0 %1950
  %1952 = vrot.lane.b32.xlu0 %v1928, 8
  %v1953 = vpop.permute.xlu0 %1952
  %1954 = vrot.lane.b32.xlu0 %v1933, 8
  %v1955 = vpop.permute.xlu0 %1954
  %v1962 = vsel %vm100, %v1751, %v1945
  %v1963 = vsel %vm100, %v1754, %v1947
  %v1964 = vsel %vm100, %v1759, %v1949
  %v1965 = vsel %vm100, %v1805, %v1951
  %v1966 = vsel %vm100, %v1808, %v1953
  %v1967 = vsel %vm100, %v1813, %v1955
  %v1968 = vlaneseq
  %v1969 = vshrl.u32 %v1968, 7
  %v1970 = vsub.s32 4, %v1969
  %v1971 = vrot.slane %v47, %v1970
  %v1972 = vadd.f32 %v1962, %v1971
  %v1973 = vadd.f32 %v1963, %v1971
  %v1974 = vadd.f32 %v1964, %v1971
  %v1975 = vadd.f32 %v1965, %v1971
  %v1976 = vadd.f32 %v1966, %v1971
  %v1977 = vadd.f32 %v1967, %v1971
  %vm1978 = vcmp.gt.f32.partialorder %v1972, 0.0
  %vm1979 = vcmp.gt.f32.partialorder %v1973, 0.0
  %vm1980 = vcmp.gt.f32.partialorder %v1974, 0.0
  %vm1981 = vcmp.gt.f32.partialorder %v1975, 0.0
  %vm1982 = vcmp.gt.f32.partialorder %v1976, 0.0
  %vm1983 = vcmp.gt.f32.partialorder %v1977, 0.0
  %v1984 = vmul.f32 %v1972, 1.442695
  %v1985 = vpow.pop %v1984
  %v1986 = vmul.f32 %v1973, 1.442695
  %v1987 = vpow.pop %v1986
  %v1988 = vmul.f32 %v1974, 1.442695
  %v1989 = vpow.pop %v1988
  %v1990 = vmul.f32 %v1975, 1.442695
  %v1991 = vpow.pop %v1990
  %v1992 = vmul.f32 %v1976, 1.442695
  %v1993 = vpow.pop %v1992
  %v1994 = vmul.f32 %v1977, 1.442695
  %v1995 = vpow.pop %v1994
  %v1996 = vsub.f32 %v1985, 1.0
  %v1997 = vsub.f32 %v1987, 1.0
  %v1998 = vsub.f32 %v1989, 1.0
  %v1999 = vsub.f32 %v1991, 1.0
  %v2000 = vsub.f32 %v1993, 1.0
  %v2001 = vsub.f32 %v1995, 1.0
  %v2002 = vsel %vm1978, %v1972, %v1996
  %v2003 = vsel %vm1979, %v1973, %v1997
  %v2004 = vsel %vm1980, %v1974, %v1998
  %v2005 = vsel %vm1981, %v1975, %v1999
  %v2006 = vsel %vm1982, %v1976, %v2000
  %v2007 = vsel %vm1983, %v1977, %v2001
  %v2008 = vadd.f32 %v1110, %v2002
  %v2009 = vadd.f32 %v1111, %v2003
  %v2010 = vadd.f32 %v1112, %v2004
  %v2011 = vadd.f32 %v1113, %v2005
  %v2012 = vadd.f32 %v1114, %v2006
  %v2013 = vadd.f32 %v1115, %v2007
  %v2014 = vpack.c.bf16 %v2009, %v2008
  %v2015 = vpack.c.bf16 %v2010, %v2010
  %v2016 = vpack.c.bf16 %v2012, %v2011
  %v2017 = vpack.c.bf16 %v2013, %v2013
  %v2022 = vunpack.c.l.b16 %v2014
  %v2023 = vunpack.c.h.b16 %v2014
  %v2024 = vunpack.c.l.b16 %v2015
  %v2025 = vunpack.c.l.b16 %v2016
  %v2026 = vunpack.c.h.b16 %v2016
  %v2027 = vunpack.c.l.b16 %v2017
  %v2028 = vpack.c.b16 %v2022, %v2022
  %v2029 = vpack.c.b16 %v2023, %v2023
  %v2030 = vpack.c.b16 %v2024, %v2024
  %v2031 = vpack.c.b16 %v2025, %v2025
  %v2032 = vpack.c.b16 %v2026, %v2026
  %v2033 = vpack.c.b16 %v2027, %v2027
  %2040 = vst.msk [vmem:[#allocation2 + $0x4] sm:$0xf] %vm24, %v2028
  %2041 = vst.msk [vmem:[#allocation2 + $0x8] sm:$0xf] %vm24, %v2029
  %v2042 = vld [vmem:[#allocation2 + $0xc] sm:$0x1]
  %v2043 = vsel %vm35, %v2030, %v2042
  %2044 = vst [vmem:[#allocation2 + $0xc] sm:$0x1] %v2043
  %2045 = vst.msk [vmem:[#allocation2 + $0x18] sm:$0xf] %vm24, %v2031
  %2046 = vst.msk [vmem:[#allocation2 + $0x1c] sm:$0xf] %vm24, %v2032
  %v2047 = vld [vmem:[#allocation2 + $0x20] sm:$0x1]
  %v2048 = vsel %vm35, %v2033, %v2047
  %2049 = vst [vmem:[#allocation2 + $0x20] sm:$0x1] %v2048
  %s2050 = scalar_lea.vmem %s3, 24
  %v2051 = vld [vmem:[%s2050] sm:$0xf]
  %v2052 = vld [vmem:[%s2050 + $0x4] sm:$0xf]
  %v2053 = vld [vmem:[%s2050 + $0x8] sm:$0xf]
  %v2054 = vld [vmem:[#allocation2] sm:$0xe]
  %v2055 = vld [vmem:[#allocation2 + $0x4] sm:$0xf]
  %v2056 = vld [vmem:[#allocation2 + $0x8] sm:$0x3]
  %v2057 = vld [vmem:[#allocation2 + $0x14] sm:$0xe]
  %v2058 = vld [vmem:[#allocation2 + $0x18] sm:$0xf]
  %v2059 = vld [vmem:[#allocation2 + $0x1c] sm:$0x3]
  %v2060 = vld [vmem:[#allocation2 + $0x8] sm:$0xf]
  %v2061 = vld [vmem:[#allocation2 + $0xc] sm:$0x1]
  %v2062 = vld [vmem:[#allocation2 + $0x1c] sm:$0xf]
  %v2063 = vld [vmem:[#allocation2 + $0x20] sm:$0x1]
  %v2064 = vld [vmem:[#allocation2 + $0x4] sm:$0xc]
  %v2065 = vld [vmem:[#allocation2 + $0xc] sm:$0x7]
  %v2066 = vld [vmem:[#allocation2 + $0x18] sm:$0xc]
  %v2067 = vld [vmem:[#allocation2 + $0x20] sm:$0x7]
  %v2074 = vunpack.c.l.b16 %v2054
  %v2075 = vunpack.c.l.b16 %v2055
  %v2076 = vunpack.c.l.b16 %v2056
  %v2077 = vunpack.c.l.b16 %v2057
  %v2078 = vunpack.c.l.b16 %v2058
  %v2079 = vunpack.c.l.b16 %v2059
  %v2080 = vpack.c.b16 %v2075, %v2074
  %v2081 = vpack.c.b16 %v2076, %v2076
  %v2082 = vpack.c.b16 %v2078, %v2077
  %v2083 = vpack.c.b16 %v2079, %v2079
  %2084 = vrot.lane.b32.xlu0 %v2080, 120
  %v2085 = vpop.permute.xlu0 %2084
  %2086 = vrot.lane.b32.xlu0 %v2081, 120
  %v2087 = vpop.permute.xlu0 %2086
  %2088 = vrot.lane.b32.xlu0 %v2082, 120
  %v2089 = vpop.permute.xlu0 %2088
  %2090 = vrot.lane.b32.xlu0 %v2083, 120
  %v2091 = vpop.permute.xlu0 %2090
  %v2096 = vunpack.c.l.b16 %v2060
  %v2097 = vunpack.c.l.b16 %v2061
  %v2098 = vunpack.c.l.b16 %v2062
  %v2099 = vunpack.c.l.b16 %v2063
  %v2100 = vpack.c.b16 %v2096, %v2075
  %v2101 = vpack.c.b16 %v2097, %v2097
  %v2102 = vpack.c.b16 %v2098, %v2078
  %v2103 = vpack.c.b16 %v2099, %v2099
  %vm2104 = vsmask.f32 1280
  %v2106 = vshrl.u32 %v2100, 16
  %v2108 = vrot.slane %v2106, 6
  %v2109 = vshll.u32 %v2100, 16
  %v2111 = vrot.slane %v2109, 7
  %v2112 = vor.u32 %v2108, %v2111
  %v2114 = vshll.u32 %v2101, 16
  %v2116 = vrot.slane %v2114, 7
  %v2117 = vsel %vm2104, %v2112, %v2116
  %v2119 = vshrl.u32 %v2102, 16
  %v2121 = vrot.slane %v2119, 6
  %v2122 = vshll.u32 %v2102, 16
  %v2124 = vrot.slane %v2122, 7
  %v2125 = vor.u32 %v2121, %v2124
  %v2127 = vshll.u32 %v2103, 16
  %v2129 = vrot.slane %v2127, 7
  %v2130 = vsel %vm2104, %v2125, %v2129
  %2131 = vrot.lane.b32.xlu0 %v2112, 8
  %v2132 = vpop.permute.xlu0 %2131
  %2133 = vrot.lane.b32.xlu0 %v2117, 8
  %v2134 = vpop.permute.xlu0 %2133
  %2135 = vrot.lane.b32.xlu0 %v2125, 8
  %v2136 = vpop.permute.xlu0 %2135
  %2137 = vrot.lane.b32.xlu0 %v2130, 8
  %v2138 = vpop.permute.xlu0 %2137
  %v2143 = vunpack.c.l.b16 %v2064
  %v2144 = vunpack.c.l.b16 %v2065
  %v2145 = vunpack.c.l.b16 %v2066
  %v2146 = vunpack.c.l.b16 %v2067
  %v2147 = vpack.c.b16 %v2096, %v2143
  %v2148 = vpack.c.b16 %v2144, %v2144
  %v2149 = vpack.c.b16 %v2098, %v2145
  %v2150 = vpack.c.b16 %v2146, %v2146
  %v2152 = vshrl.u32 %v2147, 16
  %v2154 = vshll.u32 %v2147, 16
  %v2156 = vrot.slane %v2154, 1
  %v2157 = vor.u32 %v2152, %v2156
  %v2159 = vshll.u32 %v2148, 16
  %v2161 = vrot.slane %v2159, 1
  %v2162 = vsel %vm111, %v2157, %v2161
  %v2163 = vshrl.u32 %v2148, 16
  %v2165 = vor.u32 %v2163, %v2161
  %v2167 = vshrl.u32 %v2149, 16
  %v2169 = vshll.u32 %v2149, 16
  %v2171 = vrot.slane %v2169, 1
  %v2172 = vor.u32 %v2167, %v2171
  %v2174 = vshll.u32 %v2150, 16
  %v2176 = vrot.slane %v2174, 1
  %v2177 = vsel %vm111, %v2172, %v2176
  %v2178 = vshrl.u32 %v2150, 16
  %v2180 = vor.u32 %v2178, %v2176
  %2181 = vrot.lane.b32.xlu0 %v2162, 8
  %v2182 = vpop.permute.xlu0 %2181
  %2183 = vrot.lane.b32.xlu0 %v2165, 8
  %v2184 = vpop.permute.xlu0 %2183
  %2185 = vrot.lane.b32.xlu0 %v2177, 8
  %v2186 = vpop.permute.xlu0 %2185
  %2187 = vrot.lane.b32.xlu0 %v2180, 8
  %v2188 = vpop.permute.xlu0 %2187
  %v2191 = vsel %vm100, %v2085, %v2132
  %v2194 = vsel %vm100, %v2087, %v2134
  %v2197 = vsel %vm100, %v2089, %v2136
  %v2200 = vsel %vm100, %v2091, %v2138
  %v2202 = vsel %vm130, %v2191, %v2182
  %v2204 = vsel %vm130, %v2194, %v2184
  %v2206 = vsel %vm130, %v2197, %v2186
  %v2208 = vsel %vm130, %v2200, %v2188
  %vm2209 = vsmask.f32 6400
  %v2210 = vshrl.u32 %v2202, 16
  %v2212 = vrot.slane %v2210, 1
  %v2213 = vshll.u32 %v2202, 16
  %v2215 = vrot.slane %v2213, 2
  %v2216 = vor.u32 %v2212, %v2215
  %v2217 = vshrl.u32 %v2204, 16
  %v2219 = vrot.slane %v2217, 1
  %v2220 = vshll.u32 %v2204, 16
  %v2222 = vrot.slane %v2220, 2
  %v2223 = vor.u32 %v2219, %v2222
  %v2224 = vsel %vm2209, %v2216, %v2223
  %v2228 = vunpack.c.l.b16 %v2051
  %v2229 = vunpack.c.l.b16 %v2052
  %v2230 = vunpack.c.l.b16 %v2053
  %v2231 = vpack.c.b16 %v2229, %v2228
  %v2232 = vpack.c.b16 %v2230, %v2230
  %v2235 = vsel %vm474, %v2224, 0
  %v2238 = vsel %vm474, %v2219, 0
  %v2241 = vsel %vm481, %v2232, 0
  %2243 = vmatprep.subr.bf16.mxu0 0
  %2244 = vmatpush1.bf16.msra.mxu0 %v2231
  %2245 = vmatprep.subr.bf16.mxu0 0
  %2246 = vmatpush1.bf16.msra.mxu0 %v2241
  %2247 = vmatprep.subr.bf16.mxu0 0
  %2248 = vmatpush1.bf16.msra.mxu0 0
  %2249 = vmatprep.subr.bf16.mxu0 0
  %2250 = vmatpush1.bf16.msra.mxu0 0
  %2251 = vmatprep.subr.bf16.mxu0 0
  %2252 = vmatpush1.bf16.msra.mxu0 0
  %2253 = vmatprep.subr.bf16.mxu0 0
  %2254 = vmatpush1.bf16.msra.mxu0 0
  %2255 = vmatprep.subr.bf16.mxu0 0
  %2256 = vmatpush1.bf16.msra.mxu0 0
  %2257 = vmatprep.subr.bf16.mxu0 0
  %2258 = vmatpush1.bf16.msra.mxu0 0
  %2259 = vmatprep.subr.bf16.mxu0 0
  %2260 = vmatpush1.bf16.msra.mxu0 0
  %2261 = vmatprep.subr.bf16.mxu0 0
  %2262 = vmatpush1.bf16.msra.mxu0 0
  %2263 = vmatprep.subr.bf16.mxu0 0
  %2264 = vmatpush1.bf16.msra.mxu0 0
  %2265 = vmatprep.subr.bf16.mxu0 0
  %2266 = vmatpush1.bf16.msra.mxu0 0
  %2267 = vmatprep.subr.bf16.mxu0 0
  %2268 = vmatpush1.bf16.msra.mxu0 0
  %2269 = vmatprep.subr.bf16.mxu0 0
  %2270 = vmatpush1.bf16.msra.mxu0 0
  %2271 = vmatprep.subr.bf16.mxu0 0
  %2272 = vmatpush1.bf16.msra.mxu0 0
  %2273 = vmatprep.subr.bf16.mxu0 0
  %2274 = vmatpush1.bf16.msra.mxu0 0
  %2275 = vmatprep.mubr.bf16.mxu0 0
  %2276 = vmatmul.mubr.bf16.gmra.mrb[0].mxu0 %v2235
  %v2277 = vpop.f32.mrb[0].mxu0
  %v2278 = vadd.f32 0.0, %v2277
  %v2279 = vpop.f32.mrb[0].mxu0
  %v2280 = vpop.f32.mrb[0].mxu0
  %v2281 = vadd.f32 0.0, %v2280
  %v2282 = vpop.f32.mrb[0].mxu0
  %2283 = vmatprep.mubr.bf16.mxu0 0
  %2284 = vmatmul.mubr.bf16.gmra.mrb[0].mxu0 %v2238
  %v2285 = vpop.f32.mrb[0].mxu0
  %v2286 = vadd.f32 0.0, %v2285
  %v2287 = vpop.f32.mrb[0].mxu0
  %v2288 = vpop.f32.mrb[0].mxu0
  %v2289 = vpop.f32.mrb[0].mxu0
  %2290 = vdwg.mxu0
  %v2291 = vshrl.u32 %v2206, 16
  %v2293 = vrot.slane %v2291, 1
  %v2294 = vshll.u32 %v2206, 16
  %v2296 = vrot.slane %v2294, 2
  %v2297 = vor.u32 %v2293, %v2296
  %v2298 = vshrl.u32 %v2208, 16
  %v2300 = vrot.slane %v2298, 1
  %v2301 = vshll.u32 %v2208, 16
  %v2303 = vrot.slane %v2301, 2
  %v2304 = vor.u32 %v2300, %v2303
  %v2305 = vsel %vm2209, %v2297, %v2304
  %v2307 = vsel %vm474, %v2305, 0
  %v2310 = vsel %vm474, %v2300, 0
  %2312 = vmatprep.subr.bf16.mxu0 0
  %2313 = vmatpush1.bf16.msra.mxu0 %v2231
  %2314 = vmatprep.subr.bf16.mxu0 0
  %2315 = vmatpush1.bf16.msra.mxu0 %v2241
  %2316 = vmatprep.subr.bf16.mxu0 0
  %2317 = vmatpush1.bf16.msra.mxu0 0
  %2318 = vmatprep.subr.bf16.mxu0 0
  %2319 = vmatpush1.bf16.msra.mxu0 0
  %2320 = vmatprep.subr.bf16.mxu0 0
  %2321 = vmatpush1.bf16.msra.mxu0 0
  %2322 = vmatprep.subr.bf16.mxu0 0
  %2323 = vmatpush1.bf16.msra.mxu0 0
  %2324 = vmatprep.subr.bf16.mxu0 0
  %2325 = vmatpush1.bf16.msra.mxu0 0
  %2326 = vmatprep.subr.bf16.mxu0 0
  %2327 = vmatpush1.bf16.msra.mxu0 0
  %2328 = vmatprep.subr.bf16.mxu0 0
  %2329 = vmatpush1.bf16.msra.mxu0 0
  %2330 = vmatprep.subr.bf16.mxu0 0
  %2331 = vmatpush1.bf16.msra.mxu0 0
  %2332 = vmatprep.subr.bf16.mxu0 0
  %2333 = vmatpush1.bf16.msra.mxu0 0
  %2334 = vmatprep.subr.bf16.mxu0 0
  %2335 = vmatpush1.bf16.msra.mxu0 0
  %2336 = vmatprep.subr.bf16.mxu0 0
  %2337 = vmatpush1.bf16.msra.mxu0 0
  %2338 = vmatprep.subr.bf16.mxu0 0
  %2339 = vmatpush1.bf16.msra.mxu0 0
  %2340 = vmatprep.subr.bf16.mxu0 0
  %2341 = vmatpush1.bf16.msra.mxu0 0
  %2342 = vmatprep.subr.bf16.mxu0 0
  %2343 = vmatpush1.bf16.msra.mxu0 0
  %2344 = vmatprep.mubr.bf16.mxu0 0
  %2345 = vmatmul.mubr.bf16.gmra.mrb[0].mxu0 %v2307
  %v2346 = vpop.f32.mrb[0].mxu0
  %v2347 = vadd.f32 0.0, %v2346
  %v2348 = vpop.f32.mrb[0].mxu0
  %v2349 = vpop.f32.mrb[0].mxu0
  %v2350 = vadd.f32 0.0, %v2349
  %v2351 = vpop.f32.mrb[0].mxu0
  %2352 = vmatprep.mubr.bf16.mxu0 0
  %2353 = vmatmul.mubr.bf16.gmra.mrb[0].mxu0 %v2310
  %v2354 = vpop.f32.mrb[0].mxu0
  %v2355 = vadd.f32 0.0, %v2354
  %v2356 = vpop.f32.mrb[0].mxu0
  %v2357 = vpop.f32.mrb[0].mxu0
  %v2358 = vpop.f32.mrb[0].mxu0
  %2359 = vdwg.mxu0
  %v2360 = vld [vmem:[#allocation2] sm:$0xc]
  %v2361 = vld [vmem:[#allocation2 + $0x8] sm:$0x7]
  %v2362 = vld [vmem:[#allocation2 + $0x14] sm:$0xc]
  %v2363 = vld [vmem:[#allocation2 + $0x1c] sm:$0x7]
  %v2368 = vunpack.c.l.b16 %v2360
  %v2369 = vunpack.c.l.b16 %v2361
  %v2370 = vunpack.c.l.b16 %v2362
  %v2371 = vunpack.c.l.b16 %v2363
  %v2372 = vpack.c.b16 %v2075, %v2368
  %v2373 = vpack.c.b16 %v2369, %v2369
  %v2374 = vpack.c.b16 %v2078, %v2370
  %v2375 = vpack.c.b16 %v2371, %v2371
  %vm2376 = vcmask 1041408
  %v2377 = vrot.slane %v2100, 6
  %v2378 = vrot.slane %v2101, 6
  %v2379 = vsel %vm2376, %v2377, %v2378
  %v2380 = vrot.slane %v2102, 6
  %v2381 = vrot.slane %v2103, 6
  %v2382 = vsel %vm2376, %v2380, %v2381
  %2383 = vrot.lane.b32.xlu0 %v2162, 16
  %v2384 = vpop.permute.xlu0 %2383
  %2385 = vrot.lane.b32.xlu0 %v2165, 16
  %v2386 = vpop.permute.xlu0 %2385
  %2387 = vrot.lane.b32.xlu0 %v2177, 16
  %v2388 = vpop.permute.xlu0 %2387
  %2389 = vrot.lane.b32.xlu0 %v2180, 16
  %v2390 = vpop.permute.xlu0 %2389
  %v2393 = vsel %vm100, %v2372, %v2377
  %v2396 = vsel %vm100, %v2373, %v2379
  %v2399 = vsel %vm100, %v2374, %v2380
  %v2402 = vsel %vm100, %v2375, %v2382
  %v2404 = vsel %vm130, %v2393, %v2384
  %v2406 = vsel %vm130, %v2396, %v2386
  %v2408 = vsel %vm130, %v2399, %v2388
  %v2410 = vsel %vm130, %v2402, %v2390
  %vm2413 = vcmask 1045504
  %v2414 = vrot.slane %v2404, 2
  %v2415 = vrot.slane %v2406, 2
  %v2416 = vsel %vm2413, %v2414, %v2415
  %v2418 = vsel %vm474, %v2416, 0
  %v2421 = vsel %vm474, %v2415, 0
  %2423 = vmatprep.subr.bf16.mxu0 0
  %2424 = vmatpush1.bf16.msra.mxu0 %v2231
  %2425 = vmatprep.subr.bf16.mxu0 0
  %2426 = vmatpush1.bf16.msra.mxu0 %v2241
  %2427 = vmatprep.subr.bf16.mxu0 0
  %2428 = vmatpush1.bf16.msra.mxu0 0
  %2429 = vmatprep.subr.bf16.mxu0 0
  %2430 = vmatpush1.bf16.msra.mxu0 0
  %2431 = vmatprep.subr.bf16.mxu0 0
  %2432 = vmatpush1.bf16.msra.mxu0 0
  %2433 = vmatprep.subr.bf16.mxu0 0
  %2434 = vmatpush1.bf16.msra.mxu0 0
  %2435 = vmatprep.subr.bf16.mxu0 0
  %2436 = vmatpush1.bf16.msra.mxu0 0
  %2437 = vmatprep.subr.bf16.mxu0 0
  %2438 = vmatpush1.bf16.msra.mxu0 0
  %2439 = vmatprep.subr.bf16.mxu0 0
  %2440 = vmatpush1.bf16.msra.mxu0 0
  %2441 = vmatprep.subr.bf16.mxu0 0
  %2442 = vmatpush1.bf16.msra.mxu0 0
  %2443 = vmatprep.subr.bf16.mxu0 0
  %2444 = vmatpush1.bf16.msra.mxu0 0
  %2445 = vmatprep.subr.bf16.mxu0 0
  %2446 = vmatpush1.bf16.msra.mxu0 0
  %2447 = vmatprep.subr.bf16.mxu0 0
  %2448 = vmatpush1.bf16.msra.mxu0 0
  %2449 = vmatprep.subr.bf16.mxu0 0
  %2450 = vmatpush1.bf16.msra.mxu0 0
  %2451 = vmatprep.subr.bf16.mxu0 0
  %2452 = vmatpush1.bf16.msra.mxu0 0
  %2453 = vmatprep.subr.bf16.mxu0 0
  %2454 = vmatpush1.bf16.msra.mxu0 0
  %2455 = vmatprep.mubr.bf16.mxu0 0
  %2456 = vmatmul.mubr.bf16.gmra.mrb[0].mxu0 %v2418
  %v2457 = vpop.f32.mrb[0].mxu0
  %v2458 = vadd.f32 0.0, %v2457
  %v2459 = vpop.f32.mrb[0].mxu0
  %v2460 = vpop.f32.mrb[0].mxu0
  %v2461 = vadd.f32 0.0, %v2460
  %v2462 = vpop.f32.mrb[0].mxu0
  %2463 = vmatprep.mubr.bf16.mxu0 0
  %2464 = vmatmul.mubr.bf16.gmra.mrb[0].mxu0 %v2421
  %v2465 = vpop.f32.mrb[0].mxu0
  %v2466 = vadd.f32 0.0, %v2465
  %v2467 = vpop.f32.mrb[0].mxu0
  %v2468 = vpop.f32.mrb[0].mxu0
  %v2469 = vpop.f32.mrb[0].mxu0
  %2470 = vdwg.mxu0
  %v2473 = vrot.slane %v2408, 2
  %v2474 = vrot.slane %v2410, 2
  %v2475 = vsel %vm2413, %v2473, %v2474
  %v2477 = vsel %vm474, %v2475, 0
  %v2480 = vsel %vm474, %v2474, 0
  %2482 = vmatprep.subr.bf16.mxu0 0
  %2483 = vmatpush1.bf16.msra.mxu0 %v2231
  %2484 = vmatprep.subr.bf16.mxu0 0
  %2485 = vmatpush1.bf16.msra.mxu0 %v2241
  %2486 = vmatprep.subr.bf16.mxu0 0
  %2487 = vmatpush1.bf16.msra.mxu0 0
  %2488 = vmatprep.subr.bf16.mxu0 0
  %2489 = vmatpush1.bf16.msra.mxu0 0
  %2490 = vmatprep.subr.bf16.mxu0 0
  %2491 = vmatpush1.bf16.msra.mxu0 0
  %2492 = vmatprep.subr.bf16.mxu0 0
  %2493 = vmatpush1.bf16.msra.mxu0 0
  %2494 = vmatprep.subr.bf16.mxu0 0
  %2495 = vmatpush1.bf16.msra.mxu0 0
  %2496 = vmatprep.subr.bf16.mxu0 0
  %2497 = vmatpush1.bf16.msra.mxu0 0
  %2498 = vmatprep.subr.bf16.mxu0 0
  %2499 = vmatpush1.bf16.msra.mxu0 0
  %2500 = vmatprep.subr.bf16.mxu0 0
  %2501 = vmatpush1.bf16.msra.mxu0 0
  %2502 = vmatprep.subr.bf16.mxu0 0
  %2503 = vmatpush1.bf16.msra.mxu0 0
  %2504 = vmatprep.subr.bf16.mxu0 0
  %2505 = vmatpush1.bf16.msra.mxu0 0
  %2506 = vmatprep.subr.bf16.mxu0 0
  %2507 = vmatpush1.bf16.msra.mxu0 0
  %2508 = vmatprep.subr.bf16.mxu0 0
  %2509 = vmatpush1.bf16.msra.mxu0 0
  %2510 = vmatprep.subr.bf16.mxu0 0
  %2511 = vmatpush1.bf16.msra.mxu0 0
  %2512 = vmatprep.subr.bf16.mxu0 0
  %2513 = vmatpush1.bf16.msra.mxu0 0
  %2514 = vmatprep.mubr.bf16.mxu0 0
  %2515 = vmatmul.mubr.bf16.gmra.mrb[0].mxu0 %v2477
  %v2516 = vpop.f32.mrb[0].mxu0
  %v2517 = vadd.f32 0.0, %v2516
  %v2518 = vpop.f32.mrb[0].mxu0
  %v2519 = vpop.f32.mrb[0].mxu0
  %v2520 = vadd.f32 0.0, %v2519
  %v2521 = vpop.f32.mrb[0].mxu0
  %2522 = vmatprep.mubr.bf16.mxu0 0
  %2523 = vmatmul.mubr.bf16.gmra.mrb[0].mxu0 %v2480
  %v2524 = vpop.f32.mrb[0].mxu0
  %v2525 = vadd.f32 0.0, %v2524
  %v2526 = vpop.f32.mrb[0].mxu0
  %v2527 = vpop.f32.mrb[0].mxu0
  %v2528 = vpop.f32.mrb[0].mxu0
  %2529 = vdwg.mxu0
  %2536 = vrot.lane.b32.xlu0 %v2458, 8
  %v2537 = vpop.permute.xlu0 %2536
  %2538 = vrot.lane.b32.xlu0 %v2461, 8
  %v2539 = vpop.permute.xlu0 %2538
  %2540 = vrot.lane.b32.xlu0 %v2466, 8
  %v2541 = vpop.permute.xlu0 %2540
  %2542 = vrot.lane.b32.xlu0 %v2517, 8
  %v2543 = vpop.permute.xlu0 %2542
  %2544 = vrot.lane.b32.xlu0 %v2520, 8
  %v2545 = vpop.permute.xlu0 %2544
  %2546 = vrot.lane.b32.xlu0 %v2525, 8
  %v2547 = vpop.permute.xlu0 %2546
  %v2554 = vsel %vm100, %v2278, %v2537
  %v2555 = vsel %vm100, %v2281, %v2539
  %v2556 = vsel %vm100, %v2286, %v2541
  %v2557 = vsel %vm100, %v2347, %v2543
  %v2558 = vsel %vm100, %v2350, %v2545
  %v2559 = vsel %vm100, %v2355, %v2547
  %v2560 = vlaneseq
  %v2561 = vshrl.u32 %v2560, 7
  %v2562 = vsub.s32 5, %v2561
  %v2563 = vrot.slane %v47, %v2562
  %v2564 = vadd.f32 %v2554, %v2563
  %v2565 = vadd.f32 %v2555, %v2563
  %v2566 = vadd.f32 %v2556, %v2563
  %v2567 = vadd.f32 %v2557, %v2563
  %v2568 = vadd.f32 %v2558, %v2563
  %v2569 = vadd.f32 %v2559, %v2563
  %vm2570 = vcmp.gt.f32.partialorder %v2564, 0.0
  %vm2571 = vcmp.gt.f32.partialorder %v2565, 0.0
  %vm2572 = vcmp.gt.f32.partialorder %v2566, 0.0
  %vm2573 = vcmp.gt.f32.partialorder %v2567, 0.0
  %vm2574 = vcmp.gt.f32.partialorder %v2568, 0.0
  %vm2575 = vcmp.gt.f32.partialorder %v2569, 0.0
  %v2576 = vmul.f32 %v2564, 1.442695
  %v2577 = vpow.pop %v2576
  %v2578 = vmul.f32 %v2565, 1.442695
  %v2579 = vpow.pop %v2578
  %v2580 = vmul.f32 %v2566, 1.442695
  %v2581 = vpow.pop %v2580
  %v2582 = vmul.f32 %v2567, 1.442695
  %v2583 = vpow.pop %v2582
  %v2584 = vmul.f32 %v2568, 1.442695
  %v2585 = vpow.pop %v2584
  %v2586 = vmul.f32 %v2569, 1.442695
  %v2587 = vpow.pop %v2586
  %v2588 = vsub.f32 %v2577, 1.0
  %v2589 = vsub.f32 %v2579, 1.0
  %v2590 = vsub.f32 %v2581, 1.0
  %v2591 = vsub.f32 %v2583, 1.0
  %v2592 = vsub.f32 %v2585, 1.0
  %v2593 = vsub.f32 %v2587, 1.0
  %v2594 = vsel %vm2570, %v2564, %v2588
  %v2595 = vsel %vm2571, %v2565, %v2589
  %v2596 = vsel %vm2572, %v2566, %v2590
  %v2597 = vsel %vm2573, %v2567, %v2591
  %v2598 = vsel %vm2574, %v2568, %v2592
  %v2599 = vsel %vm2575, %v2569, %v2593
  %s2600 = scalar_lea.vmem %s4, 8
  %v2601 = vld [vmem:[%s2600] sm:$0xf]
  %v2602 = vpack.c.bf16 %v2595, %v2594
  %v2603 = vpack.c.bf16 %v2596, %v2596
  %v2604 = vpack.c.bf16 %v2598, %v2597
  %v2605 = vpack.c.bf16 %v2599, %v2599
  %v2607 = vsel %vm100, %v2602, 0
  %v2610 = vsel %vm100, %v2603, 0
  %v2613 = vsel %vm481, %v2601, 0
  %2615 = vmatprep.subr.bf16.mxu0 0
  %2616 = vmatpush1.bf16.msra.mxu0 %v2613
  %2617 = vmatprep.subr.bf16.mxu0 0
  %2618 = vmatpush1.bf16.msra.mxu0 0
  %2619 = vmatprep.subr.bf16.mxu0 0
  %2620 = vmatpush1.bf16.msra.mxu0 0
  %2621 = vmatprep.subr.bf16.mxu0 0
  %2622 = vmatpush1.bf16.msra.mxu0 0
  %2623 = vmatprep.subr.bf16.mxu0 0
  %2624 = vmatpush1.bf16.msra.mxu0 0
  %2625 = vmatprep.subr.bf16.mxu0 0
  %2626 = vmatpush1.bf16.msra.mxu0 0
  %2627 = vmatprep.subr.bf16.mxu0 0
  %2628 = vmatpush1.bf16.msra.mxu0 0
  %2629 = vmatprep.subr.bf16.mxu0 0
  %2630 = vmatpush1.bf16.msra.mxu0 0
  %2631 = vmatprep.subr.bf16.mxu0 0
  %2632 = vmatpush1.bf16.msra.mxu0 0
  %2633 = vmatprep.subr.bf16.mxu0 0
  %2634 = vmatpush1.bf16.msra.mxu0 0
  %2635 = vmatprep.subr.bf16.mxu0 0
  %2636 = vmatpush1.bf16.msra.mxu0 0
  %2637 = vmatprep.subr.bf16.mxu0 0
  %2638 = vmatpush1.bf16.msra.mxu0 0
  %2639 = vmatprep.subr.bf16.mxu0 0
  %2640 = vmatpush1.bf16.msra.mxu0 0
  %2641 = vmatprep.subr.bf16.mxu0 0
  %2642 = vmatpush1.bf16.msra.mxu0 0
  %2643 = vmatprep.subr.bf16.mxu0 0
  %2644 = vmatpush1.bf16.msra.mxu0 0
  %2645 = vmatprep.subr.bf16.mxu0 0
  %2646 = vmatpush1.bf16.msra.mxu0 0
  %2647 = vmatprep.mubr.bf16.mxu0 0
  %2648 = vmatmul.mubr.bf16.gmra.mrb[0].mxu0 %v2607
  %v2649 = vpop.f32.mrb[0].mxu0
  %v2650 = vadd.f32 0.0, %v2649
  %v2651 = vpop.f32.mrb[0].mxu0
  %v2652 = vpop.f32.mrb[0].mxu0
  %v2653 = vadd.f32 0.0, %v2652
  %v2654 = vpop.f32.mrb[0].mxu0
  %2655 = vmatprep.mubr.bf16.mxu0 0
  %2656 = vmatmul.mubr.bf16.gmra.mrb[0].mxu0 %v2610
  %v2657 = vpop.f32.mrb[0].mxu0
  %v2658 = vadd.f32 0.0, %v2657
  %v2659 = vpop.f32.mrb[0].mxu0
  %v2660 = vpop.f32.mrb[0].mxu0
  %v2661 = vpop.f32.mrb[0].mxu0
  %2662 = vdwg.mxu0
  %v2664 = vsel %vm100, %v2604, 0
  %v2667 = vsel %vm100, %v2605, 0
  %2669 = vmatprep.subr.bf16.mxu0 0
  %2670 = vmatpush1.bf16.msra.mxu0 %v2613
  %2671 = vmatprep.subr.bf16.mxu0 0
  %2672 = vmatpush1.bf16.msra.mxu0 0
  %2673 = vmatprep.subr.bf16.mxu0 0
  %2674 = vmatpush1.bf16.msra.mxu0 0
  %2675 = vmatprep.subr.bf16.mxu0 0
  %2676 = vmatpush1.bf16.msra.mxu0 0
  %2677 = vmatprep.subr.bf16.mxu0 0
  %2678 = vmatpush1.bf16.msra.mxu0 0
  %2679 = vmatprep.subr.bf16.mxu0 0
  %2680 = vmatpush1.bf16.msra.mxu0 0
  %2681 = vmatprep.subr.bf16.mxu0 0
  %2682 = vmatpush1.bf16.msra.mxu0 0
  %2683 = vmatprep.subr.bf16.mxu0 0
  %2684 = vmatpush1.bf16.msra.mxu0 0
  %2685 = vmatprep.subr.bf16.mxu0 0
  %2686 = vmatpush1.bf16.msra.mxu0 0
  %2687 = vmatprep.subr.bf16.mxu0 0
  %2688 = vmatpush1.bf16.msra.mxu0 0
  %2689 = vmatprep.subr.bf16.mxu0 0
  %2690 = vmatpush1.bf16.msra.mxu0 0
  %2691 = vmatprep.subr.bf16.mxu0 0
  %2692 = vmatpush1.bf16.msra.mxu0 0
  %2693 = vmatprep.subr.bf16.mxu0 0
  %2694 = vmatpush1.bf16.msra.mxu0 0
  %2695 = vmatprep.subr.bf16.mxu0 0
  %2696 = vmatpush1.bf16.msra.mxu0 0
  %2697 = vmatprep.subr.bf16.mxu0 0
  %2698 = vmatpush1.bf16.msra.mxu0 0
  %2699 = vmatprep.subr.bf16.mxu0 0
  %2700 = vmatpush1.bf16.msra.mxu0 0
  %2701 = vmatprep.mubr.bf16.mxu0 0
  %2702 = vmatmul.mubr.bf16.gmra.mrb[0].mxu0 %v2664
  %v2703 = vpop.f32.mrb[0].mxu0
  %v2704 = vadd.f32 0.0, %v2703
  %v2705 = vpop.f32.mrb[0].mxu0
  %v2706 = vpop.f32.mrb[0].mxu0
  %v2707 = vadd.f32 0.0, %v2706
  %v2708 = vpop.f32.mrb[0].mxu0
  %2709 = vmatprep.mubr.bf16.mxu0 0
  %2710 = vmatmul.mubr.bf16.gmra.mrb[0].mxu0 %v2667
  %v2711 = vpop.f32.mrb[0].mxu0
  %v2712 = vadd.f32 0.0, %v2711
  %v2713 = vpop.f32.mrb[0].mxu0
  %v2714 = vpop.f32.mrb[0].mxu0
  %v2715 = vpop.f32.mrb[0].mxu0
  %2716 = vdwg.mxu0
  %2719 = vrot.lane.b32.xlu0 %v2602, 120
  %v2720 = vpop.permute.xlu0 %2719
  %2721 = vrot.lane.b32.xlu0 %v2603, 120
  %v2722 = vpop.permute.xlu0 %2721
  %v2724 = vsel %vm100, %v2720, 0
  %v2727 = vsel %vm100, %v2722, 0
  %2729 = vmatprep.subr.bf16.mxu0 0
  %2730 = vmatpush1.bf16.msra.mxu0 %v2613
  %2731 = vmatprep.subr.bf16.mxu0 0
  %2732 = vmatpush1.bf16.msra.mxu0 0
  %2733 = vmatprep.subr.bf16.mxu0 0
  %2734 = vmatpush1.bf16.msra.mxu0 0
  %2735 = vmatprep.subr.bf16.mxu0 0
  %2736 = vmatpush1.bf16.msra.mxu0 0
  %2737 = vmatprep.subr.bf16.mxu0 0
  %2738 = vmatpush1.bf16.msra.mxu0 0
  %2739 = vmatprep.subr.bf16.mxu0 0
  %2740 = vmatpush1.bf16.msra.mxu0 0
  %2741 = vmatprep.subr.bf16.mxu0 0
  %2742 = vmatpush1.bf16.msra.mxu0 0
  %2743 = vmatprep.subr.bf16.mxu0 0
  %2744 = vmatpush1.bf16.msra.mxu0 0
  %2745 = vmatprep.subr.bf16.mxu0 0
  %2746 = vmatpush1.bf16.msra.mxu0 0
  %2747 = vmatprep.subr.bf16.mxu0 0
  %2748 = vmatpush1.bf16.msra.mxu0 0
  %2749 = vmatprep.subr.bf16.mxu0 0
  %2750 = vmatpush1.bf16.msra.mxu0 0
  %2751 = vmatprep.subr.bf16.mxu0 0
  %2752 = vmatpush1.bf16.msra.mxu0 0
  %2753 = vmatprep.subr.bf16.mxu0 0
  %2754 = vmatpush1.bf16.msra.mxu0 0
  %2755 = vmatprep.subr.bf16.mxu0 0
  %2756 = vmatpush1.bf16.msra.mxu0 0
  %2757 = vmatprep.subr.bf16.mxu0 0
  %2758 = vmatpush1.bf16.msra.mxu0 0
  %2759 = vmatprep.subr.bf16.mxu0 0
  %2760 = vmatpush1.bf16.msra.mxu0 0
  %2761 = vmatprep.mubr.bf16.mxu0 0
  %2762 = vmatmul.mubr.bf16.gmra.mrb[0].mxu0 %v2724
  %v2763 = vpop.f32.mrb[0].mxu0
  %v2764 = vadd.f32 0.0, %v2763
  %v2765 = vpop.f32.mrb[0].mxu0
  %v2766 = vpop.f32.mrb[0].mxu0
  %v2767 = vadd.f32 0.0, %v2766
  %v2768 = vpop.f32.mrb[0].mxu0
  %2769 = vmatprep.mubr.bf16.mxu0 0
  %2770 = vmatmul.mubr.bf16.gmra.mrb[0].mxu0 %v2727
  %v2771 = vpop.f32.mrb[0].mxu0
  %v2772 = vadd.f32 0.0, %v2771
  %v2773 = vpop.f32.mrb[0].mxu0
  %v2774 = vpop.f32.mrb[0].mxu0
  %v2775 = vpop.f32.mrb[0].mxu0
  %2776 = vdwg.mxu0
  %2779 = vrot.lane.b32.xlu0 %v2604, 120
  %v2780 = vpop.permute.xlu0 %2779
  %2781 = vrot.lane.b32.xlu0 %v2605, 120
  %v2782 = vpop.permute.xlu0 %2781
  %v2784 = vsel %vm100, %v2780, 0
  %v2787 = vsel %vm100, %v2782, 0
  %2789 = vmatprep.subr.bf16.mxu0 0
  %2790 = vmatpush1.bf16.msra.mxu0 %v2613
  %2791 = vmatprep.subr.bf16.mxu0 0
  %2792 = vmatpush1.bf16.msra.mxu0 0
  %2793 = vmatprep.subr.bf16.mxu0 0
  %2794 = vmatpush1.bf16.msra.mxu0 0
  %2795 = vmatprep.subr.bf16.mxu0 0
  %2796 = vmatpush1.bf16.msra.mxu0 0
  %2797 = vmatprep.subr.bf16.mxu0 0
  %2798 = vmatpush1.bf16.msra.mxu0 0
  %2799 = vmatprep.subr.bf16.mxu0 0
  %2800 = vmatpush1.bf16.msra.mxu0 0
  %2801 = vmatprep.subr.bf16.mxu0 0
  %2802 = vmatpush1.bf16.msra.mxu0 0
  %2803 = vmatprep.subr.bf16.mxu0 0
  %2804 = vmatpush1.bf16.msra.mxu0 0
  %2805 = vmatprep.subr.bf16.mxu0 0
  %2806 = vmatpush1.bf16.msra.mxu0 0
  %2807 = vmatprep.subr.bf16.mxu0 0
  %2808 = vmatpush1.bf16.msra.mxu0 0
  %2809 = vmatprep.subr.bf16.mxu0 0
  %2810 = vmatpush1.bf16.msra.mxu0 0
  %2811 = vmatprep.subr.bf16.mxu0 0
  %2812 = vmatpush1.bf16.msra.mxu0 0
  %2813 = vmatprep.subr.bf16.mxu0 0
  %2814 = vmatpush1.bf16.msra.mxu0 0
  %2815 = vmatprep.subr.bf16.mxu0 0
  %2816 = vmatpush1.bf16.msra.mxu0 0
  %2817 = vmatprep.subr.bf16.mxu0 0
  %2818 = vmatpush1.bf16.msra.mxu0 0
  %2819 = vmatprep.subr.bf16.mxu0 0
  %2820 = vmatpush1.bf16.msra.mxu0 0
  %2821 = vmatprep.mubr.bf16.mxu0 0
  %2822 = vmatmul.mubr.bf16.gmra.mrb[0].mxu0 %v2784
  %v2823 = vpop.f32.mrb[0].mxu0
  %v2824 = vadd.f32 0.0, %v2823
  %v2825 = vpop.f32.mrb[0].mxu0
  %v2826 = vpop.f32.mrb[0].mxu0
  %v2827 = vadd.f32 0.0, %v2826
  %v2828 = vpop.f32.mrb[0].mxu0
  %2829 = vmatprep.mubr.bf16.mxu0 0
  %2830 = vmatmul.mubr.bf16.gmra.mrb[0].mxu0 %v2787
  %v2831 = vpop.f32.mrb[0].mxu0
  %v2832 = vadd.f32 0.0, %v2831
  %v2833 = vpop.f32.mrb[0].mxu0
  %v2834 = vpop.f32.mrb[0].mxu0
  %v2835 = vpop.f32.mrb[0].mxu0
  %2836 = vdwg.mxu0
  %2843 = vrot.lane.b32.xlu0 %v2764, 8
  %v2844 = vpop.permute.xlu0 %2843
  %2845 = vrot.lane.b32.xlu0 %v2767, 8
  %v2846 = vpop.permute.xlu0 %2845
  %2847 = vrot.lane.b32.xlu0 %v2772, 8
  %v2848 = vpop.permute.xlu0 %2847
  %2849 = vrot.lane.b32.xlu0 %v2824, 8
  %v2850 = vpop.permute.xlu0 %2849
  %2851 = vrot.lane.b32.xlu0 %v2827, 8
  %v2852 = vpop.permute.xlu0 %2851
  %2853 = vrot.lane.b32.xlu0 %v2832, 8
  %v2854 = vpop.permute.xlu0 %2853
  %v2861 = vsel %vm100, %v2650, %v2844
  %v2862 = vsel %vm100, %v2653, %v2846
  %v2863 = vsel %vm100, %v2658, %v2848
  %v2864 = vsel %vm100, %v2704, %v2850
  %v2865 = vsel %vm100, %v2707, %v2852
  %v2866 = vsel %vm100, %v2712, %v2854
  %v2867 = vlaneseq
  %v2868 = vshrl.u32 %v2867, 7
  %v2869 = vsub.s32 6, %v2868
  %v2870 = vrot.slane %v47, %v2869
  %v2871 = vadd.f32 %v2861, %v2870
  %v2872 = vadd.f32 %v2862, %v2870
  %v2873 = vadd.f32 %v2863, %v2870
  %v2874 = vadd.f32 %v2864, %v2870
  %v2875 = vadd.f32 %v2865, %v2870
  %v2876 = vadd.f32 %v2866, %v2870
  %vm2877 = vcmp.gt.f32.partialorder %v2871, 0.0
  %vm2878 = vcmp.gt.f32.partialorder %v2872, 0.0
  %vm2879 = vcmp.gt.f32.partialorder %v2873, 0.0
  %vm2880 = vcmp.gt.f32.partialorder %v2874, 0.0
  %vm2881 = vcmp.gt.f32.partialorder %v2875, 0.0
  %vm2882 = vcmp.gt.f32.partialorder %v2876, 0.0
  %v2883 = vmul.f32 %v2871, 1.442695
  %v2884 = vpow.pop %v2883
  %v2885 = vmul.f32 %v2872, 1.442695
  %v2886 = vpow.pop %v2885
  %v2887 = vmul.f32 %v2873, 1.442695
  %v2888 = vpow.pop %v2887
  %v2889 = vmul.f32 %v2874, 1.442695
  %v2890 = vpow.pop %v2889
  %v2891 = vmul.f32 %v2875, 1.442695
  %v2892 = vpow.pop %v2891
  %v2893 = vmul.f32 %v2876, 1.442695
  %v2894 = vpow.pop %v2893
  %v2895 = vsub.f32 %v2884, 1.0
  %v2896 = vsub.f32 %v2886, 1.0
  %v2897 = vsub.f32 %v2888, 1.0
  %v2898 = vsub.f32 %v2890, 1.0
  %v2899 = vsub.f32 %v2892, 1.0
  %v2900 = vsub.f32 %v2894, 1.0
  %v2901 = vsel %vm2877, %v2871, %v2895
  %v2902 = vsel %vm2878, %v2872, %v2896
  %v2903 = vsel %vm2879, %v2873, %v2897
  %v2904 = vsel %vm2880, %v2874, %v2898
  %v2905 = vsel %vm2881, %v2875, %v2899
  %v2906 = vsel %vm2882, %v2876, %v2900
  %v2907 = vadd.f32 %v2008, %v2901
  %v2908 = vadd.f32 %v2009, %v2902
  %v2909 = vadd.f32 %v2010, %v2903
  %v2910 = vadd.f32 %v2011, %v2904
  %v2911 = vadd.f32 %v2012, %v2905
  %v2912 = vadd.f32 %v2013, %v2906
  %v2913 = vmul.f32 %v294, %v2907
  %v2914 = vmul.f32 %v294, %v2908
  %v2915 = vmul.f32 %v294, %v2909
  %v2916 = vmul.f32 %v298, %v2910
  %v2917 = vmul.f32 %v298, %v2911
  %v2918 = vmul.f32 %v298, %v2912
  %v2919 = vadd.f32 %v2913, %v308
  %v2920 = vadd.f32 %v2914, %v308
  %v2921 = vadd.f32 %v2915, %v308
  %v2922 = vadd.f32 %v2916, %v312
  %v2923 = vadd.f32 %v2917, %v312
  %v2924 = vadd.f32 %v2918, %v312
  %2925 = vst.msk [vmem:[%s6] sm:$0xff] %vm130, %v2919
  %2926 = vst.msk [vmem:[%s6 + $0x8] sm:$0xff] %vm130, %v2920
  %vm2927 = vcmask 122880
  %2928 = vst.msk [vmem:[%s6 + $0x10] sm:$0x1] %vm2927, %v2921
  %2929 = vst.msk [vmem:[%s6 + $0x18] sm:$0xff] %vm130, %v2922
  %2930 = vst.msk [vmem:[%s6 + $0x20] sm:$0xff] %vm130, %v2923
  %2931 = vst.msk [vmem:[%s6 + $0x28] sm:$0x1] %vm2927, %v2924
  // Predicated region
  $region26: #{_lambda_.1} parent=0 // pred_check
    _
  $region27: #{_lambda_.1} parent=0 // pred_check_branch
    %2933 = sbr.rel (0) target = $region29
  $region28: #{_lambda_.1} parent=0 // pred_region
    _
  $region29: #{_lambda_.1} parent=0 // pred_fallthru
    _
  // Predicated region
  $region30: #{_lambda_.1} parent=0 // pred_check
    _
  $region31: #{_lambda_.1} parent=0 // pred_check_branch
    %2935 = sbr.rel (0) target = $region33
  $region32: #{_lambda_.1} parent=0 // pred_region
    _
  $region33: #{_lambda_.1} parent=0 // pred_fallthru
    _

</llo_original>
